<compile_context>
chip_gen: v7x
topology: tpu7x:2x2x1
jax: 0.10.0
libtpu: 0.0.40
codegen_flags: <defaults>
</compile_context>

<pallas_src>
import jax
import jax.numpy as jnp
from jax import lax
from jax.experimental import pallas as pl
from jax.experimental.pallas import tpu as pltpu

# ---- model config (small, consistent with MemTransformerLM.__init__) ----
N_TOKEN = 64
N_LAYER = 2
N_HEAD = 2
D_MODEL = 32
D_HEAD = 16
D_INNER = 64
TGT_LEN = 8          # qlen
BSZ = 2
MEM_LEN = 0          # mem_len=0 -> init_mems() returns None -> mlen=0, klen=qlen
LABEL_SMOOTHING = 0.1
LN_EPS = 1e-5        # torch.nn.LayerNorm default

HD = N_HEAD * D_HEAD
KLEN = TGT_LEN + MEM_LEN
QB = TGT_LEN * BSZ
BH = BSZ * N_HEAD

# ---- packed small-parameter blob row layout (one fat DMA instead of ~14 tiny ones) ----
BLOB_W = max(HD, D_MODEL, D_INNER, N_TOKEN)        # 64
ROW_RWB = 0                                        # r_w_bias flattened head-major, cols 0:HD
ROW_RRB = 1                                        # r_r_bias flattened head-major
ROW_FIN_G = 2                                      # final LayerNorm gamma, cols 0:D_MODEL
ROW_FIN_B = 3                                      # final LayerNorm beta
ROW_OUT_B = 4                                      # out_layer bias, cols 0:N_TOKEN
ROW_POS = 5                                        # sinusoidal pos table, KLEN rows, cols 0:D_MODEL
ROW_ATTN_G = ROW_POS + KLEN                        # per-layer attn LN gamma (N_LAYER rows)
ROW_ATTN_B = ROW_ATTN_G + N_LAYER
ROW_FF_G = ROW_ATTN_B + N_LAYER
ROW_FF_B = ROW_FF_G + N_LAYER
ROW_FF1_B = ROW_FF_B + N_LAYER                     # cols 0:D_INNER
ROW_FF2_B = ROW_FF1_B + N_LAYER                    # cols 0:D_MODEL
N_BLOB_ROWS = ROW_FF2_B + N_LAYER                  # 25


def _vmem_spec():
    return pl.BlockSpec(memory_space=pltpu.MemorySpace.VMEM)


def _ln(x, g, b):
    mu = jnp.mean(x, axis=-1, keepdims=True)
    xc = x - mu
    var = jnp.mean(xc * xc, axis=-1, keepdims=True)
    return xc * lax.rsqrt(var + LN_EPS) * g + b


def _fused_forward_kernel(io_ref, emb_ref, blob_ref,
                          qkv_w_ref, r_w_ref, o_w_ref, ff1_w_ref, ff2_w_ref,
                          out_ref):
    f32 = jnp.float32
    Q, B, H, Dh, D, V, K = TGT_LEN, BSZ, N_HEAD, D_HEAD, D_MODEL, N_TOKEN, KLEN
    BHQ = BH * Q
    trans_b = (((1,), (1,)), ((), ()))          # contract last dims: A @ B^T on the MXU

    # ---- word embedding (one-hot matmul on MXU) + sqrt(d_model) scale (scale_emb=True) ----
    toks = io_ref[:, 0:1]                                       # (QB, 1) int32, batch-major rows
    tgts = io_ref[:, 1:2]
    iota_v = lax.broadcasted_iota(jnp.int32, (QB, V), 1)
    emb = emb_ref[...]                                          # (V, D), reused for tied logits
    core = jnp.dot((iota_v == toks).astype(f32), emb,
                   preferred_element_type=f32) * (float(D) ** 0.5)

    # ---- causal-mask additive bias + rel-shift index grid, replicated across (b,h) blocks ----
    qi = lax.broadcasted_iota(jnp.int32, (Q, K), 0)
    kj = lax.broadcasted_iota(jnp.int32, (Q, K), 1)
    rel_row = kj - qi
    mask_row = jnp.where(kj > qi + MEM_LEN, f32(-1e30), f32(0.0))   # triu(ones, 1+mlen) as bias
    rel2 = jnp.concatenate([rel_row] * BH, axis=0)              # (BHQ, K)
    maskb = jnp.concatenate([mask_row] * BH, axis=0)            # (BHQ, K)

    pos = blob_ref[ROW_POS:ROW_POS + K, 0:D]                    # (K, D) sinusoidal table
    rwb = blob_ref[ROW_RWB:ROW_RWB + 1, 0:HD]                   # (1, HD) head-major flattened
    rrb = blob_ref[ROW_RRB:ROW_RRB + 1, 0:HD]
    scale = 1.0 / (float(Dh) ** 0.5)

    for l in range(N_LAYER):
        # ---- RelPartialLearnableMultiHeadAttn (post-LayerNorm) ----
        wh = jnp.dot(core, qkv_w_ref[l], preferred_element_type=f32)      # (QB, 3*HD)
        r_heads = jnp.dot(pos, r_w_ref[l], preferred_element_type=f32)    # (K, HD)

        # bias add + 1/sqrt(d_head) folded once for the whole layer tile (not per head)
        q_rw = (wh[:, 0:HD] + rwb) * scale                                # (QB, HD)
        q_rr = (wh[:, 0:HD] + rrb) * scale

        ac_l, bd_l, v_l = [], [], []
        for b in range(B):
            r0 = b * Q
            for h in range(H):
                c0 = h * Dh
                kh = wh[r0:r0 + Q, HD + c0:HD + c0 + Dh]                  # (K, Dh)  (K==Q, mlen=0)
                rh = r_heads[:, c0:c0 + Dh]                               # (K, Dh)
                v_l.append(wh[r0:r0 + Q, 2 * HD + c0:2 * HD + c0 + Dh])   # (K, Dh)
                ac_l.append(lax.dot_general(q_rw[r0:r0 + Q, c0:c0 + Dh], kh,
                                            trans_b, preferred_element_type=f32))  # (Q, K)
                bd_l.append(lax.dot_general(q_rr[r0:r0 + Q, c0:c0 + Dh], rh,
                                            trans_b, preferred_element_type=f32))  # (Q, K)

        ac2 = jnp.concatenate(ac_l, axis=0)                               # (BHQ, K)
        bd2 = jnp.concatenate(bd_l, axis=0)                               # (BHQ, K)

        # Transformer-XL _rel_shift: bd_s[i, j] = bd[i, j + K-1-i] for j <= i (rest masked).
        # Done ONCE on the stacked tile with disjoint where-selects (compare grid hoisted above).
        # TODO(synk): a strided pltpu.roll could collapse this to one XLU op per layer.
        bd_s = jnp.zeros((BHQ, K), f32)
        for k in range(K):
            bd_s = jnp.where(rel2 == (k - (K - 1)), bd2[:, k:k + 1], bd_s)

        # stacked softmax over all (b, h) at once; exact divide for numerical fidelity
        score = ac2 + bd_s + maskb
        m = jnp.max(score, axis=-1, keepdims=True)
        e = jnp.exp(score - m)
        prob = e / jnp.sum(e, axis=-1, keepdims=True)

        # per-head context assembled with register concats (no VMEM scratch / partial stores)
        ctx_rows = []
        for b in range(B):
            ctx_heads = []
            for h in range(H):
                bh = b * H + h
                ctx_heads.append(jnp.dot(prob[bh * Q:(bh + 1) * Q, :], v_l[bh],
                                         preferred_element_type=f32))      # (Q, Dh)
            ctx_rows.append(jnp.concatenate(ctx_heads, axis=1))            # (Q, HD)
        ctx = jnp.concatenate(ctx_rows, axis=0)                            # (QB, HD)

        attn_out = jnp.dot(ctx, o_w_ref[l], preferred_element_type=f32)    # (QB, D)
        core = _ln(attn_out + core,
                   blob_ref[ROW_ATTN_G + l:ROW_ATTN_G + l + 1, 0:D],
                   blob_ref[ROW_ATTN_B + l:ROW_ATTN_B + l + 1, 0:D])

        # ---- PositionwiseFF (post-LayerNorm), ReLU fused after the first matmul ----
        h1 = jnp.maximum(jnp.dot(core, ff1_w_ref[l], preferred_element_type=f32)
                         + blob_ref[ROW_FF1_B + l:ROW_FF1_B + l + 1, 0:D_INNER], 0.0)
        h2 = (jnp.dot(h1, ff2_w_ref[l], preferred_element_type=f32)
              + blob_ref[ROW_FF2_B + l:ROW_FF2_B + l + 1, 0:D])
        core = _ln(h2 + core,
                   blob_ref[ROW_FF_G + l:ROW_FF_G + l + 1, 0:D],
                   blob_ref[ROW_FF_B + l:ROW_FF_B + l + 1, 0:D])

    # ---- final_norm + tied output projection (contract emb on its last dim, no emb.T copy) ----
    hidden = _ln(core, blob_ref[ROW_FIN_G:ROW_FIN_G + 1, 0:D],
                 blob_ref[ROW_FIN_B:ROW_FIN_B + 1, 0:D])
    logits = (lax.dot_general(hidden, emb, trans_b, preferred_element_type=f32)
              + blob_ref[ROW_OUT_B:ROW_OUT_B + 1, 0:V])                     # (QB, V)

    # ---- fused F.log_softmax + LabelSmoothedCrossEntropy (padding_idx=-1 never hit) ----
    mx = jnp.max(logits, axis=-1, keepdims=True)
    lse = mx + jnp.log(jnp.sum(jnp.exp(logits - mx), axis=-1, keepdims=True))
    lprobs = logits - lse
    nll_i = -jnp.sum((iota_v == tgts).astype(f32) * lprobs, axis=-1, keepdims=True)   # (QB, 1)
    smooth_i = -jnp.sum(lprobs, axis=-1, keepdims=True)                               # (QB, 1)
    nll = jnp.sum(nll_i, axis=0, keepdims=True)                                       # (1, 1)
    smooth = jnp.sum(smooth_i, axis=0, keepdims=True)                                 # (1, 1)
    eps_i = LABEL_SMOOTHING / (N_TOKEN - 2)          # matches LabelSmoothedCrossEntropy (V-2)
    loss = (1.0 - LABEL_SMOOTHING) * nll + eps_i * smooth
    out_ref[...] = jnp.concatenate([loss, nll], axis=1)                                # (1, 2)


def init_params(key):
    def nrm(k, shape, std=0.02):
        return std * jax.random.normal(k, shape, dtype=jnp.float32)

    keys = jax.random.split(key, 8)
    return {
        'emb': nrm(keys[0], (N_TOKEN, D_MODEL), std=1.0),     # word_emb.weight (tied out_layer)
        'r_w_bias': nrm(keys[1], (N_HEAD, D_HEAD)),
        'r_r_bias': nrm(keys[2], (N_HEAD, D_HEAD)),
        'final_ln_g': jnp.ones((D_MODEL,), jnp.float32),
        'final_ln_b': jnp.zeros((D_MODEL,), jnp.float32),
        'out_b': jnp.zeros((N_TOKEN,), jnp.float32),
        # per-layer weights stacked along a leading layer axis (few, fat DMAs)
        'qkv_w': nrm(keys[3], (N_LAYER, D_MODEL, 3 * HD)),    # qkv_net (bias=False)
        'r_w': nrm(keys[4], (N_LAYER, D_MODEL, HD)),          # r_net   (bias=False)
        'o_w': nrm(keys[5], (N_LAYER, HD, D_MODEL)),          # o_net   (bias=False)
        'attn_ln_g': jnp.ones((N_LAYER, D_MODEL), jnp.float32),
        'attn_ln_b': jnp.zeros((N_LAYER, D_MODEL), jnp.float32),
        'ff1_w': nrm(keys[6], (N_LAYER, D_MODEL, D_INNER)),
        'ff1_b': jnp.zeros((N_LAYER, D_INNER), jnp.float32),
        'ff2_w': nrm(keys[7], (N_LAYER, D_INNER, D_MODEL)),
        'ff2_b': jnp.zeros((N_LAYER, D_MODEL), jnp.float32),
        'ff_ln_g': jnp.ones((N_LAYER, D_MODEL), jnp.float32),
        'ff_ln_b': jnp.zeros((N_LAYER, D_MODEL), jnp.float32),
    }


def _pack_blob(params):
    """Pack all small parameter/constant arrays into one (N_BLOB_ROWS, 64) f32 blob."""
    # sinusoidal relative position table (constant-folded by XLA under jit), pos_seq = K-1..0
    pos_seq = jnp.arange(KLEN - 1, -1, -1, dtype=jnp.float32)
    inv_freq = 1.0 / (10000.0 ** (jnp.arange(0, D_MODEL, 2, dtype=jnp.float32) / D_MODEL))
    sinus = pos_seq[:, None] * inv_freq[None, :]
    pos_emb = jnp.concatenate([jnp.sin(sinus), jnp.cos(sinus)], axis=-1)   # (KLEN, D_MODEL)

    blob = jnp.zeros((N_BLOB_ROWS, BLOB_W), jnp.float32)
    blob = blob.at[ROW_RWB, :HD].set(params['r_w_bias'].reshape(HD))
    blob = blob.at[ROW_RRB, :HD].set(params['r_r_bias'].reshape(HD))
    blob = blob.at[ROW_FIN_G, :D_MODEL].set(params['final_ln_g'].reshape(D_MODEL))
    blob = blob.at[ROW_FIN_B, :D_MODEL].set(params['final_ln_b'].reshape(D_MODEL))
    blob = blob.at[ROW_OUT_B, :N_TOKEN].set(params['out_b'].reshape(N_TOKEN))
    blob = blob.at[ROW_POS:ROW_POS + KLEN, :D_MODEL].set(pos_emb)
    blob = blob.at[ROW_ATTN_G:ROW_ATTN_G + N_LAYER, :D_MODEL].set(params['attn_ln_g'])
    blob = blob.at[ROW_ATTN_B:ROW_ATTN_B + N_LAYER, :D_MODEL].set(params['attn_ln_b'])
    blob = blob.at[ROW_FF_G:ROW_FF_G + N_LAYER, :D_MODEL].set(params['ff_ln_g'])
    blob = blob.at[ROW_FF_B:ROW_FF_B + N_LAYER, :D_MODEL].set(params['ff_ln_b'])
    blob = blob.at[ROW_FF1_B:ROW_FF1_B + N_LAYER, :D_INNER].set(params['ff1_b'])
    blob = blob.at[ROW_FF2_B:ROW_FF2_B + N_LAYER, :D_MODEL].set(params['ff2_b'])
    return blob


def forward(params, data, target):
    """MemTransformerLM.forward(data, target, target_weight=None), mem_len=0 -> (loss, nll)."""
    # batch-major flattening (rows = b*Q + q): attention per batch is a static row slice.
    # Loss is a sum over rows, so row order does not change the result vs. the PyTorch layout.
    tok = data.T.reshape(QB)
    tgt = target.T.reshape(QB)
    io = jnp.stack([tok, tgt], axis=1).astype(jnp.int32)     # (QB, 2) int32, one small DMA

    blob = _pack_blob(params)

    out = pl.pallas_call(
        _fused_forward_kernel,
        out_shape=jax.ShapeDtypeStruct((1, 2), jnp.float32),   # [loss, nll]
        in_specs=[_vmem_spec()] * 8,
        out_specs=_vmem_spec(),
    )(io, params['emb'], blob, params['qkv_w'], params['r_w'], params['o_w'],
      params['ff1_w'], params['ff2_w'])
    return out[0, 0], out[0, 1]


if __name__ == "__main__":
    root = jax.random.PRNGKey(0)
    k_param, k_data, k_tgt = jax.random.split(root, 3)

    params = init_params(k_param)
    data = jax.random.randint(k_data, (TGT_LEN, BSZ), 0, N_TOKEN, dtype=jnp.int32)
    target = jax.random.randint(k_tgt, (TGT_LEN, BSZ), 0, N_TOKEN, dtype=jnp.int32)

    loss, nll = jax.jit(forward)(params, data, target)
    jax.block_until_ready((loss, nll))
    assert bool(jnp.isfinite(loss)) and bool(jnp.isfinite(nll))
    print("KERNEL_OK")
</pallas_src>

<mosaic_0001>
module attributes {stable_mosaic.version = 11 : i64} {
  func.func @_fused_forward_kernel(%arg0: memref<16x2xi32, #tpu.memory_space<vmem>>, %arg1: memref<64x32xf32, #tpu.memory_space<vmem>>, %arg2: memref<25x64xf32, #tpu.memory_space<vmem>>, %arg3: memref<2x32x96xf32, #tpu.memory_space<vmem>>, %arg4: memref<2x32x32xf32, #tpu.memory_space<vmem>>, %arg5: memref<2x32x32xf32, #tpu.memory_space<vmem>>, %arg6: memref<2x32x64xf32, #tpu.memory_space<vmem>>, %arg7: memref<2x64x32xf32, #tpu.memory_space<vmem>>, %arg8: memref<1x2xf32, #tpu.memory_space<vmem>>) attributes {dimension_semantics = [], scalar_prefetch = 0 : i64, scratch_operands = 0 : i64, tpu.core_type = #tpu.core_type<tc>} {
    %c0 = arith.constant 0 : index
    %c0_0 = arith.constant 0 : index
    %0 = vector.load %arg0[%c0, %c0_0] : memref<16x2xi32, #tpu.memory_space<vmem>>, vector<16x1xi32>
    %c0_1 = arith.constant 0 : index
    %c1 = arith.constant 1 : index
    %1 = vector.load %arg0[%c0_1, %c1] : memref<16x2xi32, #tpu.memory_space<vmem>>, vector<16x1xi32>
    %2 = tpu.iota {dimensions = array<i32: 1>} : vector<16x64xi32>
    %c0_2 = arith.constant 0 : index
    %c0_3 = arith.constant 0 : index
    %3 = vector.load %arg1[%c0_2, %c0_3] : memref<64x32xf32, #tpu.memory_space<vmem>>, vector<64x32xf32>
    %4 = vector.broadcast %0 : vector<16x1xi32> to vector<16x64xi32>
    %5 = arith.cmpi eq, %2, %4 : vector<16x64xi32>
    %6 = arith.extui %5 : vector<16x64xi1> to vector<16x64xi32>
    %7 = arith.sitofp %6 : vector<16x64xi32> to vector<16x64xf32>
    %cst = arith.constant dense<0.000000e+00> : vector<16x32xf32>
    %8 = tpu.matmul %7, %3, %cst {dimension_numbers = #tpu.dot_dimension_numbers<[1], [0], [0], [1], [0, 0, 1, 1], [], []>} : vector<16x64xf32>, vector<64x32xf32>, vector<16x32xf32> -> vector<16x32xf32>
    %cst_4 = arith.constant 5.65685415 : f32
    %9 = vector.broadcast %cst_4 : f32 to vector<16x32xf32>
    %10 = arith.mulf %8, %9 : vector<16x32xf32>
    %11 = tpu.iota {dimensions = array<i32: 0>} : vector<8x8xi32>
    %12 = tpu.iota {dimensions = array<i32: 1>} : vector<8x8xi32>
    %13 = arith.subi %12, %11 : vector<8x8xi32>
    %c0_i32 = arith.constant 0 : i32
    %14 = vector.broadcast %c0_i32 : i32 to vector<8x8xi32>
    %15 = arith.addi %11, %14 : vector<8x8xi32>
    %16 = arith.cmpi sgt, %12, %15 : vector<8x8xi32>
    %cst_5 = arith.constant -1.000000e+30 : f32
    %cst_6 = arith.constant 0.000000e+00 : f32
    %17 = vector.broadcast %cst_5 : f32 to vector<8x8xf32>
    %18 = vector.broadcast %cst_6 : f32 to vector<8x8xf32>
    %19 = arith.select %16, %17, %18 : vector<8x8xi1>, vector<8x8xf32>
    %20 = tpu.concatenate %13, %13, %13, %13 in 0 : vector<8x8xi32>, vector<8x8xi32>, vector<8x8xi32>, vector<8x8xi32> -> vector<32x8xi32>
    %21 = tpu.concatenate %19, %19, %19, %19 in 0 : vector<8x8xf32>, vector<8x8xf32>, vector<8x8xf32>, vector<8x8xf32> -> vector<32x8xf32>
    %c5 = arith.constant 5 : index
    %c0_7 = arith.constant 0 : index
    %22 = vector.load %arg2[%c5, %c0_7] : memref<25x64xf32, #tpu.memory_space<vmem>>, vector<8x32xf32>
    %c0_8 = arith.constant 0 : index
    %c0_9 = arith.constant 0 : index
    %23 = vector.load %arg2[%c0_8, %c0_9] : memref<25x64xf32, #tpu.memory_space<vmem>>, vector<1x32xf32>
    %c1_10 = arith.constant 1 : index
    %c0_11 = arith.constant 0 : index
    %24 = vector.load %arg2[%c1_10, %c0_11] : memref<25x64xf32, #tpu.memory_space<vmem>>, vector<1x32xf32>
    %c0_12 = arith.constant 0 : index
    %c0_13 = arith.constant 0 : index
    %c0_14 = arith.constant 0 : index
    %25 = vector.load %arg3[%c0_12, %c0_13, %c0_14] : memref<2x32x96xf32, #tpu.memory_space<vmem>>, vector<1x32x96xf32>
    %26 = vector.shape_cast %25 : vector<1x32x96xf32> to vector<32x96xf32>
    %cst_15 = arith.constant dense<0.000000e+00> : vector<16x96xf32>
    %27 = tpu.matmul %10, %26, %cst_15 {dimension_numbers = #tpu.dot_dimension_numbers<[1], [0], [0], [1], [0, 0, 1, 1], [], []>} : vector<16x32xf32>, vector<32x96xf32>, vector<16x96xf32> -> vector<16x96xf32>
    %c0_16 = arith.constant 0 : index
    %c0_17 = arith.constant 0 : index
    %c0_18 = arith.constant 0 : index
    %28 = vector.load %arg4[%c0_16, %c0_17, %c0_18] : memref<2x32x32xf32, #tpu.memory_space<vmem>>, vector<1x32x32xf32>
    %29 = vector.shape_cast %28 : vector<1x32x32xf32> to vector<32x32xf32>
    %cst_19 = arith.constant dense<0.000000e+00> : vector<8x32xf32>
    %30 = tpu.matmul %22, %29, %cst_19 {dimension_numbers = #tpu.dot_dimension_numbers<[1], [0], [0], [1], [0, 0, 1, 1], [], []>} : vector<8x32xf32>, vector<32x32xf32>, vector<8x32xf32> -> vector<8x32xf32>
    %31 = vector.extract_strided_slice %27 {offsets = [0, 0], sizes = [16, 32], strides = [1, 1]} : vector<16x96xf32> to vector<16x32xf32>
    %32 = vector.broadcast %23 : vector<1x32xf32> to vector<16x32xf32>
    %33 = arith.addf %31, %32 : vector<16x32xf32>
    %cst_20 = arith.constant 2.500000e-01 : f32
    %34 = vector.broadcast %cst_20 : f32 to vector<16x32xf32>
    %35 = arith.mulf %33, %34 : vector<16x32xf32>
    %36 = vector.extract_strided_slice %27 {offsets = [0, 0], sizes = [16, 32], strides = [1, 1]} : vector<16x96xf32> to vector<16x32xf32>
    %37 = vector.broadcast %24 : vector<1x32xf32> to vector<16x32xf32>
    %38 = arith.addf %36, %37 : vector<16x32xf32>
    %cst_21 = arith.constant 2.500000e-01 : f32
    %39 = vector.broadcast %cst_21 : f32 to vector<16x32xf32>
    %40 = arith.mulf %38, %39 : vector<16x32xf32>
    %41 = vector.extract_strided_slice %27 {offsets = [0, 32], sizes = [8, 16], strides = [1, 1]} : vector<16x96xf32> to vector<8x16xf32>
    %42 = vector.extract_strided_slice %30 {offsets = [0, 0], sizes = [8, 16], strides = [1, 1]} : vector<8x32xf32> to vector<8x16xf32>
    %43 = vector.extract_strided_slice %27 {offsets = [0, 64], sizes = [8, 16], strides = [1, 1]} : vector<16x96xf32> to vector<8x16xf32>
    %44 = vector.extract_strided_slice %35 {offsets = [0, 0], sizes = [8, 16], strides = [1, 1]} : vector<16x32xf32> to vector<8x16xf32>
    %cst_22 = arith.constant dense<0.000000e+00> : vector<8x8xf32>
    %45 = tpu.matmul %44, %41, %cst_22 {dimension_numbers = #tpu.dot_dimension_numbers<[1], [1], [0], [0], [0, 0, 1, 0], [], []>} : vector<8x16xf32>, vector<8x16xf32>, vector<8x8xf32> -> vector<8x8xf32>
    %46 = vector.extract_strided_slice %40 {offsets = [0, 0], sizes = [8, 16], strides = [1, 1]} : vector<16x32xf32> to vector<8x16xf32>
    %cst_23 = arith.constant dense<0.000000e+00> : vector<8x8xf32>
    %47 = tpu.matmul %46, %42, %cst_23 {dimension_numbers = #tpu.dot_dimension_numbers<[1], [1], [0], [0], [0, 0, 1, 0], [], []>} : vector<8x16xf32>, vector<8x16xf32>, vector<8x8xf32> -> vector<8x8xf32>
    %48 = vector.extract_strided_slice %27 {offsets = [0, 48], sizes = [8, 16], strides = [1, 1]} : vector<16x96xf32> to vector<8x16xf32>
    %49 = vector.extract_strided_slice %30 {offsets = [0, 16], sizes = [8, 16], strides = [1, 1]} : vector<8x32xf32> to vector<8x16xf32>
    %50 = vector.extract_strided_slice %27 {offsets = [0, 80], sizes = [8, 16], strides = [1, 1]} : vector<16x96xf32> to vector<8x16xf32>
    %51 = vector.extract_strided_slice %35 {offsets = [0, 16], sizes = [8, 16], strides = [1, 1]} : vector<16x32xf32> to vector<8x16xf32>
    %cst_24 = arith.constant dense<0.000000e+00> : vector<8x8xf32>
    %52 = tpu.matmul %51, %48, %cst_24 {dimension_numbers = #tpu.dot_dimension_numbers<[1], [1], [0], [0], [0, 0, 1, 0], [], []>} : vector<8x16xf32>, vector<8x16xf32>, vector<8x8xf32> -> vector<8x8xf32>
    %53 = vector.extract_strided_slice %40 {offsets = [0, 16], sizes = [8, 16], strides = [1, 1]} : vector<16x32xf32> to vector<8x16xf32>
    %cst_25 = arith.constant dense<0.000000e+00> : vector<8x8xf32>
    %54 = tpu.matmul %53, %49, %cst_25 {dimension_numbers = #tpu.dot_dimension_numbers<[1], [1], [0], [0], [0, 0, 1, 0], [], []>} : vector<8x16xf32>, vector<8x16xf32>, vector<8x8xf32> -> vector<8x8xf32>
    %55 = vector.extract_strided_slice %27 {offsets = [8, 32], sizes = [8, 16], strides = [1, 1]} : vector<16x96xf32> to vector<8x16xf32>
    %56 = vector.extract_strided_slice %30 {offsets = [0, 0], sizes = [8, 16], strides = [1, 1]} : vector<8x32xf32> to vector<8x16xf32>
    %57 = vector.extract_strided_slice %27 {offsets = [8, 64], sizes = [8, 16], strides = [1, 1]} : vector<16x96xf32> to vector<8x16xf32>
    %58 = vector.extract_strided_slice %35 {offsets = [8, 0], sizes = [8, 16], strides = [1, 1]} : vector<16x32xf32> to vector<8x16xf32>
    %cst_26 = arith.constant dense<0.000000e+00> : vector<8x8xf32>
    %59 = tpu.matmul %58, %55, %cst_26 {dimension_numbers = #tpu.dot_dimension_numbers<[1], [1], [0], [0], [0, 0, 1, 0], [], []>} : vector<8x16xf32>, vector<8x16xf32>, vector<8x8xf32> -> vector<8x8xf32>
    %60 = vector.extract_strided_slice %40 {offsets = [8, 0], sizes = [8, 16], strides = [1, 1]} : vector<16x32xf32> to vector<8x16xf32>
    %cst_27 = arith.constant dense<0.000000e+00> : vector<8x8xf32>
    %61 = tpu.matmul %60, %56, %cst_27 {dimension_numbers = #tpu.dot_dimension_numbers<[1], [1], [0], [0], [0, 0, 1, 0], [], []>} : vector<8x16xf32>, vector<8x16xf32>, vector<8x8xf32> -> vector<8x8xf32>
    %62 = vector.extract_strided_slice %27 {offsets = [8, 48], sizes = [8, 16], strides = [1, 1]} : vector<16x96xf32> to vector<8x16xf32>
    %63 = vector.extract_strided_slice %30 {offsets = [0, 16], sizes = [8, 16], strides = [1, 1]} : vector<8x32xf32> to vector<8x16xf32>
    %64 = vector.extract_strided_slice %27 {offsets = [8, 80], sizes = [8, 16], strides = [1, 1]} : vector<16x96xf32> to vector<8x16xf32>
    %65 = vector.extract_strided_slice %35 {offsets = [8, 16], sizes = [8, 16], strides = [1, 1]} : vector<16x32xf32> to vector<8x16xf32>
    %cst_28 = arith.constant dense<0.000000e+00> : vector<8x8xf32>
    %66 = tpu.matmul %65, %62, %cst_28 {dimension_numbers = #tpu.dot_dimension_numbers<[1], [1], [0], [0], [0, 0, 1, 0], [], []>} : vector<8x16xf32>, vector<8x16xf32>, vector<8x8xf32> -> vector<8x8xf32>
    %67 = vector.extract_strided_slice %40 {offsets = [8, 16], sizes = [8, 16], strides = [1, 1]} : vector<16x32xf32> to vector<8x16xf32>
    %cst_29 = arith.constant dense<0.000000e+00> : vector<8x8xf32>
    %68 = tpu.matmul %67, %63, %cst_29 {dimension_numbers = #tpu.dot_dimension_numbers<[1], [1], [0], [0], [0, 0, 1, 0], [], []>} : vector<8x16xf32>, vector<8x16xf32>, vector<8x8xf32> -> vector<8x8xf32>
    %69 = tpu.concatenate %45, %52, %59, %66 in 0 : vector<8x8xf32>, vector<8x8xf32>, vector<8x8xf32>, vector<8x8xf32> -> vector<32x8xf32>
    %70 = tpu.concatenate %47, %54, %61, %68 in 0 : vector<8x8xf32>, vector<8x8xf32>, vector<8x8xf32>, vector<8x8xf32> -> vector<32x8xf32>
    %cst_30 = arith.constant 0.000000e+00 : f32
    %71 = vector.broadcast %cst_30 : f32 to vector<32x8xf32>
    %c-7_i32 = arith.constant -7 : i32
    %72 = vector.broadcast %c-7_i32 : i32 to vector<32x8xi32>
    %73 = arith.cmpi eq, %20, %72 : vector<32x8xi32>
    %74 = vector.extract_strided_slice %70 {offsets = [0, 0], sizes = [32, 1], strides = [1, 1]} : vector<32x8xf32> to vector<32x1xf32>
    %75 = vector.shape_cast %74 : vector<32x1xf32> to vector<32x1xf32>
    %76 = vector.broadcast %75 : vector<32x1xf32> to vector<32x8xf32>
    %77 = arith.select %73, %76, %71 : vector<32x8xi1>, vector<32x8xf32>
    %c-6_i32 = arith.constant -6 : i32
    %78 = vector.broadcast %c-6_i32 : i32 to vector<32x8xi32>
    %79 = arith.cmpi eq, %20, %78 : vector<32x8xi32>
    %80 = vector.extract_strided_slice %70 {offsets = [0, 1], sizes = [32, 1], strides = [1, 1]} : vector<32x8xf32> to vector<32x1xf32>
    %81 = vector.shape_cast %80 : vector<32x1xf32> to vector<32x1xf32>
    %82 = vector.broadcast %81 : vector<32x1xf32> to vector<32x8xf32>
    %83 = arith.select %79, %82, %77 : vector<32x8xi1>, vector<32x8xf32>
    %c-5_i32 = arith.constant -5 : i32
    %84 = vector.broadcast %c-5_i32 : i32 to vector<32x8xi32>
    %85 = arith.cmpi eq, %20, %84 : vector<32x8xi32>
    %86 = vector.extract_strided_slice %70 {offsets = [0, 2], sizes = [32, 1], strides = [1, 1]} : vector<32x8xf32> to vector<32x1xf32>
    %87 = vector.shape_cast %86 : vector<32x1xf32> to vector<32x1xf32>
    %88 = vector.broadcast %87 : vector<32x1xf32> to vector<32x8xf32>
    %89 = arith.select %85, %88, %83 : vector<32x8xi1>, vector<32x8xf32>
    %c-4_i32 = arith.constant -4 : i32
    %90 = vector.broadcast %c-4_i32 : i32 to vector<32x8xi32>
    %91 = arith.cmpi eq, %20, %90 : vector<32x8xi32>
    %92 = vector.extract_strided_slice %70 {offsets = [0, 3], sizes = [32, 1], strides = [1, 1]} : vector<32x8xf32> to vector<32x1xf32>
    %93 = vector.shape_cast %92 : vector<32x1xf32> to vector<32x1xf32>
    %94 = vector.broadcast %93 : vector<32x1xf32> to vector<32x8xf32>
    %95 = arith.select %91, %94, %89 : vector<32x8xi1>, vector<32x8xf32>
    %c-3_i32 = arith.constant -3 : i32
    %96 = vector.broadcast %c-3_i32 : i32 to vector<32x8xi32>
    %97 = arith.cmpi eq, %20, %96 : vector<32x8xi32>
    %98 = vector.extract_strided_slice %70 {offsets = [0, 4], sizes = [32, 1], strides = [1, 1]} : vector<32x8xf32> to vector<32x1xf32>
    %99 = vector.shape_cast %98 : vector<32x1xf32> to vector<32x1xf32>
    %100 = vector.broadcast %99 : vector<32x1xf32> to vector<32x8xf32>
    %101 = arith.select %97, %100, %95 : vector<32x8xi1>, vector<32x8xf32>
    %c-2_i32 = arith.constant -2 : i32
    %102 = vector.broadcast %c-2_i32 : i32 to vector<32x8xi32>
    %103 = arith.cmpi eq, %20, %102 : vector<32x8xi32>
    %104 = vector.extract_strided_slice %70 {offsets = [0, 5], sizes = [32, 1], strides = [1, 1]} : vector<32x8xf32> to vector<32x1xf32>
    %105 = vector.shape_cast %104 : vector<32x1xf32> to vector<32x1xf32>
    %106 = vector.broadcast %105 : vector<32x1xf32> to vector<32x8xf32>
    %107 = arith.select %103, %106, %101 : vector<32x8xi1>, vector<32x8xf32>
    %c-1_i32 = arith.constant -1 : i32
    %108 = vector.broadcast %c-1_i32 : i32 to vector<32x8xi32>
    %109 = arith.cmpi eq, %20, %108 : vector<32x8xi32>
    %110 = vector.extract_strided_slice %70 {offsets = [0, 6], sizes = [32, 1], strides = [1, 1]} : vector<32x8xf32> to vector<32x1xf32>
    %111 = vector.shape_cast %110 : vector<32x1xf32> to vector<32x1xf32>
    %112 = vector.broadcast %111 : vector<32x1xf32> to vector<32x8xf32>
    %113 = arith.select %109, %112, %107 : vector<32x8xi1>, vector<32x8xf32>
    %c0_i32_31 = arith.constant 0 : i32
    %114 = vector.broadcast %c0_i32_31 : i32 to vector<32x8xi32>
    %115 = arith.cmpi eq, %20, %114 : vector<32x8xi32>
    %116 = vector.extract_strided_slice %70 {offsets = [0, 7], sizes = [32, 1], strides = [1, 1]} : vector<32x8xf32> to vector<32x1xf32>
    %117 = vector.shape_cast %116 : vector<32x1xf32> to vector<32x1xf32>
    %118 = vector.broadcast %117 : vector<32x1xf32> to vector<32x8xf32>
    %119 = arith.select %115, %118, %113 : vector<32x8xi1>, vector<32x8xf32>
    %120 = arith.addf %69, %119 : vector<32x8xf32>
    %121 = arith.addf %120, %21 : vector<32x8xf32>
    %cst_32 = arith.constant dense<0xFF800000> : vector<32xf32>
    %122 = vector.multi_reduction <maximumf>, %121, %cst_32 [1] : vector<32x8xf32> to vector<32xf32>
    %123 = vector.shape_cast %122 : vector<32xf32> to vector<32x1xf32>
    %124 = vector.broadcast %123 : vector<32x1xf32> to vector<32x8xf32>
    %125 = arith.subf %121, %124 : vector<32x8xf32>
    %126 = math.exp %125 : vector<32x8xf32>
    %cst_33 = arith.constant dense<0.000000e+00> : vector<32xf32>
    %127 = vector.multi_reduction <add>, %126, %cst_33 [1] : vector<32x8xf32> to vector<32xf32>
    %128 = vector.shape_cast %127 : vector<32xf32> to vector<32x1xf32>
    %129 = vector.broadcast %128 : vector<32x1xf32> to vector<32x8xf32>
    %130 = arith.divf %126, %129 : vector<32x8xf32>
    %131 = vector.extract_strided_slice %130 {offsets = [0, 0], sizes = [8, 8], strides = [1, 1]} : vector<32x8xf32> to vector<8x8xf32>
    %cst_34 = arith.constant dense<0.000000e+00> : vector<8x16xf32>
    %132 = tpu.matmul %131, %43, %cst_34 {dimension_numbers = #tpu.dot_dimension_numbers<[1], [0], [0], [1], [0, 0, 1, 1], [], []>} : vector<8x8xf32>, vector<8x16xf32>, vector<8x16xf32> -> vector<8x16xf32>
    %133 = vector.extract_strided_slice %130 {offsets = [8, 0], sizes = [8, 8], strides = [1, 1]} : vector<32x8xf32> to vector<8x8xf32>
    %cst_35 = arith.constant dense<0.000000e+00> : vector<8x16xf32>
    %134 = tpu.matmul %133, %50, %cst_35 {dimension_numbers = #tpu.dot_dimension_numbers<[1], [0], [0], [1], [0, 0, 1, 1], [], []>} : vector<8x8xf32>, vector<8x16xf32>, vector<8x16xf32> -> vector<8x16xf32>
    %135 = tpu.concatenate %132, %134 in 1 : vector<8x16xf32>, vector<8x16xf32> -> vector<8x32xf32>
    %136 = vector.extract_strided_slice %130 {offsets = [16, 0], sizes = [8, 8], strides = [1, 1]} : vector<32x8xf32> to vector<8x8xf32>
    %cst_36 = arith.constant dense<0.000000e+00> : vector<8x16xf32>
    %137 = tpu.matmul %136, %57, %cst_36 {dimension_numbers = #tpu.dot_dimension_numbers<[1], [0], [0], [1], [0, 0, 1, 1], [], []>} : vector<8x8xf32>, vector<8x16xf32>, vector<8x16xf32> -> vector<8x16xf32>
    %138 = vector.extract_strided_slice %130 {offsets = [24, 0], sizes = [8, 8], strides = [1, 1]} : vector<32x8xf32> to vector<8x8xf32>
    %cst_37 = arith.constant dense<0.000000e+00> : vector<8x16xf32>
    %139 = tpu.matmul %138, %64, %cst_37 {dimension_numbers = #tpu.dot_dimension_numbers<[1], [0], [0], [1], [0, 0, 1, 1], [], []>} : vector<8x8xf32>, vector<8x16xf32>, vector<8x16xf32> -> vector<8x16xf32>
    %140 = tpu.concatenate %137, %139 in 1 : vector<8x16xf32>, vector<8x16xf32> -> vector<8x32xf32>
    %141 = tpu.concatenate %135, %140 in 0 : vector<8x32xf32>, vector<8x32xf32> -> vector<16x32xf32>
    %c0_38 = arith.constant 0 : index
    %c0_39 = arith.constant 0 : index
    %c0_40 = arith.constant 0 : index
    %142 = vector.load %arg5[%c0_38, %c0_39, %c0_40] : memref<2x32x32xf32, #tpu.memory_space<vmem>>, vector<1x32x32xf32>
    %143 = vector.shape_cast %142 : vector<1x32x32xf32> to vector<32x32xf32>
    %cst_41 = arith.constant dense<0.000000e+00> : vector<16x32xf32>
    %144 = tpu.matmul %141, %143, %cst_41 {dimension_numbers = #tpu.dot_dimension_numbers<[1], [0], [0], [1], [0, 0, 1, 1], [], []>} : vector<16x32xf32>, vector<32x32xf32>, vector<16x32xf32> -> vector<16x32xf32>
    %145 = arith.addf %144, %10 : vector<16x32xf32>
    %c13 = arith.constant 13 : index
    %c0_42 = arith.constant 0 : index
    %146 = vector.load %arg2[%c13, %c0_42] : memref<25x64xf32, #tpu.memory_space<vmem>>, vector<1x32xf32>
    %c15 = arith.constant 15 : index
    %c0_43 = arith.constant 0 : index
    %147 = vector.load %arg2[%c15, %c0_43] : memref<25x64xf32, #tpu.memory_space<vmem>>, vector<1x32xf32>
    %cst_44 = arith.constant dense<0.000000e+00> : vector<16xf32>
    %148 = vector.multi_reduction <add>, %145, %cst_44 [1] : vector<16x32xf32> to vector<16xf32>
    %149 = vector.shape_cast %148 : vector<16xf32> to vector<16x1xf32>
    %cst_45 = arith.constant 3.200000e+01 : f32
    %150 = vector.broadcast %cst_45 : f32 to vector<16x1xf32>
    %151 = arith.divf %149, %150 : vector<16x1xf32>
    %152 = vector.broadcast %151 : vector<16x1xf32> to vector<16x32xf32>
    %153 = arith.subf %145, %152 : vector<16x32xf32>
    %154 = arith.mulf %153, %153 : vector<16x32xf32>
    %cst_46 = arith.constant dense<0.000000e+00> : vector<16xf32>
    %155 = vector.multi_reduction <add>, %154, %cst_46 [1] : vector<16x32xf32> to vector<16xf32>
    %156 = vector.shape_cast %155 : vector<16xf32> to vector<16x1xf32>
    %cst_47 = arith.constant 3.200000e+01 : f32
    %157 = vector.broadcast %cst_47 : f32 to vector<16x1xf32>
    %158 = arith.divf %156, %157 : vector<16x1xf32>
    %cst_48 = arith.constant 9.99999974E-6 : f32
    %159 = vector.broadcast %cst_48 : f32 to vector<16x1xf32>
    %160 = arith.addf %158, %159 : vector<16x1xf32>
    %161 = math.rsqrt %160 : vector<16x1xf32>
    %162 = vector.broadcast %161 : vector<16x1xf32> to vector<16x32xf32>
    %163 = arith.mulf %153, %162 : vector<16x32xf32>
    %164 = vector.broadcast %146 : vector<1x32xf32> to vector<16x32xf32>
    %165 = arith.mulf %163, %164 : vector<16x32xf32>
    %166 = vector.broadcast %147 : vector<1x32xf32> to vector<16x32xf32>
    %167 = arith.addf %165, %166 : vector<16x32xf32>
    %c0_49 = arith.constant 0 : index
    %c0_50 = arith.constant 0 : index
    %c0_51 = arith.constant 0 : index
    %168 = vector.load %arg6[%c0_49, %c0_50, %c0_51] : memref<2x32x64xf32, #tpu.memory_space<vmem>>, vector<1x32x64xf32>
    %169 = vector.shape_cast %168 : vector<1x32x64xf32> to vector<32x64xf32>
    %cst_52 = arith.constant dense<0.000000e+00> : vector<16x64xf32>
    %170 = tpu.matmul %167, %169, %cst_52 {dimension_numbers = #tpu.dot_dimension_numbers<[1], [0], [0], [1], [0, 0, 1, 1], [], []>} : vector<16x32xf32>, vector<32x64xf32>, vector<16x64xf32> -> vector<16x64xf32>
    %c21 = arith.constant 21 : index
    %c0_53 = arith.constant 0 : index
    %171 = vector.load %arg2[%c21, %c0_53] : memref<25x64xf32, #tpu.memory_space<vmem>>, vector<1x64xf32>
    %172 = vector.broadcast %171 : vector<1x64xf32> to vector<16x64xf32>
    %173 = arith.addf %170, %172 : vector<16x64xf32>
    %cst_54 = arith.constant 0.000000e+00 : f32
    %174 = vector.broadcast %cst_54 : f32 to vector<16x64xf32>
    %175 = arith.maximumf %173, %174 : vector<16x64xf32>
    %c0_55 = arith.constant 0 : index
    %c0_56 = arith.constant 0 : index
    %c0_57 = arith.constant 0 : index
    %176 = vector.load %arg7[%c0_55, %c0_56, %c0_57] : memref<2x64x32xf32, #tpu.memory_space<vmem>>, vector<1x64x32xf32>
    %177 = vector.shape_cast %176 : vector<1x64x32xf32> to vector<64x32xf32>
    %cst_58 = arith.constant dense<0.000000e+00> : vector<16x32xf32>
    %178 = tpu.matmul %175, %177, %cst_58 {dimension_numbers = #tpu.dot_dimension_numbers<[1], [0], [0], [1], [0, 0, 1, 1], [], []>} : vector<16x64xf32>, vector<64x32xf32>, vector<16x32xf32> -> vector<16x32xf32>
    %c23 = arith.constant 23 : index
    %c0_59 = arith.constant 0 : index
    %179 = vector.load %arg2[%c23, %c0_59] : memref<25x64xf32, #tpu.memory_space<vmem>>, vector<1x32xf32>
    %180 = vector.broadcast %179 : vector<1x32xf32> to vector<16x32xf32>
    %181 = arith.addf %178, %180 : vector<16x32xf32>
    %182 = arith.addf %181, %167 : vector<16x32xf32>
    %c17 = arith.constant 17 : index
    %c0_60 = arith.constant 0 : index
    %183 = vector.load %arg2[%c17, %c0_60] : memref<25x64xf32, #tpu.memory_space<vmem>>, vector<1x32xf32>
    %c19 = arith.constant 19 : index
    %c0_61 = arith.constant 0 : index
    %184 = vector.load %arg2[%c19, %c0_61] : memref<25x64xf32, #tpu.memory_space<vmem>>, vector<1x32xf32>
    %cst_62 = arith.constant dense<0.000000e+00> : vector<16xf32>
    %185 = vector.multi_reduction <add>, %182, %cst_62 [1] : vector<16x32xf32> to vector<16xf32>
    %186 = vector.shape_cast %185 : vector<16xf32> to vector<16x1xf32>
    %cst_63 = arith.constant 3.200000e+01 : f32
    %187 = vector.broadcast %cst_63 : f32 to vector<16x1xf32>
    %188 = arith.divf %186, %187 : vector<16x1xf32>
    %189 = vector.broadcast %188 : vector<16x1xf32> to vector<16x32xf32>
    %190 = arith.subf %182, %189 : vector<16x32xf32>
    %191 = arith.mulf %190, %190 : vector<16x32xf32>
    %cst_64 = arith.constant dense<0.000000e+00> : vector<16xf32>
    %192 = vector.multi_reduction <add>, %191, %cst_64 [1] : vector<16x32xf32> to vector<16xf32>
    %193 = vector.shape_cast %192 : vector<16xf32> to vector<16x1xf32>
    %cst_65 = arith.constant 3.200000e+01 : f32
    %194 = vector.broadcast %cst_65 : f32 to vector<16x1xf32>
    %195 = arith.divf %193, %194 : vector<16x1xf32>
    %cst_66 = arith.constant 9.99999974E-6 : f32
    %196 = vector.broadcast %cst_66 : f32 to vector<16x1xf32>
    %197 = arith.addf %195, %196 : vector<16x1xf32>
    %198 = math.rsqrt %197 : vector<16x1xf32>
    %199 = vector.broadcast %198 : vector<16x1xf32> to vector<16x32xf32>
    %200 = arith.mulf %190, %199 : vector<16x32xf32>
    %201 = vector.broadcast %183 : vector<1x32xf32> to vector<16x32xf32>
    %202 = arith.mulf %200, %201 : vector<16x32xf32>
    %203 = vector.broadcast %184 : vector<1x32xf32> to vector<16x32xf32>
    %204 = arith.addf %202, %203 : vector<16x32xf32>
    %c1_67 = arith.constant 1 : index
    %c0_68 = arith.constant 0 : index
    %c0_69 = arith.constant 0 : index
    %205 = vector.load %arg3[%c1_67, %c0_68, %c0_69] : memref<2x32x96xf32, #tpu.memory_space<vmem>>, vector<1x32x96xf32>
    %206 = vector.shape_cast %205 : vector<1x32x96xf32> to vector<32x96xf32>
    %cst_70 = arith.constant dense<0.000000e+00> : vector<16x96xf32>
    %207 = tpu.matmul %204, %206, %cst_70 {dimension_numbers = #tpu.dot_dimension_numbers<[1], [0], [0], [1], [0, 0, 1, 1], [], []>} : vector<16x32xf32>, vector<32x96xf32>, vector<16x96xf32> -> vector<16x96xf32>
    %c1_71 = arith.constant 1 : index
    %c0_72 = arith.constant 0 : index
    %c0_73 = arith.constant 0 : index
    %208 = vector.load %arg4[%c1_71, %c0_72, %c0_73] : memref<2x32x32xf32, #tpu.memory_space<vmem>>, vector<1x32x32xf32>
    %209 = vector.shape_cast %208 : vector<1x32x32xf32> to vector<32x32xf32>
    %cst_74 = arith.constant dense<0.000000e+00> : vector<8x32xf32>
    %210 = tpu.matmul %22, %209, %cst_74 {dimension_numbers = #tpu.dot_dimension_numbers<[1], [0], [0], [1], [0, 0, 1, 1], [], []>} : vector<8x32xf32>, vector<32x32xf32>, vector<8x32xf32> -> vector<8x32xf32>
    %211 = vector.extract_strided_slice %207 {offsets = [0, 0], sizes = [16, 32], strides = [1, 1]} : vector<16x96xf32> to vector<16x32xf32>
    %212 = vector.broadcast %23 : vector<1x32xf32> to vector<16x32xf32>
    %213 = arith.addf %211, %212 : vector<16x32xf32>
    %cst_75 = arith.constant 2.500000e-01 : f32
    %214 = vector.broadcast %cst_75 : f32 to vector<16x32xf32>
    %215 = arith.mulf %213, %214 : vector<16x32xf32>
    %216 = vector.extract_strided_slice %207 {offsets = [0, 0], sizes = [16, 32], strides = [1, 1]} : vector<16x96xf32> to vector<16x32xf32>
    %217 = vector.broadcast %24 : vector<1x32xf32> to vector<16x32xf32>
    %218 = arith.addf %216, %217 : vector<16x32xf32>
    %cst_76 = arith.constant 2.500000e-01 : f32
    %219 = vector.broadcast %cst_76 : f32 to vector<16x32xf32>
    %220 = arith.mulf %218, %219 : vector<16x32xf32>
    %221 = vector.extract_strided_slice %207 {offsets = [0, 32], sizes = [8, 16], strides = [1, 1]} : vector<16x96xf32> to vector<8x16xf32>
    %222 = vector.extract_strided_slice %210 {offsets = [0, 0], sizes = [8, 16], strides = [1, 1]} : vector<8x32xf32> to vector<8x16xf32>
    %223 = vector.extract_strided_slice %207 {offsets = [0, 64], sizes = [8, 16], strides = [1, 1]} : vector<16x96xf32> to vector<8x16xf32>
    %224 = vector.extract_strided_slice %215 {offsets = [0, 0], sizes = [8, 16], strides = [1, 1]} : vector<16x32xf32> to vector<8x16xf32>
    %cst_77 = arith.constant dense<0.000000e+00> : vector<8x8xf32>
    %225 = tpu.matmul %224, %221, %cst_77 {dimension_numbers = #tpu.dot_dimension_numbers<[1], [1], [0], [0], [0, 0, 1, 0], [], []>} : vector<8x16xf32>, vector<8x16xf32>, vector<8x8xf32> -> vector<8x8xf32>
    %226 = vector.extract_strided_slice %220 {offsets = [0, 0], sizes = [8, 16], strides = [1, 1]} : vector<16x32xf32> to vector<8x16xf32>
    %cst_78 = arith.constant dense<0.000000e+00> : vector<8x8xf32>
    %227 = tpu.matmul %226, %222, %cst_78 {dimension_numbers = #tpu.dot_dimension_numbers<[1], [1], [0], [0], [0, 0, 1, 0], [], []>} : vector<8x16xf32>, vector<8x16xf32>, vector<8x8xf32> -> vector<8x8xf32>
    %228 = vector.extract_strided_slice %207 {offsets = [0, 48], sizes = [8, 16], strides = [1, 1]} : vector<16x96xf32> to vector<8x16xf32>
    %229 = vector.extract_strided_slice %210 {offsets = [0, 16], sizes = [8, 16], strides = [1, 1]} : vector<8x32xf32> to vector<8x16xf32>
    %230 = vector.extract_strided_slice %207 {offsets = [0, 80], sizes = [8, 16], strides = [1, 1]} : vector<16x96xf32> to vector<8x16xf32>
    %231 = vector.extract_strided_slice %215 {offsets = [0, 16], sizes = [8, 16], strides = [1, 1]} : vector<16x32xf32> to vector<8x16xf32>
    %cst_79 = arith.constant dense<0.000000e+00> : vector<8x8xf32>
    %232 = tpu.matmul %231, %228, %cst_79 {dimension_numbers = #tpu.dot_dimension_numbers<[1], [1], [0], [0], [0, 0, 1, 0], [], []>} : vector<8x16xf32>, vector<8x16xf32>, vector<8x8xf32> -> vector<8x8xf32>
    %233 = vector.extract_strided_slice %220 {offsets = [0, 16], sizes = [8, 16], strides = [1, 1]} : vector<16x32xf32> to vector<8x16xf32>
    %cst_80 = arith.constant dense<0.000000e+00> : vector<8x8xf32>
    %234 = tpu.matmul %233, %229, %cst_80 {dimension_numbers = #tpu.dot_dimension_numbers<[1], [1], [0], [0], [0, 0, 1, 0], [], []>} : vector<8x16xf32>, vector<8x16xf32>, vector<8x8xf32> -> vector<8x8xf32>
    %235 = vector.extract_strided_slice %207 {offsets = [8, 32], sizes = [8, 16], strides = [1, 1]} : vector<16x96xf32> to vector<8x16xf32>
    %236 = vector.extract_strided_slice %210 {offsets = [0, 0], sizes = [8, 16], strides = [1, 1]} : vector<8x32xf32> to vector<8x16xf32>
    %237 = vector.extract_strided_slice %207 {offsets = [8, 64], sizes = [8, 16], strides = [1, 1]} : vector<16x96xf32> to vector<8x16xf32>
    %238 = vector.extract_strided_slice %215 {offsets = [8, 0], sizes = [8, 16], strides = [1, 1]} : vector<16x32xf32> to vector<8x16xf32>
    %cst_81 = arith.constant dense<0.000000e+00> : vector<8x8xf32>
    %239 = tpu.matmul %238, %235, %cst_81 {dimension_numbers = #tpu.dot_dimension_numbers<[1], [1], [0], [0], [0, 0, 1, 0], [], []>} : vector<8x16xf32>, vector<8x16xf32>, vector<8x8xf32> -> vector<8x8xf32>
    %240 = vector.extract_strided_slice %220 {offsets = [8, 0], sizes = [8, 16], strides = [1, 1]} : vector<16x32xf32> to vector<8x16xf32>
    %cst_82 = arith.constant dense<0.000000e+00> : vector<8x8xf32>
    %241 = tpu.matmul %240, %236, %cst_82 {dimension_numbers = #tpu.dot_dimension_numbers<[1], [1], [0], [0], [0, 0, 1, 0], [], []>} : vector<8x16xf32>, vector<8x16xf32>, vector<8x8xf32> -> vector<8x8xf32>
    %242 = vector.extract_strided_slice %207 {offsets = [8, 48], sizes = [8, 16], strides = [1, 1]} : vector<16x96xf32> to vector<8x16xf32>
    %243 = vector.extract_strided_slice %210 {offsets = [0, 16], sizes = [8, 16], strides = [1, 1]} : vector<8x32xf32> to vector<8x16xf32>
    %244 = vector.extract_strided_slice %207 {offsets = [8, 80], sizes = [8, 16], strides = [1, 1]} : vector<16x96xf32> to vector<8x16xf32>
    %245 = vector.extract_strided_slice %215 {offsets = [8, 16], sizes = [8, 16], strides = [1, 1]} : vector<16x32xf32> to vector<8x16xf32>
    %cst_83 = arith.constant dense<0.000000e+00> : vector<8x8xf32>
    %246 = tpu.matmul %245, %242, %cst_83 {dimension_numbers = #tpu.dot_dimension_numbers<[1], [1], [0], [0], [0, 0, 1, 0], [], []>} : vector<8x16xf32>, vector<8x16xf32>, vector<8x8xf32> -> vector<8x8xf32>
    %247 = vector.extract_strided_slice %220 {offsets = [8, 16], sizes = [8, 16], strides = [1, 1]} : vector<16x32xf32> to vector<8x16xf32>
    %cst_84 = arith.constant dense<0.000000e+00> : vector<8x8xf32>
    %248 = tpu.matmul %247, %243, %cst_84 {dimension_numbers = #tpu.dot_dimension_numbers<[1], [1], [0], [0], [0, 0, 1, 0], [], []>} : vector<8x16xf32>, vector<8x16xf32>, vector<8x8xf32> -> vector<8x8xf32>
    %249 = tpu.concatenate %225, %232, %239, %246 in 0 : vector<8x8xf32>, vector<8x8xf32>, vector<8x8xf32>, vector<8x8xf32> -> vector<32x8xf32>
    %250 = tpu.concatenate %227, %234, %241, %248 in 0 : vector<8x8xf32>, vector<8x8xf32>, vector<8x8xf32>, vector<8x8xf32> -> vector<32x8xf32>
    %cst_85 = arith.constant 0.000000e+00 : f32
    %251 = vector.broadcast %cst_85 : f32 to vector<32x8xf32>
    %c-7_i32_86 = arith.constant -7 : i32
    %252 = vector.broadcast %c-7_i32_86 : i32 to vector<32x8xi32>
    %253 = arith.cmpi eq, %20, %252 : vector<32x8xi32>
    %254 = vector.extract_strided_slice %250 {offsets = [0, 0], sizes = [32, 1], strides = [1, 1]} : vector<32x8xf32> to vector<32x1xf32>
    %255 = vector.shape_cast %254 : vector<32x1xf32> to vector<32x1xf32>
    %256 = vector.broadcast %255 : vector<32x1xf32> to vector<32x8xf32>
    %257 = arith.select %253, %256, %251 : vector<32x8xi1>, vector<32x8xf32>
    %c-6_i32_87 = arith.constant -6 : i32
    %258 = vector.broadcast %c-6_i32_87 : i32 to vector<32x8xi32>
    %259 = arith.cmpi eq, %20, %258 : vector<32x8xi32>
    %260 = vector.extract_strided_slice %250 {offsets = [0, 1], sizes = [32, 1], strides = [1, 1]} : vector<32x8xf32> to vector<32x1xf32>
    %261 = vector.shape_cast %260 : vector<32x1xf32> to vector<32x1xf32>
    %262 = vector.broadcast %261 : vector<32x1xf32> to vector<32x8xf32>
    %263 = arith.select %259, %262, %257 : vector<32x8xi1>, vector<32x8xf32>
    %c-5_i32_88 = arith.constant -5 : i32
    %264 = vector.broadcast %c-5_i32_88 : i32 to vector<32x8xi32>
    %265 = arith.cmpi eq, %20, %264 : vector<32x8xi32>
    %266 = vector.extract_strided_slice %250 {offsets = [0, 2], sizes = [32, 1], strides = [1, 1]} : vector<32x8xf32> to vector<32x1xf32>
    %267 = vector.shape_cast %266 : vector<32x1xf32> to vector<32x1xf32>
    %268 = vector.broadcast %267 : vector<32x1xf32> to vector<32x8xf32>
    %269 = arith.select %265, %268, %263 : vector<32x8xi1>, vector<32x8xf32>
    %c-4_i32_89 = arith.constant -4 : i32
    %270 = vector.broadcast %c-4_i32_89 : i32 to vector<32x8xi32>
    %271 = arith.cmpi eq, %20, %270 : vector<32x8xi32>
    %272 = vector.extract_strided_slice %250 {offsets = [0, 3], sizes = [32, 1], strides = [1, 1]} : vector<32x8xf32> to vector<32x1xf32>
    %273 = vector.shape_cast %272 : vector<32x1xf32> to vector<32x1xf32>
    %274 = vector.broadcast %273 : vector<32x1xf32> to vector<32x8xf32>
    %275 = arith.select %271, %274, %269 : vector<32x8xi1>, vector<32x8xf32>
    %c-3_i32_90 = arith.constant -3 : i32
    %276 = vector.broadcast %c-3_i32_90 : i32 to vector<32x8xi32>
    %277 = arith.cmpi eq, %20, %276 : vector<32x8xi32>
    %278 = vector.extract_strided_slice %250 {offsets = [0, 4], sizes = [32, 1], strides = [1, 1]} : vector<32x8xf32> to vector<32x1xf32>
    %279 = vector.shape_cast %278 : vector<32x1xf32> to vector<32x1xf32>
    %280 = vector.broadcast %279 : vector<32x1xf32> to vector<32x8xf32>
    %281 = arith.select %277, %280, %275 : vector<32x8xi1>, vector<32x8xf32>
    %c-2_i32_91 = arith.constant -2 : i32
    %282 = vector.broadcast %c-2_i32_91 : i32 to vector<32x8xi32>
    %283 = arith.cmpi eq, %20, %282 : vector<32x8xi32>
    %284 = vector.extract_strided_slice %250 {offsets = [0, 5], sizes = [32, 1], strides = [1, 1]} : vector<32x8xf32> to vector<32x1xf32>
    %285 = vector.shape_cast %284 : vector<32x1xf32> to vector<32x1xf32>
    %286 = vector.broadcast %285 : vector<32x1xf32> to vector<32x8xf32>
    %287 = arith.select %283, %286, %281 : vector<32x8xi1>, vector<32x8xf32>
    %c-1_i32_92 = arith.constant -1 : i32
    %288 = vector.broadcast %c-1_i32_92 : i32 to vector<32x8xi32>
    %289 = arith.cmpi eq, %20, %288 : vector<32x8xi32>
    %290 = vector.extract_strided_slice %250 {offsets = [0, 6], sizes = [32, 1], strides = [1, 1]} : vector<32x8xf32> to vector<32x1xf32>
    %291 = vector.shape_cast %290 : vector<32x1xf32> to vector<32x1xf32>
    %292 = vector.broadcast %291 : vector<32x1xf32> to vector<32x8xf32>
    %293 = arith.select %289, %292, %287 : vector<32x8xi1>, vector<32x8xf32>
    %c0_i32_93 = arith.constant 0 : i32
    %294 = vector.broadcast %c0_i32_93 : i32 to vector<32x8xi32>
    %295 = arith.cmpi eq, %20, %294 : vector<32x8xi32>
    %296 = vector.extract_strided_slice %250 {offsets = [0, 7], sizes = [32, 1], strides = [1, 1]} : vector<32x8xf32> to vector<32x1xf32>
    %297 = vector.shape_cast %296 : vector<32x1xf32> to vector<32x1xf32>
    %298 = vector.broadcast %297 : vector<32x1xf32> to vector<32x8xf32>
    %299 = arith.select %295, %298, %293 : vector<32x8xi1>, vector<32x8xf32>
    %300 = arith.addf %249, %299 : vector<32x8xf32>
    %301 = arith.addf %300, %21 : vector<32x8xf32>
    %cst_94 = arith.constant dense<0xFF800000> : vector<32xf32>
    %302 = vector.multi_reduction <maximumf>, %301, %cst_94 [1] : vector<32x8xf32> to vector<32xf32>
    %303 = vector.shape_cast %302 : vector<32xf32> to vector<32x1xf32>
    %304 = vector.broadcast %303 : vector<32x1xf32> to vector<32x8xf32>
    %305 = arith.subf %301, %304 : vector<32x8xf32>
    %306 = math.exp %305 : vector<32x8xf32>
    %cst_95 = arith.constant dense<0.000000e+00> : vector<32xf32>
    %307 = vector.multi_reduction <add>, %306, %cst_95 [1] : vector<32x8xf32> to vector<32xf32>
    %308 = vector.shape_cast %307 : vector<32xf32> to vector<32x1xf32>
    %309 = vector.broadcast %308 : vector<32x1xf32> to vector<32x8xf32>
    %310 = arith.divf %306, %309 : vector<32x8xf32>
    %311 = vector.extract_strided_slice %310 {offsets = [0, 0], sizes = [8, 8], strides = [1, 1]} : vector<32x8xf32> to vector<8x8xf32>
    %cst_96 = arith.constant dense<0.000000e+00> : vector<8x16xf32>
    %312 = tpu.matmul %311, %223, %cst_96 {dimension_numbers = #tpu.dot_dimension_numbers<[1], [0], [0], [1], [0, 0, 1, 1], [], []>} : vector<8x8xf32>, vector<8x16xf32>, vector<8x16xf32> -> vector<8x16xf32>
    %313 = vector.extract_strided_slice %310 {offsets = [8, 0], sizes = [8, 8], strides = [1, 1]} : vector<32x8xf32> to vector<8x8xf32>
    %cst_97 = arith.constant dense<0.000000e+00> : vector<8x16xf32>
    %314 = tpu.matmul %313, %230, %cst_97 {dimension_numbers = #tpu.dot_dimension_numbers<[1], [0], [0], [1], [0, 0, 1, 1], [], []>} : vector<8x8xf32>, vector<8x16xf32>, vector<8x16xf32> -> vector<8x16xf32>
    %315 = tpu.concatenate %312, %314 in 1 : vector<8x16xf32>, vector<8x16xf32> -> vector<8x32xf32>
    %316 = vector.extract_strided_slice %310 {offsets = [16, 0], sizes = [8, 8], strides = [1, 1]} : vector<32x8xf32> to vector<8x8xf32>
    %cst_98 = arith.constant dense<0.000000e+00> : vector<8x16xf32>
    %317 = tpu.matmul %316, %237, %cst_98 {dimension_numbers = #tpu.dot_dimension_numbers<[1], [0], [0], [1], [0, 0, 1, 1], [], []>} : vector<8x8xf32>, vector<8x16xf32>, vector<8x16xf32> -> vector<8x16xf32>
    %318 = vector.extract_strided_slice %310 {offsets = [24, 0], sizes = [8, 8], strides = [1, 1]} : vector<32x8xf32> to vector<8x8xf32>
    %cst_99 = arith.constant dense<0.000000e+00> : vector<8x16xf32>
    %319 = tpu.matmul %318, %244, %cst_99 {dimension_numbers = #tpu.dot_dimension_numbers<[1], [0], [0], [1], [0, 0, 1, 1], [], []>} : vector<8x8xf32>, vector<8x16xf32>, vector<8x16xf32> -> vector<8x16xf32>
    %320 = tpu.concatenate %317, %319 in 1 : vector<8x16xf32>, vector<8x16xf32> -> vector<8x32xf32>
    %321 = tpu.concatenate %315, %320 in 0 : vector<8x32xf32>, vector<8x32xf32> -> vector<16x32xf32>
    %c1_100 = arith.constant 1 : index
    %c0_101 = arith.constant 0 : index
    %c0_102 = arith.constant 0 : index
    %322 = vector.load %arg5[%c1_100, %c0_101, %c0_102] : memref<2x32x32xf32, #tpu.memory_space<vmem>>, vector<1x32x32xf32>
    %323 = vector.shape_cast %322 : vector<1x32x32xf32> to vector<32x32xf32>
    %cst_103 = arith.constant dense<0.000000e+00> : vector<16x32xf32>
    %324 = tpu.matmul %321, %323, %cst_103 {dimension_numbers = #tpu.dot_dimension_numbers<[1], [0], [0], [1], [0, 0, 1, 1], [], []>} : vector<16x32xf32>, vector<32x32xf32>, vector<16x32xf32> -> vector<16x32xf32>
    %325 = arith.addf %324, %204 : vector<16x32xf32>
    %c14 = arith.constant 14 : index
    %c0_104 = arith.constant 0 : index
    %326 = vector.load %arg2[%c14, %c0_104] : memref<25x64xf32, #tpu.memory_space<vmem>>, vector<1x32xf32>
    %c16 = arith.constant 16 : index
    %c0_105 = arith.constant 0 : index
    %327 = vector.load %arg2[%c16, %c0_105] : memref<25x64xf32, #tpu.memory_space<vmem>>, vector<1x32xf32>
    %cst_106 = arith.constant dense<0.000000e+00> : vector<16xf32>
    %328 = vector.multi_reduction <add>, %325, %cst_106 [1] : vector<16x32xf32> to vector<16xf32>
    %329 = vector.shape_cast %328 : vector<16xf32> to vector<16x1xf32>
    %cst_107 = arith.constant 3.200000e+01 : f32
    %330 = vector.broadcast %cst_107 : f32 to vector<16x1xf32>
    %331 = arith.divf %329, %330 : vector<16x1xf32>
    %332 = vector.broadcast %331 : vector<16x1xf32> to vector<16x32xf32>
    %333 = arith.subf %325, %332 : vector<16x32xf32>
    %334 = arith.mulf %333, %333 : vector<16x32xf32>
    %cst_108 = arith.constant dense<0.000000e+00> : vector<16xf32>
    %335 = vector.multi_reduction <add>, %334, %cst_108 [1] : vector<16x32xf32> to vector<16xf32>
    %336 = vector.shape_cast %335 : vector<16xf32> to vector<16x1xf32>
    %cst_109 = arith.constant 3.200000e+01 : f32
    %337 = vector.broadcast %cst_109 : f32 to vector<16x1xf32>
    %338 = arith.divf %336, %337 : vector<16x1xf32>
    %cst_110 = arith.constant 9.99999974E-6 : f32
    %339 = vector.broadcast %cst_110 : f32 to vector<16x1xf32>
    %340 = arith.addf %338, %339 : vector<16x1xf32>
    %341 = math.rsqrt %340 : vector<16x1xf32>
    %342 = vector.broadcast %341 : vector<16x1xf32> to vector<16x32xf32>
    %343 = arith.mulf %333, %342 : vector<16x32xf32>
    %344 = vector.broadcast %326 : vector<1x32xf32> to vector<16x32xf32>
    %345 = arith.mulf %343, %344 : vector<16x32xf32>
    %346 = vector.broadcast %327 : vector<1x32xf32> to vector<16x32xf32>
    %347 = arith.addf %345, %346 : vector<16x32xf32>
    %c1_111 = arith.constant 1 : index
    %c0_112 = arith.constant 0 : index
    %c0_113 = arith.constant 0 : index
    %348 = vector.load %arg6[%c1_111, %c0_112, %c0_113] : memref<2x32x64xf32, #tpu.memory_space<vmem>>, vector<1x32x64xf32>
    %349 = vector.shape_cast %348 : vector<1x32x64xf32> to vector<32x64xf32>
    %cst_114 = arith.constant dense<0.000000e+00> : vector<16x64xf32>
    %350 = tpu.matmul %347, %349, %cst_114 {dimension_numbers = #tpu.dot_dimension_numbers<[1], [0], [0], [1], [0, 0, 1, 1], [], []>} : vector<16x32xf32>, vector<32x64xf32>, vector<16x64xf32> -> vector<16x64xf32>
    %c22 = arith.constant 22 : index
    %c0_115 = arith.constant 0 : index
    %351 = vector.load %arg2[%c22, %c0_115] : memref<25x64xf32, #tpu.memory_space<vmem>>, vector<1x64xf32>
    %352 = vector.broadcast %351 : vector<1x64xf32> to vector<16x64xf32>
    %353 = arith.addf %350, %352 : vector<16x64xf32>
    %cst_116 = arith.constant 0.000000e+00 : f32
    %354 = vector.broadcast %cst_116 : f32 to vector<16x64xf32>
    %355 = arith.maximumf %353, %354 : vector<16x64xf32>
    %c1_117 = arith.constant 1 : index
    %c0_118 = arith.constant 0 : index
    %c0_119 = arith.constant 0 : index
    %356 = vector.load %arg7[%c1_117, %c0_118, %c0_119] : memref<2x64x32xf32, #tpu.memory_space<vmem>>, vector<1x64x32xf32>
    %357 = vector.shape_cast %356 : vector<1x64x32xf32> to vector<64x32xf32>
    %cst_120 = arith.constant dense<0.000000e+00> : vector<16x32xf32>
    %358 = tpu.matmul %355, %357, %cst_120 {dimension_numbers = #tpu.dot_dimension_numbers<[1], [0], [0], [1], [0, 0, 1, 1], [], []>} : vector<16x64xf32>, vector<64x32xf32>, vector<16x32xf32> -> vector<16x32xf32>
    %c24 = arith.constant 24 : index
    %c0_121 = arith.constant 0 : index
    %359 = vector.load %arg2[%c24, %c0_121] : memref<25x64xf32, #tpu.memory_space<vmem>>, vector<1x32xf32>
    %360 = vector.broadcast %359 : vector<1x32xf32> to vector<16x32xf32>
    %361 = arith.addf %358, %360 : vector<16x32xf32>
    %362 = arith.addf %361, %347 : vector<16x32xf32>
    %c18 = arith.constant 18 : index
    %c0_122 = arith.constant 0 : index
    %363 = vector.load %arg2[%c18, %c0_122] : memref<25x64xf32, #tpu.memory_space<vmem>>, vector<1x32xf32>
    %c20 = arith.constant 20 : index
    %c0_123 = arith.constant 0 : index
    %364 = vector.load %arg2[%c20, %c0_123] : memref<25x64xf32, #tpu.memory_space<vmem>>, vector<1x32xf32>
    %cst_124 = arith.constant dense<0.000000e+00> : vector<16xf32>
    %365 = vector.multi_reduction <add>, %362, %cst_124 [1] : vector<16x32xf32> to vector<16xf32>
    %366 = vector.shape_cast %365 : vector<16xf32> to vector<16x1xf32>
    %cst_125 = arith.constant 3.200000e+01 : f32
    %367 = vector.broadcast %cst_125 : f32 to vector<16x1xf32>
    %368 = arith.divf %366, %367 : vector<16x1xf32>
    %369 = vector.broadcast %368 : vector<16x1xf32> to vector<16x32xf32>
    %370 = arith.subf %362, %369 : vector<16x32xf32>
    %371 = arith.mulf %370, %370 : vector<16x32xf32>
    %cst_126 = arith.constant dense<0.000000e+00> : vector<16xf32>
    %372 = vector.multi_reduction <add>, %371, %cst_126 [1] : vector<16x32xf32> to vector<16xf32>
    %373 = vector.shape_cast %372 : vector<16xf32> to vector<16x1xf32>
    %cst_127 = arith.constant 3.200000e+01 : f32
    %374 = vector.broadcast %cst_127 : f32 to vector<16x1xf32>
    %375 = arith.divf %373, %374 : vector<16x1xf32>
    %cst_128 = arith.constant 9.99999974E-6 : f32
    %376 = vector.broadcast %cst_128 : f32 to vector<16x1xf32>
    %377 = arith.addf %375, %376 : vector<16x1xf32>
    %378 = math.rsqrt %377 : vector<16x1xf32>
    %379 = vector.broadcast %378 : vector<16x1xf32> to vector<16x32xf32>
    %380 = arith.mulf %370, %379 : vector<16x32xf32>
    %381 = vector.broadcast %363 : vector<1x32xf32> to vector<16x32xf32>
    %382 = arith.mulf %380, %381 : vector<16x32xf32>
    %383 = vector.broadcast %364 : vector<1x32xf32> to vector<16x32xf32>
    %384 = arith.addf %382, %383 : vector<16x32xf32>
    %c2 = arith.constant 2 : index
    %c0_129 = arith.constant 0 : index
    %385 = vector.load %arg2[%c2, %c0_129] : memref<25x64xf32, #tpu.memory_space<vmem>>, vector<1x32xf32>
    %c3 = arith.constant 3 : index
    %c0_130 = arith.constant 0 : index
    %386 = vector.load %arg2[%c3, %c0_130] : memref<25x64xf32, #tpu.memory_space<vmem>>, vector<1x32xf32>
    %cst_131 = arith.constant dense<0.000000e+00> : vector<16xf32>
    %387 = vector.multi_reduction <add>, %384, %cst_131 [1] : vector<16x32xf32> to vector<16xf32>
    %388 = vector.shape_cast %387 : vector<16xf32> to vector<16x1xf32>
    %cst_132 = arith.constant 3.200000e+01 : f32
    %389 = vector.broadcast %cst_132 : f32 to vector<16x1xf32>
    %390 = arith.divf %388, %389 : vector<16x1xf32>
    %391 = vector.broadcast %390 : vector<16x1xf32> to vector<16x32xf32>
    %392 = arith.subf %384, %391 : vector<16x32xf32>
    %393 = arith.mulf %392, %392 : vector<16x32xf32>
    %cst_133 = arith.constant dense<0.000000e+00> : vector<16xf32>
    %394 = vector.multi_reduction <add>, %393, %cst_133 [1] : vector<16x32xf32> to vector<16xf32>
    %395 = vector.shape_cast %394 : vector<16xf32> to vector<16x1xf32>
    %cst_134 = arith.constant 3.200000e+01 : f32
    %396 = vector.broadcast %cst_134 : f32 to vector<16x1xf32>
    %397 = arith.divf %395, %396 : vector<16x1xf32>
    %cst_135 = arith.constant 9.99999974E-6 : f32
    %398 = vector.broadcast %cst_135 : f32 to vector<16x1xf32>
    %399 = arith.addf %397, %398 : vector<16x1xf32>
    %400 = math.rsqrt %399 : vector<16x1xf32>
    %401 = vector.broadcast %400 : vector<16x1xf32> to vector<16x32xf32>
    %402 = arith.mulf %392, %401 : vector<16x32xf32>
    %403 = vector.broadcast %385 : vector<1x32xf32> to vector<16x32xf32>
    %404 = arith.mulf %402, %403 : vector<16x32xf32>
    %405 = vector.broadcast %386 : vector<1x32xf32> to vector<16x32xf32>
    %406 = arith.addf %404, %405 : vector<16x32xf32>
    %cst_136 = arith.constant dense<0.000000e+00> : vector<16x64xf32>
    %407 = tpu.matmul %406, %3, %cst_136 {dimension_numbers = #tpu.dot_dimension_numbers<[1], [1], [0], [0], [0, 0, 1, 0], [], []>} : vector<16x32xf32>, vector<64x32xf32>, vector<16x64xf32> -> vector<16x64xf32>
    %c4 = arith.constant 4 : index
    %c0_137 = arith.constant 0 : index
    %408 = vector.load %arg2[%c4, %c0_137] : memref<25x64xf32, #tpu.memory_space<vmem>>, vector<1x64xf32>
    %409 = vector.broadcast %408 : vector<1x64xf32> to vector<16x64xf32>
    %410 = arith.addf %407, %409 : vector<16x64xf32>
    %cst_138 = arith.constant dense<0xFF800000> : vector<16xf32>
    %411 = vector.multi_reduction <maximumf>, %410, %cst_138 [1] : vector<16x64xf32> to vector<16xf32>
    %412 = vector.shape_cast %411 : vector<16xf32> to vector<16x1xf32>
    %413 = vector.broadcast %412 : vector<16x1xf32> to vector<16x64xf32>
    %414 = arith.subf %410, %413 : vector<16x64xf32>
    %415 = math.exp %414 : vector<16x64xf32>
    %cst_139 = arith.constant dense<0.000000e+00> : vector<16xf32>
    %416 = vector.multi_reduction <add>, %415, %cst_139 [1] : vector<16x64xf32> to vector<16xf32>
    %417 = vector.shape_cast %416 : vector<16xf32> to vector<16x1xf32>
    %418 = math.log %417 : vector<16x1xf32>
    %419 = arith.addf %412, %418 : vector<16x1xf32>
    %420 = vector.broadcast %419 : vector<16x1xf32> to vector<16x64xf32>
    %421 = arith.subf %410, %420 : vector<16x64xf32>
    %422 = vector.broadcast %1 : vector<16x1xi32> to vector<16x64xi32>
    %423 = arith.cmpi eq, %2, %422 : vector<16x64xi32>
    %424 = arith.extui %423 : vector<16x64xi1> to vector<16x64xi32>
    %425 = arith.sitofp %424 : vector<16x64xi32> to vector<16x64xf32>
    %426 = arith.mulf %425, %421 : vector<16x64xf32>
    %cst_140 = arith.constant dense<0.000000e+00> : vector<16xf32>
    %427 = vector.multi_reduction <add>, %426, %cst_140 [1] : vector<16x64xf32> to vector<16xf32>
    %428 = vector.shape_cast %427 : vector<16xf32> to vector<16x1xf32>
    %cst_141 = arith.constant 0.000000e+00 : f32
    %429 = vector.broadcast %cst_141 : f32 to vector<16x1xf32>
    %430 = arith.subf %429, %428 : vector<16x1xf32>
    %cst_142 = arith.constant dense<0.000000e+00> : vector<16xf32>
    %431 = vector.multi_reduction <add>, %421, %cst_142 [1] : vector<16x64xf32> to vector<16xf32>
    %432 = vector.shape_cast %431 : vector<16xf32> to vector<16x1xf32>
    %cst_143 = arith.constant 0.000000e+00 : f32
    %433 = vector.broadcast %cst_143 : f32 to vector<16x1xf32>
    %434 = arith.subf %433, %432 : vector<16x1xf32>
    %cst_144 = arith.constant dense<0.000000e+00> : vector<1xf32>
    %435 = vector.multi_reduction <add>, %430, %cst_144 [0] : vector<16x1xf32> to vector<1xf32>
    %436 = vector.shape_cast %435 : vector<1xf32> to vector<1x1xf32>
    %cst_145 = arith.constant dense<0.000000e+00> : vector<1xf32>
    %437 = vector.multi_reduction <add>, %434, %cst_145 [0] : vector<16x1xf32> to vector<1xf32>
    %438 = vector.shape_cast %437 : vector<1xf32> to vector<1x1xf32>
    %cst_146 = arith.constant 0.899999976 : f32
    %439 = vector.broadcast %cst_146 : f32 to vector<1x1xf32>
    %440 = arith.mulf %439, %436 : vector<1x1xf32>
    %cst_147 = arith.constant 0.0016129032 : f32
    %441 = vector.broadcast %cst_147 : f32 to vector<1x1xf32>
    %442 = arith.mulf %441, %438 : vector<1x1xf32>
    %443 = arith.addf %440, %442 : vector<1x1xf32>
    %444 = tpu.concatenate %443, %436 in 1 : vector<1x1xf32>, vector<1x1xf32> -> vector<1x2xf32>
    %c0_148 = arith.constant 0 : index
    %c0_149 = arith.constant 0 : index
    %445 = vector.load %arg8[%c0_148, %c0_149] : memref<1x2xf32, #tpu.memory_space<vmem>>, vector<1x2xf32>
    tpu.vector_store %arg8[%c0_148, %c0_149], %444 {strides = array<i32>} : memref<1x2xf32, #tpu.memory_space<vmem>>, vector<1x2xf32>,
    return
  }
}

</mosaic_0001>

<llo_original>
// kernel: forward.1
$region0: #{forward.1}
  #allocation0 [shape = 'u32[]', space=smem, size = 0x4, offset = 0x4, fixed_abs, tag = 'smem constant byte address 0x4 - core index']
  #allocation1 [shape = 'u32[144,128]{1,0:T(1,128)}', space=vmem, size = 0x12000, scoped, tag = 'internal scratch']
  %s0 = inlined_call_operand.vmem [shape: s32[16,2], index: 0, kind: input, shape index: {}]
  %s1 = inlined_call_operand.vmem [shape: f32[64,32], index: 1, kind: input, shape index: {}]
  %s2 = inlined_call_operand.vmem [shape: f32[25,64], index: 2, kind: input, shape index: {}]
  %s3 = inlined_call_operand.vmem [shape: f32[2,32,96], index: 3, kind: input, shape index: {}]
  %s4 = inlined_call_operand.vmem [shape: f32[2,32,32], index: 4, kind: input, shape index: {}]
  %s5 = inlined_call_operand.vmem [shape: f32[2,32,32], index: 5, kind: input, shape index: {}]
  %s6 = inlined_call_operand.vmem [shape: f32[2,32,64], index: 6, kind: input, shape index: {}]
  %s7 = inlined_call_operand.vmem [shape: f32[2,64,32], index: 7, kind: input, shape index: {}]
  %s8 = inlined_call_operand.vmem [shape: f32[1,2], index: 8, kind: output, shape index: {}]
  %s9 = sld [smem:[#allocation0]]
  $region42: #{forward.1} parent=0
    _
  %s11 = ssub.s32 1, %s9
  %s12 = scalar_select 0, %s11, %s9
  // Predicated region
  $region2: #{forward.1} parent=0 // pred_check
    _
  $region3: #{forward.1} parent=0 // pred_check_branch
    %14 = sbr.rel (0) target = $region5
  $region4: #{forward.1} parent=0 // pred_region
    _
  $region5: #{forward.1} parent=0 // pred_fallthru
    _
  // Predicated region
  $region6: #{forward.1} parent=0 // pred_check
    _
  $region7: #{forward.1} parent=0 // pred_check_branch
    %16 = sbr.rel (0) target = $region9
  $region8: #{forward.1} parent=0 // pred_region
    _
  $region9: #{forward.1} parent=0 // pred_fallthru
    _
  // Predicated region
  $region10: #{forward.1} parent=0 // pred_check
    _
  $region11: #{forward.1} parent=0 // pred_check_branch
    %18 = sbr.rel (0) target = $region13
  $region12: #{forward.1} parent=0 // pred_region
    _
  $region13: #{forward.1} parent=0 // pred_fallthru
    _
  // Predicated region
  $region14: #{forward.1} parent=0 // pred_check
    _
  $region15: #{forward.1} parent=0 // pred_check_branch
    %20 = sbr.rel (0) target = $region17
  $region16: #{forward.1} parent=0 // pred_region
    _
  $region17: #{forward.1} parent=0 // pred_fallthru
    _
  // Predicated region
  $region18: #{forward.1} parent=0 // pred_check
    _
  $region19: #{forward.1} parent=0 // pred_check_branch
    %22 = sbr.rel (0) target = $region21
  $region20: #{forward.1} parent=0 // pred_region
    _
  $region21: #{forward.1} parent=0 // pred_fallthru
    _
  // Predicated region
  $region22: #{forward.1} parent=0 // pred_check
    _
  $region23: #{forward.1} parent=0 // pred_check_branch
    %24 = sbr.rel (0) target = $region25
  $region24: #{forward.1} parent=0 // pred_region
    _
  $region25: #{forward.1} parent=0 // pred_fallthru
    _
  // Predicated region
  $region26: #{forward.1} parent=0 // pred_check
    _
  $region27: #{forward.1} parent=0 // pred_check_branch
    %26 = sbr.rel (0) target = $region29
  $region28: #{forward.1} parent=0 // pred_region
    _
  $region29: #{forward.1} parent=0 // pred_fallthru
    _
  // Predicated region
  $region30: #{forward.1} parent=0 // pred_check
    _
  $region31: #{forward.1} parent=0 // pred_check_branch
    %28 = sbr.rel (0) target = $region33
  $region32: #{forward.1} parent=0 // pred_region
    _
  $region33: #{forward.1} parent=0 // pred_fallthru
    _
  %v29 = vld [vmem:[%s0] sm:$0xff]
  %v30 = vld [vmem:[%s0 + $0x8] sm:$0xff]
  %v31 = vlaneseq
  %v32 = vand.u32 %v31, 127
  %v33 = vld [vmem:[%s1] sm:$0xff]
  %v34 = vld [vmem:[%s1 + $0x8] sm:$0xff]
  %v35 = vld [vmem:[%s1 + $0x10] sm:$0xff]
  %v36 = vld [vmem:[%s1 + $0x18] sm:$0xff]
  %v37 = vld [vmem:[%s1 + $0x20] sm:$0xff]
  %v38 = vld [vmem:[%s1 + $0x28] sm:$0xff]
  %v39 = vld [vmem:[%s1 + $0x30] sm:$0xff]
  %v40 = vld [vmem:[%s1 + $0x38] sm:$0xff]
  %41 = vset.pattern.permute.xlu0 0
  %42 = vperm.xlu0 %41, %v29
  %v43 = vpop.permute.xlu0 %42
  %44 = vset.pattern.permute.xlu0 0
  %45 = vperm.xlu0 %44, %v30
  %v46 = vpop.permute.xlu0 %45
  %vm47 = vcmp.eq.s32.totalorder %v32, %v43
  %vm48 = vcmp.eq.s32.totalorder %v32, %v46
  %v49 = vsel %vm47, 1, 0
  %v50 = vsel %vm48, 1, 0
  %v51 = vcvt.s32.f32 %v49
  %v52 = vcvt.s32.f32 %v50
  %vm53 = vcmask 523264
  %v55 = vsel %vm53, %v51, 0
  %v58 = vsel %vm53, %v52, 0
  %60 = vmatprep.subr.mxu0 0.0
  %61 = vmatpush1.msra.mxu0 %v33
  %62 = vmatprep.subr.mxu0 0.0
  %63 = vmatpush1.msra.mxu0 %v34
  %64 = vmatprep.subr.mxu0 0.0
  %65 = vmatpush1.msra.mxu0 %v35
  %66 = vmatprep.subr.mxu0 0.0
  %67 = vmatpush1.msra.mxu0 %v36
  %68 = vmatprep.subr.mxu0 0.0
  %69 = vmatpush1.msra.mxu0 %v37
  %70 = vmatprep.subr.mxu0 0.0
  %71 = vmatpush1.msra.mxu0 %v38
  %72 = vmatprep.subr.mxu0 0.0
  %73 = vmatpush1.msra.mxu0 %v39
  %74 = vmatprep.subr.mxu0 0.0
  %75 = vmatpush1.msra.mxu0 %v40
  %76 = vmatprep.subr.mxu0 0.0
  %77 = vmatpush1.msra.mxu0 0.0
  %78 = vmatprep.subr.mxu0 0.0
  %79 = vmatpush1.msra.mxu0 0.0
  %80 = vmatprep.subr.mxu0 0.0
  %81 = vmatpush1.msra.mxu0 0.0
  %82 = vmatprep.subr.mxu0 0.0
  %83 = vmatpush1.msra.mxu0 0.0
  %84 = vmatprep.subr.mxu0 0.0
  %85 = vmatpush1.msra.mxu0 0.0
  %86 = vmatprep.subr.mxu0 0.0
  %87 = vmatpush1.msra.mxu0 0.0
  %88 = vmatprep.subr.mxu0 0.0
  %89 = vmatpush1.msra.mxu0 0.0
  %90 = vmatprep.subr.mxu0 0.0
  %91 = vmatpush1.msra.mxu0 0.0
  %92 = vmatprep.subr.mxu0 0.0
  %93 = vmatpush1.msra.mxu0 0.0
  %94 = vmatprep.subr.mxu0 0.0
  %95 = vmatpush1.msra.mxu0 0.0
  %96 = vmatprep.subr.mxu0 0.0
  %97 = vmatpush1.msra.mxu0 0.0
  %98 = vmatprep.subr.mxu0 0.0
  %99 = vmatpush1.msra.mxu0 0.0
  %100 = vmatprep.subr.mxu0 0.0
  %101 = vmatpush1.msra.mxu0 0.0
  %102 = vmatprep.subr.mxu0 0.0
  %103 = vmatpush1.msra.mxu0 0.0
  %104 = vmatprep.subr.mxu0 0.0
  %105 = vmatpush1.msra.mxu0 0.0
  %106 = vmatprep.subr.mxu0 0.0
  %107 = vmatpush1.msra.mxu0 0.0
  %108 = vmatprep.subr.mxu0 0.0
  %109 = vmatpush1.msra.mxu0 0.0
  %110 = vmatprep.subr.mxu0 0.0
  %111 = vmatpush1.msra.mxu0 0.0
  %112 = vmatprep.subr.mxu0 0.0
  %113 = vmatpush1.msra.mxu0 0.0
  %114 = vmatprep.subr.mxu0 0.0
  %115 = vmatpush1.msra.mxu0 0.0
  %116 = vmatprep.subr.mxu0 0.0
  %117 = vmatpush1.msra.mxu0 0.0
  %118 = vmatprep.subr.mxu0 0.0
  %119 = vmatpush1.msra.mxu0 0.0
  %120 = vmatprep.subr.mxu0 0.0
  %121 = vmatpush1.msra.mxu0 0.0
  %122 = vmatprep.subr.mxu0 0.0
  %123 = vmatpush1.msra.mxu0 0.0
  %124 = vmatprep.mubr.f32.mxu0 0.0
  %125 = vmatmul.mubr.f32.gmra.mrb[0].mxu0 %v55
  %v126 = vpop.f32.mrb[0].mxu0
  %v127 = vadd.f32 0.0, %v126
  %v128 = vpop.f32.mrb[0].mxu0
  %129 = vmatprep.mubr.f32.mxu0 0.0
  %130 = vmatmul.mubr.f32.gmra.mrb[0].mxu0 %v58
  %v131 = vpop.f32.mrb[0].mxu0
  %v132 = vadd.f32 0.0, %v131
  %v133 = vpop.f32.mrb[0].mxu0
  %134 = vdwg.mxu0
  %v135 = vmul.f32 %v127, 5.656854
  %v136 = vmul.f32 %v132, 5.656854
  %v137 = vlaneseq
  %v138 = vshrl.u32 %v137, 7
  %v139 = vsub.s32 %v32, %v138
  %vm140 = vcmp.gt.s32.totalorder %v32, %v138
  %v141 = vsel %vm140, -1e+30, 0.0
  %v142 = vld [vmem:[%s2 + $0x5] sm:$0xff]
  %v143 = vld [vmem:[%s2] sm:$0x1]
  %v144 = vld [vmem:[%s2 + $0x1] sm:$0x1]
  %v145 = vld [vmem:[%s3] sm:$0xff]
  %v146 = vld [vmem:[%s3 + $0x8] sm:$0xff]
  %v147 = vld [vmem:[%s3 + $0x10] sm:$0xff]
  %v148 = vld [vmem:[%s3 + $0x18] sm:$0xff]
  %vm149 = vcmask 261120
  %v151 = vsel %vm149, %v135, 0
  %v154 = vsel %vm149, %v136, 0
  %156 = vmatprep.subr.mxu0 0.0
  %157 = vmatpush1.msra.mxu0 %v145
  %158 = vmatprep.subr.mxu0 0.0
  %159 = vmatpush1.msra.mxu0 %v146
  %160 = vmatprep.subr.mxu0 0.0
  %161 = vmatpush1.msra.mxu0 %v147
  %162 = vmatprep.subr.mxu0 0.0
  %163 = vmatpush1.msra.mxu0 %v148
  %164 = vmatprep.subr.mxu0 0.0
  %165 = vmatpush1.msra.mxu0 0.0
  %166 = vmatprep.subr.mxu0 0.0
  %167 = vmatpush1.msra.mxu0 0.0
  %168 = vmatprep.subr.mxu0 0.0
  %169 = vmatpush1.msra.mxu0 0.0
  %170 = vmatprep.subr.mxu0 0.0
  %171 = vmatpush1.msra.mxu0 0.0
  %172 = vmatprep.subr.mxu0 0.0
  %173 = vmatpush1.msra.mxu0 0.0
  %174 = vmatprep.subr.mxu0 0.0
  %175 = vmatpush1.msra.mxu0 0.0
  %176 = vmatprep.subr.mxu0 0.0
  %177 = vmatpush1.msra.mxu0 0.0
  %178 = vmatprep.subr.mxu0 0.0
  %179 = vmatpush1.msra.mxu0 0.0
  %180 = vmatprep.subr.mxu0 0.0
  %181 = vmatpush1.msra.mxu0 0.0
  %182 = vmatprep.subr.mxu0 0.0
  %183 = vmatpush1.msra.mxu0 0.0
  %184 = vmatprep.subr.mxu0 0.0
  %185 = vmatpush1.msra.mxu0 0.0
  %186 = vmatprep.subr.mxu0 0.0
  %187 = vmatpush1.msra.mxu0 0.0
  %188 = vmatprep.subr.mxu0 0.0
  %189 = vmatpush1.msra.mxu0 0.0
  %190 = vmatprep.subr.mxu0 0.0
  %191 = vmatpush1.msra.mxu0 0.0
  %192 = vmatprep.subr.mxu0 0.0
  %193 = vmatpush1.msra.mxu0 0.0
  %194 = vmatprep.subr.mxu0 0.0
  %195 = vmatpush1.msra.mxu0 0.0
  %196 = vmatprep.subr.mxu0 0.0
  %197 = vmatpush1.msra.mxu0 0.0
  %198 = vmatprep.subr.mxu0 0.0
  %199 = vmatpush1.msra.mxu0 0.0
  %200 = vmatprep.subr.mxu0 0.0
  %201 = vmatpush1.msra.mxu0 0.0
  %202 = vmatprep.subr.mxu0 0.0
  %203 = vmatpush1.msra.mxu0 0.0
  %204 = vmatprep.subr.mxu0 0.0
  %205 = vmatpush1.msra.mxu0 0.0
  %206 = vmatprep.subr.mxu0 0.0
  %207 = vmatpush1.msra.mxu0 0.0
  %208 = vmatprep.subr.mxu0 0.0
  %209 = vmatpush1.msra.mxu0 0.0
  %210 = vmatprep.subr.mxu0 0.0
  %211 = vmatpush1.msra.mxu0 0.0
  %212 = vmatprep.subr.mxu0 0.0
  %213 = vmatpush1.msra.mxu0 0.0
  %214 = vmatprep.subr.mxu0 0.0
  %215 = vmatpush1.msra.mxu0 0.0
  %216 = vmatprep.subr.mxu0 0.0
  %217 = vmatpush1.msra.mxu0 0.0
  %218 = vmatprep.subr.mxu0 0.0
  %219 = vmatpush1.msra.mxu0 0.0
  %220 = vmatprep.mubr.f32.mxu0 0.0
  %221 = vmatmul.mubr.f32.gmra.mrb[0].mxu0 %v151
  %v222 = vpop.f32.mrb[0].mxu0
  %v223 = vadd.f32 0.0, %v222
  %v224 = vpop.f32.mrb[0].mxu0
  %225 = vmatprep.mubr.f32.mxu0 0.0
  %226 = vmatmul.mubr.f32.gmra.mrb[0].mxu0 %v154
  %v227 = vpop.f32.mrb[0].mxu0
  %v228 = vadd.f32 0.0, %v227
  %v229 = vpop.f32.mrb[0].mxu0
  %230 = vdwg.mxu0
  %v231 = vld [vmem:[%s4] sm:$0xff]
  %v232 = vld [vmem:[%s4 + $0x8] sm:$0xff]
  %v233 = vld [vmem:[%s4 + $0x10] sm:$0xff]
  %v234 = vld [vmem:[%s4 + $0x18] sm:$0xff]
  %v236 = vsel %vm149, %v142, 0
  %238 = vmatprep.subr.mxu0 0.0
  %239 = vmatpush1.msra.mxu0 %v231
  %240 = vmatprep.subr.mxu0 0.0
  %241 = vmatpush1.msra.mxu0 %v232
  %242 = vmatprep.subr.mxu0 0.0
  %243 = vmatpush1.msra.mxu0 %v233
  %244 = vmatprep.subr.mxu0 0.0
  %245 = vmatpush1.msra.mxu0 %v234
  %246 = vmatprep.subr.mxu0 0.0
  %247 = vmatpush1.msra.mxu0 0.0
  %248 = vmatprep.subr.mxu0 0.0
  %249 = vmatpush1.msra.mxu0 0.0
  %250 = vmatprep.subr.mxu0 0.0
  %251 = vmatpush1.msra.mxu0 0.0
  %252 = vmatprep.subr.mxu0 0.0
  %253 = vmatpush1.msra.mxu0 0.0
  %254 = vmatprep.subr.mxu0 0.0
  %255 = vmatpush1.msra.mxu0 0.0
  %256 = vmatprep.subr.mxu0 0.0
  %257 = vmatpush1.msra.mxu0 0.0
  %258 = vmatprep.subr.mxu0 0.0
  %259 = vmatpush1.msra.mxu0 0.0
  %260 = vmatprep.subr.mxu0 0.0
  %261 = vmatpush1.msra.mxu0 0.0
  %262 = vmatprep.subr.mxu0 0.0
  %263 = vmatpush1.msra.mxu0 0.0
  %264 = vmatprep.subr.mxu0 0.0
  %265 = vmatpush1.msra.mxu0 0.0
  %266 = vmatprep.subr.mxu0 0.0
  %267 = vmatpush1.msra.mxu0 0.0
  %268 = vmatprep.subr.mxu0 0.0
  %269 = vmatpush1.msra.mxu0 0.0
  %270 = vmatprep.subr.mxu0 0.0
  %271 = vmatpush1.msra.mxu0 0.0
  %272 = vmatprep.subr.mxu0 0.0
  %273 = vmatpush1.msra.mxu0 0.0
  %274 = vmatprep.subr.mxu0 0.0
  %275 = vmatpush1.msra.mxu0 0.0
  %276 = vmatprep.subr.mxu0 0.0
  %277 = vmatpush1.msra.mxu0 0.0
  %278 = vmatprep.subr.mxu0 0.0
  %279 = vmatpush1.msra.mxu0 0.0
  %280 = vmatprep.subr.mxu0 0.0
  %281 = vmatpush1.msra.mxu0 0.0
  %282 = vmatprep.subr.mxu0 0.0
  %283 = vmatpush1.msra.mxu0 0.0
  %284 = vmatprep.subr.mxu0 0.0
  %285 = vmatpush1.msra.mxu0 0.0
  %286 = vmatprep.subr.mxu0 0.0
  %287 = vmatpush1.msra.mxu0 0.0
  %288 = vmatprep.subr.mxu0 0.0
  %289 = vmatpush1.msra.mxu0 0.0
  %290 = vmatprep.subr.mxu0 0.0
  %291 = vmatpush1.msra.mxu0 0.0
  %292 = vmatprep.subr.mxu0 0.0
  %293 = vmatpush1.msra.mxu0 0.0
  %294 = vmatprep.subr.mxu0 0.0
  %295 = vmatpush1.msra.mxu0 0.0
  %296 = vmatprep.subr.mxu0 0.0
  %297 = vmatpush1.msra.mxu0 0.0
  %298 = vmatprep.subr.mxu0 0.0
  %299 = vmatpush1.msra.mxu0 0.0
  %300 = vmatprep.subr.mxu0 0.0
  %301 = vmatpush1.msra.mxu0 0.0
  %302 = vmatprep.mubr.f32.mxu0 0.0
  %303 = vmatmul.mubr.f32.gmra.mrb[0].mxu0 %v236
  %v304 = vpop.f32.mrb[0].mxu0
  %v305 = vadd.f32 0.0, %v304
  %v306 = vpop.f32.mrb[0].mxu0
  %307 = vdwg.mxu0
  %v308 = vlaneseq
  %v309 = vshrl.u32 %v308, 7
  %v310 = vsub.s32 0, %v309
  %v311 = vrot.slane %v143, %v310
  %v312 = vadd.f32 %v223, %v311
  %v313 = vadd.f32 %v228, %v311
  %v314 = vmul.f32 %v312, 0.25
  %v315 = vmul.f32 %v313, 0.25
  %v316 = vlaneseq
  %v317 = vshrl.u32 %v316, 7
  %v318 = vsub.s32 0, %v317
  %v319 = vrot.slane %v144, %v318
  %v320 = vadd.f32 %v223, %v319
  %v321 = vadd.f32 %v228, %v319
  %v322 = vmul.f32 %v320, 0.25
  %v323 = vmul.f32 %v321, 0.25
  %325 = vrot.lane.b32.xlu0 %v223, 96
  %v326 = vpop.permute.xlu0 %325
  %vm327 = vcmask 130048
  %v329 = vsel %vm327, %v314, 0
  %v331 = vsel %vm327, %v326, 0
  %333 = vmatprep.subr.mxu0 0.0
  %334 = vmatpush1.xpose.msra.mxu0 %v331
  %335 = vmatprep.subr.mxu0 0.0
  %336 = vmatpush1.xpose.msra.mxu0 0.0
  %337 = vmatprep.subr.mxu0 0.0
  %338 = vmatpush1.xpose.msra.mxu0 0.0
  %339 = vmatprep.subr.mxu0 0.0
  %340 = vmatpush1.xpose.msra.mxu0 0.0
  %341 = vmatprep.subr.mxu0 0.0
  %342 = vmatpush1.xpose.msra.mxu0 0.0
  %343 = vmatprep.subr.mxu0 0.0
  %344 = vmatpush1.xpose.msra.mxu0 0.0
  %345 = vmatprep.subr.mxu0 0.0
  %346 = vmatpush1.xpose.msra.mxu0 0.0
  %347 = vmatprep.subr.mxu0 0.0
  %348 = vmatpush1.xpose.msra.mxu0 0.0
  %349 = vmatprep.subr.mxu0 0.0
  %350 = vmatpush1.xpose.msra.mxu0 0.0
  %351 = vmatprep.subr.mxu0 0.0
  %352 = vmatpush1.xpose.msra.mxu0 0.0
  %353 = vmatprep.subr.mxu0 0.0
  %354 = vmatpush1.xpose.msra.mxu0 0.0
  %355 = vmatprep.subr.mxu0 0.0
  %356 = vmatpush1.xpose.msra.mxu0 0.0
  %357 = vmatprep.subr.mxu0 0.0
  %358 = vmatpush1.xpose.msra.mxu0 0.0
  %359 = vmatprep.subr.mxu0 0.0
  %360 = vmatpush1.xpose.msra.mxu0 0.0
  %361 = vmatprep.subr.mxu0 0.0
  %362 = vmatpush1.xpose.msra.mxu0 0.0
  %363 = vmatprep.subr.mxu0 0.0
  %364 = vmatpush1.xpose.msra.mxu0 0.0
  %365 = vmatprep.subr.mxu0 0.0
  %366 = vmatpush1.xpose.msra.mxu0 0.0
  %367 = vmatprep.subr.mxu0 0.0
  %368 = vmatpush1.xpose.msra.mxu0 0.0
  %369 = vmatprep.subr.mxu0 0.0
  %370 = vmatpush1.xpose.msra.mxu0 0.0
  %371 = vmatprep.subr.mxu0 0.0
  %372 = vmatpush1.xpose.msra.mxu0 0.0
  %373 = vmatprep.subr.mxu0 0.0
  %374 = vmatpush1.xpose.msra.mxu0 0.0
  %375 = vmatprep.subr.mxu0 0.0
  %376 = vmatpush1.xpose.msra.mxu0 0.0
  %377 = vmatprep.subr.mxu0 0.0
  %378 = vmatpush1.xpose.msra.mxu0 0.0
  %379 = vmatprep.subr.mxu0 0.0
  %380 = vmatpush1.xpose.msra.mxu0 0.0
  %381 = vmatprep.subr.mxu0 0.0
  %382 = vmatpush1.xpose.msra.mxu0 0.0
  %383 = vmatprep.subr.mxu0 0.0
  %384 = vmatpush1.xpose.msra.mxu0 0.0
  %385 = vmatprep.subr.mxu0 0.0
  %386 = vmatpush1.xpose.msra.mxu0 0.0
  %387 = vmatprep.subr.mxu0 0.0
  %388 = vmatpush1.xpose.msra.mxu0 0.0
  %389 = vmatprep.subr.mxu0 0.0
  %390 = vmatpush1.xpose.msra.mxu0 0.0
  %391 = vmatprep.subr.mxu0 0.0
  %392 = vmatpush1.xpose.msra.mxu0 0.0
  %393 = vmatprep.subr.mxu0 0.0
  %394 = vmatpush1.xpose.msra.mxu0 0.0
  %395 = vmatprep.subr.mxu0 0.0
  %396 = vmatpush1.xpose.msra.mxu0 0.0
  %397 = vmatprep.mubr.f32.mxu0 0.0
  %398 = vmatmul.mubr.f32.gmra.mrb[0].mxu0 %v329
  %v399 = vpop.f32.mrb[0].mxu0
  %v400 = vadd.f32 0.0, %v399
  %v401 = vpop.f32.mrb[0].mxu0
  %402 = vdwg.mxu0
  %v404 = vsel %vm327, %v322, 0
  %v407 = vsel %vm327, %v305, 0
  %409 = vmatprep.subr.mxu0 0.0
  %410 = vmatpush1.xpose.msra.mxu0 %v407
  %411 = vmatprep.subr.mxu0 0.0
  %412 = vmatpush1.xpose.msra.mxu0 0.0
  %413 = vmatprep.subr.mxu0 0.0
  %414 = vmatpush1.xpose.msra.mxu0 0.0
  %415 = vmatprep.subr.mxu0 0.0
  %416 = vmatpush1.xpose.msra.mxu0 0.0
  %417 = vmatprep.subr.mxu0 0.0
  %418 = vmatpush1.xpose.msra.mxu0 0.0
  %419 = vmatprep.subr.mxu0 0.0
  %420 = vmatpush1.xpose.msra.mxu0 0.0
  %421 = vmatprep.subr.mxu0 0.0
  %422 = vmatpush1.xpose.msra.mxu0 0.0
  %423 = vmatprep.subr.mxu0 0.0
  %424 = vmatpush1.xpose.msra.mxu0 0.0
  %425 = vmatprep.subr.mxu0 0.0
  %426 = vmatpush1.xpose.msra.mxu0 0.0
  %427 = vmatprep.subr.mxu0 0.0
  %428 = vmatpush1.xpose.msra.mxu0 0.0
  %429 = vmatprep.subr.mxu0 0.0
  %430 = vmatpush1.xpose.msra.mxu0 0.0
  %431 = vmatprep.subr.mxu0 0.0
  %432 = vmatpush1.xpose.msra.mxu0 0.0
  %433 = vmatprep.subr.mxu0 0.0
  %434 = vmatpush1.xpose.msra.mxu0 0.0
  %435 = vmatprep.subr.mxu0 0.0
  %436 = vmatpush1.xpose.msra.mxu0 0.0
  %437 = vmatprep.subr.mxu0 0.0
  %438 = vmatpush1.xpose.msra.mxu0 0.0
  %439 = vmatprep.subr.mxu0 0.0
  %440 = vmatpush1.xpose.msra.mxu0 0.0
  %441 = vmatprep.subr.mxu0 0.0
  %442 = vmatpush1.xpose.msra.mxu0 0.0
  %443 = vmatprep.subr.mxu0 0.0
  %444 = vmatpush1.xpose.msra.mxu0 0.0
  %445 = vmatprep.subr.mxu0 0.0
  %446 = vmatpush1.xpose.msra.mxu0 0.0
  %447 = vmatprep.subr.mxu0 0.0
  %448 = vmatpush1.xpose.msra.mxu0 0.0
  %449 = vmatprep.subr.mxu0 0.0
  %450 = vmatpush1.xpose.msra.mxu0 0.0
  %451 = vmatprep.subr.mxu0 0.0
  %452 = vmatpush1.xpose.msra.mxu0 0.0
  %453 = vmatprep.subr.mxu0 0.0
  %454 = vmatpush1.xpose.msra.mxu0 0.0
  %455 = vmatprep.subr.mxu0 0.0
  %456 = vmatpush1.xpose.msra.mxu0 0.0
  %457 = vmatprep.subr.mxu0 0.0
  %458 = vmatpush1.xpose.msra.mxu0 0.0
  %459 = vmatprep.subr.mxu0 0.0
  %460 = vmatpush1.xpose.msra.mxu0 0.0
  %461 = vmatprep.subr.mxu0 0.0
  %462 = vmatpush1.xpose.msra.mxu0 0.0
  %463 = vmatprep.subr.mxu0 0.0
  %464 = vmatpush1.xpose.msra.mxu0 0.0
  %465 = vmatprep.subr.mxu0 0.0
  %466 = vmatpush1.xpose.msra.mxu0 0.0
  %467 = vmatprep.subr.mxu0 0.0
  %468 = vmatpush1.xpose.msra.mxu0 0.0
  %469 = vmatprep.subr.mxu0 0.0
  %470 = vmatpush1.xpose.msra.mxu0 0.0
  %471 = vmatprep.subr.mxu0 0.0
  %472 = vmatpush1.xpose.msra.mxu0 0.0
  %473 = vmatprep.mubr.f32.mxu0 0.0
  %474 = vmatmul.mubr.f32.gmra.mrb[0].mxu0 %v404
  %v475 = vpop.f32.mrb[0].mxu0
  %v476 = vadd.f32 0.0, %v475
  %v477 = vpop.f32.mrb[0].mxu0
  %478 = vdwg.mxu0
  %479 = vrot.lane.b32.xlu0 %v314, 112
  %v480 = vpop.permute.xlu0 %479
  %481 = vrot.lane.b32.xlu0 %v223, 80
  %v482 = vpop.permute.xlu0 %481
  %v483 = vsel %vm327, %v480, 0
  %v485 = vsel %vm327, %v482, 0
  %487 = vmatprep.subr.mxu0 0.0
  %488 = vmatpush1.xpose.msra.mxu0 %v485
  %489 = vmatprep.subr.mxu0 0.0
  %490 = vmatpush1.xpose.msra.mxu0 0.0
  %491 = vmatprep.subr.mxu0 0.0
  %492 = vmatpush1.xpose.msra.mxu0 0.0
  %493 = vmatprep.subr.mxu0 0.0
  %494 = vmatpush1.xpose.msra.mxu0 0.0
  %495 = vmatprep.subr.mxu0 0.0
  %496 = vmatpush1.xpose.msra.mxu0 0.0
  %497 = vmatprep.subr.mxu0 0.0
  %498 = vmatpush1.xpose.msra.mxu0 0.0
  %499 = vmatprep.subr.mxu0 0.0
  %500 = vmatpush1.xpose.msra.mxu0 0.0
  %501 = vmatprep.subr.mxu0 0.0
  %502 = vmatpush1.xpose.msra.mxu0 0.0
  %503 = vmatprep.subr.mxu0 0.0
  %504 = vmatpush1.xpose.msra.mxu0 0.0
  %505 = vmatprep.subr.mxu0 0.0
  %506 = vmatpush1.xpose.msra.mxu0 0.0
  %507 = vmatprep.subr.mxu0 0.0
  %508 = vmatpush1.xpose.msra.mxu0 0.0
  %509 = vmatprep.subr.mxu0 0.0
  %510 = vmatpush1.xpose.msra.mxu0 0.0
  %511 = vmatprep.subr.mxu0 0.0
  %512 = vmatpush1.xpose.msra.mxu0 0.0
  %513 = vmatprep.subr.mxu0 0.0
  %514 = vmatpush1.xpose.msra.mxu0 0.0
  %515 = vmatprep.subr.mxu0 0.0
  %516 = vmatpush1.xpose.msra.mxu0 0.0
  %517 = vmatprep.subr.mxu0 0.0
  %518 = vmatpush1.xpose.msra.mxu0 0.0
  %519 = vmatprep.subr.mxu0 0.0
  %520 = vmatpush1.xpose.msra.mxu0 0.0
  %521 = vmatprep.subr.mxu0 0.0
  %522 = vmatpush1.xpose.msra.mxu0 0.0
  %523 = vmatprep.subr.mxu0 0.0
  %524 = vmatpush1.xpose.msra.mxu0 0.0
  %525 = vmatprep.subr.mxu0 0.0
  %526 = vmatpush1.xpose.msra.mxu0 0.0
  %527 = vmatprep.subr.mxu0 0.0
  %528 = vmatpush1.xpose.msra.mxu0 0.0
  %529 = vmatprep.subr.mxu0 0.0
  %530 = vmatpush1.xpose.msra.mxu0 0.0
  %531 = vmatprep.subr.mxu0 0.0
  %532 = vmatpush1.xpose.msra.mxu0 0.0
  %533 = vmatprep.subr.mxu0 0.0
  %534 = vmatpush1.xpose.msra.mxu0 0.0
  %535 = vmatprep.subr.mxu0 0.0
  %536 = vmatpush1.xpose.msra.mxu0 0.0
  %537 = vmatprep.subr.mxu0 0.0
  %538 = vmatpush1.xpose.msra.mxu0 0.0
  %539 = vmatprep.subr.mxu0 0.0
  %540 = vmatpush1.xpose.msra.mxu0 0.0
  %541 = vmatprep.subr.mxu0 0.0
  %542 = vmatpush1.xpose.msra.mxu0 0.0
  %543 = vmatprep.subr.mxu0 0.0
  %544 = vmatpush1.xpose.msra.mxu0 0.0
  %545 = vmatprep.subr.mxu0 0.0
  %546 = vmatpush1.xpose.msra.mxu0 0.0
  %547 = vmatprep.subr.mxu0 0.0
  %548 = vmatpush1.xpose.msra.mxu0 0.0
  %549 = vmatprep.subr.mxu0 0.0
  %550 = vmatpush1.xpose.msra.mxu0 0.0
  %551 = vmatprep.mubr.f32.mxu0 0.0
  %552 = vmatmul.mubr.f32.gmra.mrb[0].mxu0 %v483
  %v553 = vpop.f32.mrb[0].mxu0
  %v554 = vadd.f32 0.0, %v553
  %v555 = vpop.f32.mrb[0].mxu0
  %556 = vdwg.mxu0
  %557 = vrot.lane.b32.xlu0 %v322, 112
  %v558 = vpop.permute.xlu0 %557
  %559 = vrot.lane.b32.xlu0 %v305, 112
  %v560 = vpop.permute.xlu0 %559
  %v561 = vsel %vm327, %v558, 0
  %v563 = vsel %vm327, %v560, 0
  %565 = vmatprep.subr.mxu0 0.0
  %566 = vmatpush1.xpose.msra.mxu0 %v563
  %567 = vmatprep.subr.mxu0 0.0
  %568 = vmatpush1.xpose.msra.mxu0 0.0
  %569 = vmatprep.subr.mxu0 0.0
  %570 = vmatpush1.xpose.msra.mxu0 0.0
  %571 = vmatprep.subr.mxu0 0.0
  %572 = vmatpush1.xpose.msra.mxu0 0.0
  %573 = vmatprep.subr.mxu0 0.0
  %574 = vmatpush1.xpose.msra.mxu0 0.0
  %575 = vmatprep.subr.mxu0 0.0
  %576 = vmatpush1.xpose.msra.mxu0 0.0
  %577 = vmatprep.subr.mxu0 0.0
  %578 = vmatpush1.xpose.msra.mxu0 0.0
  %579 = vmatprep.subr.mxu0 0.0
  %580 = vmatpush1.xpose.msra.mxu0 0.0
  %581 = vmatprep.subr.mxu0 0.0
  %582 = vmatpush1.xpose.msra.mxu0 0.0
  %583 = vmatprep.subr.mxu0 0.0
  %584 = vmatpush1.xpose.msra.mxu0 0.0
  %585 = vmatprep.subr.mxu0 0.0
  %586 = vmatpush1.xpose.msra.mxu0 0.0
  %587 = vmatprep.subr.mxu0 0.0
  %588 = vmatpush1.xpose.msra.mxu0 0.0
  %589 = vmatprep.subr.mxu0 0.0
  %590 = vmatpush1.xpose.msra.mxu0 0.0
  %591 = vmatprep.subr.mxu0 0.0
  %592 = vmatpush1.xpose.msra.mxu0 0.0
  %593 = vmatprep.subr.mxu0 0.0
  %594 = vmatpush1.xpose.msra.mxu0 0.0
  %595 = vmatprep.subr.mxu0 0.0
  %596 = vmatpush1.xpose.msra.mxu0 0.0
  %597 = vmatprep.subr.mxu0 0.0
  %598 = vmatpush1.xpose.msra.mxu0 0.0
  %599 = vmatprep.subr.mxu0 0.0
  %600 = vmatpush1.xpose.msra.mxu0 0.0
  %601 = vmatprep.subr.mxu0 0.0
  %602 = vmatpush1.xpose.msra.mxu0 0.0
  %603 = vmatprep.subr.mxu0 0.0
  %604 = vmatpush1.xpose.msra.mxu0 0.0
  %605 = vmatprep.subr.mxu0 0.0
  %606 = vmatpush1.xpose.msra.mxu0 0.0
  %607 = vmatprep.subr.mxu0 0.0
  %608 = vmatpush1.xpose.msra.mxu0 0.0
  %609 = vmatprep.subr.mxu0 0.0
  %610 = vmatpush1.xpose.msra.mxu0 0.0
  %611 = vmatprep.subr.mxu0 0.0
  %612 = vmatpush1.xpose.msra.mxu0 0.0
  %613 = vmatprep.subr.mxu0 0.0
  %614 = vmatpush1.xpose.msra.mxu0 0.0
  %615 = vmatprep.subr.mxu0 0.0
  %616 = vmatpush1.xpose.msra.mxu0 0.0
  %617 = vmatprep.subr.mxu0 0.0
  %618 = vmatpush1.xpose.msra.mxu0 0.0
  %619 = vmatprep.subr.mxu0 0.0
  %620 = vmatpush1.xpose.msra.mxu0 0.0
  %621 = vmatprep.subr.mxu0 0.0
  %622 = vmatpush1.xpose.msra.mxu0 0.0
  %623 = vmatprep.subr.mxu0 0.0
  %624 = vmatpush1.xpose.msra.mxu0 0.0
  %625 = vmatprep.subr.mxu0 0.0
  %626 = vmatpush1.xpose.msra.mxu0 0.0
  %627 = vmatprep.subr.mxu0 0.0
  %628 = vmatpush1.xpose.msra.mxu0 0.0
  %629 = vmatprep.mubr.f32.mxu0 0.0
  %630 = vmatmul.mubr.f32.gmra.mrb[0].mxu0 %v561
  %v631 = vpop.f32.mrb[0].mxu0
  %v632 = vadd.f32 0.0, %v631
  %v633 = vpop.f32.mrb[0].mxu0
  %634 = vdwg.mxu0
  %636 = vrot.lane.b32.xlu0 %v228, 96
  %v637 = vpop.permute.xlu0 %636
  %v639 = vsel %vm327, %v315, 0
  %v641 = vsel %vm327, %v637, 0
  %643 = vmatprep.subr.mxu0 0.0
  %644 = vmatpush1.xpose.msra.mxu0 %v641
  %645 = vmatprep.subr.mxu0 0.0
  %646 = vmatpush1.xpose.msra.mxu0 0.0
  %647 = vmatprep.subr.mxu0 0.0
  %648 = vmatpush1.xpose.msra.mxu0 0.0
  %649 = vmatprep.subr.mxu0 0.0
  %650 = vmatpush1.xpose.msra.mxu0 0.0
  %651 = vmatprep.subr.mxu0 0.0
  %652 = vmatpush1.xpose.msra.mxu0 0.0
  %653 = vmatprep.subr.mxu0 0.0
  %654 = vmatpush1.xpose.msra.mxu0 0.0
  %655 = vmatprep.subr.mxu0 0.0
  %656 = vmatpush1.xpose.msra.mxu0 0.0
  %657 = vmatprep.subr.mxu0 0.0
  %658 = vmatpush1.xpose.msra.mxu0 0.0
  %659 = vmatprep.subr.mxu0 0.0
  %660 = vmatpush1.xpose.msra.mxu0 0.0
  %661 = vmatprep.subr.mxu0 0.0
  %662 = vmatpush1.xpose.msra.mxu0 0.0
  %663 = vmatprep.subr.mxu0 0.0
  %664 = vmatpush1.xpose.msra.mxu0 0.0
  %665 = vmatprep.subr.mxu0 0.0
  %666 = vmatpush1.xpose.msra.mxu0 0.0
  %667 = vmatprep.subr.mxu0 0.0
  %668 = vmatpush1.xpose.msra.mxu0 0.0
  %669 = vmatprep.subr.mxu0 0.0
  %670 = vmatpush1.xpose.msra.mxu0 0.0
  %671 = vmatprep.subr.mxu0 0.0
  %672 = vmatpush1.xpose.msra.mxu0 0.0
  %673 = vmatprep.subr.mxu0 0.0
  %674 = vmatpush1.xpose.msra.mxu0 0.0
  %675 = vmatprep.subr.mxu0 0.0
  %676 = vmatpush1.xpose.msra.mxu0 0.0
  %677 = vmatprep.subr.mxu0 0.0
  %678 = vmatpush1.xpose.msra.mxu0 0.0
  %679 = vmatprep.subr.mxu0 0.0
  %680 = vmatpush1.xpose.msra.mxu0 0.0
  %681 = vmatprep.subr.mxu0 0.0
  %682 = vmatpush1.xpose.msra.mxu0 0.0
  %683 = vmatprep.subr.mxu0 0.0
  %684 = vmatpush1.xpose.msra.mxu0 0.0
  %685 = vmatprep.subr.mxu0 0.0
  %686 = vmatpush1.xpose.msra.mxu0 0.0
  %687 = vmatprep.subr.mxu0 0.0
  %688 = vmatpush1.xpose.msra.mxu0 0.0
  %689 = vmatprep.subr.mxu0 0.0
  %690 = vmatpush1.xpose.msra.mxu0 0.0
  %691 = vmatprep.subr.mxu0 0.0
  %692 = vmatpush1.xpose.msra.mxu0 0.0
  %693 = vmatprep.subr.mxu0 0.0
  %694 = vmatpush1.xpose.msra.mxu0 0.0
  %695 = vmatprep.subr.mxu0 0.0
  %696 = vmatpush1.xpose.msra.mxu0 0.0
  %697 = vmatprep.subr.mxu0 0.0
  %698 = vmatpush1.xpose.msra.mxu0 0.0
  %699 = vmatprep.subr.mxu0 0.0
  %700 = vmatpush1.xpose.msra.mxu0 0.0
  %701 = vmatprep.subr.mxu0 0.0
  %702 = vmatpush1.xpose.msra.mxu0 0.0
  %703 = vmatprep.subr.mxu0 0.0
  %704 = vmatpush1.xpose.msra.mxu0 0.0
  %705 = vmatprep.subr.mxu0 0.0
  %706 = vmatpush1.xpose.msra.mxu0 0.0
  %707 = vmatprep.mubr.f32.mxu0 0.0
  %708 = vmatmul.mubr.f32.gmra.mrb[0].mxu0 %v639
  %v709 = vpop.f32.mrb[0].mxu0
  %v710 = vadd.f32 0.0, %v709
  %v711 = vpop.f32.mrb[0].mxu0
  %712 = vdwg.mxu0
  %v714 = vsel %vm327, %v323, 0
  %716 = vmatprep.subr.mxu0 0.0
  %717 = vmatpush1.xpose.msra.mxu0 %v407
  %718 = vmatprep.subr.mxu0 0.0
  %719 = vmatpush1.xpose.msra.mxu0 0.0
  %720 = vmatprep.subr.mxu0 0.0
  %721 = vmatpush1.xpose.msra.mxu0 0.0
  %722 = vmatprep.subr.mxu0 0.0
  %723 = vmatpush1.xpose.msra.mxu0 0.0
  %724 = vmatprep.subr.mxu0 0.0
  %725 = vmatpush1.xpose.msra.mxu0 0.0
  %726 = vmatprep.subr.mxu0 0.0
  %727 = vmatpush1.xpose.msra.mxu0 0.0
  %728 = vmatprep.subr.mxu0 0.0
  %729 = vmatpush1.xpose.msra.mxu0 0.0
  %730 = vmatprep.subr.mxu0 0.0
  %731 = vmatpush1.xpose.msra.mxu0 0.0
  %732 = vmatprep.subr.mxu0 0.0
  %733 = vmatpush1.xpose.msra.mxu0 0.0
  %734 = vmatprep.subr.mxu0 0.0
  %735 = vmatpush1.xpose.msra.mxu0 0.0
  %736 = vmatprep.subr.mxu0 0.0
  %737 = vmatpush1.xpose.msra.mxu0 0.0
  %738 = vmatprep.subr.mxu0 0.0
  %739 = vmatpush1.xpose.msra.mxu0 0.0
  %740 = vmatprep.subr.mxu0 0.0
  %741 = vmatpush1.xpose.msra.mxu0 0.0
  %742 = vmatprep.subr.mxu0 0.0
  %743 = vmatpush1.xpose.msra.mxu0 0.0
  %744 = vmatprep.subr.mxu0 0.0
  %745 = vmatpush1.xpose.msra.mxu0 0.0
  %746 = vmatprep.subr.mxu0 0.0
  %747 = vmatpush1.xpose.msra.mxu0 0.0
  %748 = vmatprep.subr.mxu0 0.0
  %749 = vmatpush1.xpose.msra.mxu0 0.0
  %750 = vmatprep.subr.mxu0 0.0
  %751 = vmatpush1.xpose.msra.mxu0 0.0
  %752 = vmatprep.subr.mxu0 0.0
  %753 = vmatpush1.xpose.msra.mxu0 0.0
  %754 = vmatprep.subr.mxu0 0.0
  %755 = vmatpush1.xpose.msra.mxu0 0.0
  %756 = vmatprep.subr.mxu0 0.0
  %757 = vmatpush1.xpose.msra.mxu0 0.0
  %758 = vmatprep.subr.mxu0 0.0
  %759 = vmatpush1.xpose.msra.mxu0 0.0
  %760 = vmatprep.subr.mxu0 0.0
  %761 = vmatpush1.xpose.msra.mxu0 0.0
  %762 = vmatprep.subr.mxu0 0.0
  %763 = vmatpush1.xpose.msra.mxu0 0.0
  %764 = vmatprep.subr.mxu0 0.0
  %765 = vmatpush1.xpose.msra.mxu0 0.0
  %766 = vmatprep.subr.mxu0 0.0
  %767 = vmatpush1.xpose.msra.mxu0 0.0
  %768 = vmatprep.subr.mxu0 0.0
  %769 = vmatpush1.xpose.msra.mxu0 0.0
  %770 = vmatprep.subr.mxu0 0.0
  %771 = vmatpush1.xpose.msra.mxu0 0.0
  %772 = vmatprep.subr.mxu0 0.0
  %773 = vmatpush1.xpose.msra.mxu0 0.0
  %774 = vmatprep.subr.mxu0 0.0
  %775 = vmatpush1.xpose.msra.mxu0 0.0
  %776 = vmatprep.subr.mxu0 0.0
  %777 = vmatpush1.xpose.msra.mxu0 0.0
  %778 = vmatprep.subr.mxu0 0.0
  %779 = vmatpush1.xpose.msra.mxu0 0.0
  %780 = vmatprep.mubr.f32.mxu0 0.0
  %781 = vmatmul.mubr.f32.gmra.mrb[0].mxu0 %v714
  %v782 = vpop.f32.mrb[0].mxu0
  %v783 = vadd.f32 0.0, %v782
  %v784 = vpop.f32.mrb[0].mxu0
  %785 = vdwg.mxu0
  %786 = vrot.lane.b32.xlu0 %v315, 112
  %v787 = vpop.permute.xlu0 %786
  %788 = vrot.lane.b32.xlu0 %v228, 80
  %v789 = vpop.permute.xlu0 %788
  %v790 = vsel %vm327, %v787, 0
  %v792 = vsel %vm327, %v789, 0
  %794 = vmatprep.subr.mxu0 0.0
  %795 = vmatpush1.xpose.msra.mxu0 %v792
  %796 = vmatprep.subr.mxu0 0.0
  %797 = vmatpush1.xpose.msra.mxu0 0.0
  %798 = vmatprep.subr.mxu0 0.0
  %799 = vmatpush1.xpose.msra.mxu0 0.0
  %800 = vmatprep.subr.mxu0 0.0
  %801 = vmatpush1.xpose.msra.mxu0 0.0
  %802 = vmatprep.subr.mxu0 0.0
  %803 = vmatpush1.xpose.msra.mxu0 0.0
  %804 = vmatprep.subr.mxu0 0.0
  %805 = vmatpush1.xpose.msra.mxu0 0.0
  %806 = vmatprep.subr.mxu0 0.0
  %807 = vmatpush1.xpose.msra.mxu0 0.0
  %808 = vmatprep.subr.mxu0 0.0
  %809 = vmatpush1.xpose.msra.mxu0 0.0
  %810 = vmatprep.subr.mxu0 0.0
  %811 = vmatpush1.xpose.msra.mxu0 0.0
  %812 = vmatprep.subr.mxu0 0.0
  %813 = vmatpush1.xpose.msra.mxu0 0.0
  %814 = vmatprep.subr.mxu0 0.0
  %815 = vmatpush1.xpose.msra.mxu0 0.0
  %816 = vmatprep.subr.mxu0 0.0
  %817 = vmatpush1.xpose.msra.mxu0 0.0
  %818 = vmatprep.subr.mxu0 0.0
  %819 = vmatpush1.xpose.msra.mxu0 0.0
  %820 = vmatprep.subr.mxu0 0.0
  %821 = vmatpush1.xpose.msra.mxu0 0.0
  %822 = vmatprep.subr.mxu0 0.0
  %823 = vmatpush1.xpose.msra.mxu0 0.0
  %824 = vmatprep.subr.mxu0 0.0
  %825 = vmatpush1.xpose.msra.mxu0 0.0
  %826 = vmatprep.subr.mxu0 0.0
  %827 = vmatpush1.xpose.msra.mxu0 0.0
  %828 = vmatprep.subr.mxu0 0.0
  %829 = vmatpush1.xpose.msra.mxu0 0.0
  %830 = vmatprep.subr.mxu0 0.0
  %831 = vmatpush1.xpose.msra.mxu0 0.0
  %832 = vmatprep.subr.mxu0 0.0
  %833 = vmatpush1.xpose.msra.mxu0 0.0
  %834 = vmatprep.subr.mxu0 0.0
  %835 = vmatpush1.xpose.msra.mxu0 0.0
  %836 = vmatprep.subr.mxu0 0.0
  %837 = vmatpush1.xpose.msra.mxu0 0.0
  %838 = vmatprep.subr.mxu0 0.0
  %839 = vmatpush1.xpose.msra.mxu0 0.0
  %840 = vmatprep.subr.mxu0 0.0
  %841 = vmatpush1.xpose.msra.mxu0 0.0
  %842 = vmatprep.subr.mxu0 0.0
  %843 = vmatpush1.xpose.msra.mxu0 0.0
  %844 = vmatprep.subr.mxu0 0.0
  %845 = vmatpush1.xpose.msra.mxu0 0.0
  %846 = vmatprep.subr.mxu0 0.0
  %847 = vmatpush1.xpose.msra.mxu0 0.0
  %848 = vmatprep.subr.mxu0 0.0
  %849 = vmatpush1.xpose.msra.mxu0 0.0
  %850 = vmatprep.subr.mxu0 0.0
  %851 = vmatpush1.xpose.msra.mxu0 0.0
  %852 = vmatprep.subr.mxu0 0.0
  %853 = vmatpush1.xpose.msra.mxu0 0.0
  %854 = vmatprep.subr.mxu0 0.0
  %855 = vmatpush1.xpose.msra.mxu0 0.0
  %856 = vmatprep.subr.mxu0 0.0
  %857 = vmatpush1.xpose.msra.mxu0 0.0
  %858 = vmatprep.mubr.f32.mxu0 0.0
  %859 = vmatmul.mubr.f32.gmra.mrb[0].mxu0 %v790
  %v860 = vpop.f32.mrb[0].mxu0
  %v861 = vadd.f32 0.0, %v860
  %v862 = vpop.f32.mrb[0].mxu0
  %863 = vdwg.mxu0
  %864 = vrot.lane.b32.xlu0 %v323, 112
  %v865 = vpop.permute.xlu0 %864
  %v866 = vsel %vm327, %v865, 0
  %868 = vmatprep.subr.mxu0 0.0
  %869 = vmatpush1.xpose.msra.mxu0 %v563
  %870 = vmatprep.subr.mxu0 0.0
  %871 = vmatpush1.xpose.msra.mxu0 0.0
  %872 = vmatprep.subr.mxu0 0.0
  %873 = vmatpush1.xpose.msra.mxu0 0.0
  %874 = vmatprep.subr.mxu0 0.0
  %875 = vmatpush1.xpose.msra.mxu0 0.0
  %876 = vmatprep.subr.mxu0 0.0
  %877 = vmatpush1.xpose.msra.mxu0 0.0
  %878 = vmatprep.subr.mxu0 0.0
  %879 = vmatpush1.xpose.msra.mxu0 0.0
  %880 = vmatprep.subr.mxu0 0.0
  %881 = vmatpush1.xpose.msra.mxu0 0.0
  %882 = vmatprep.subr.mxu0 0.0
  %883 = vmatpush1.xpose.msra.mxu0 0.0
  %884 = vmatprep.subr.mxu0 0.0
  %885 = vmatpush1.xpose.msra.mxu0 0.0
  %886 = vmatprep.subr.mxu0 0.0
  %887 = vmatpush1.xpose.msra.mxu0 0.0
  %888 = vmatprep.subr.mxu0 0.0
  %889 = vmatpush1.xpose.msra.mxu0 0.0
  %890 = vmatprep.subr.mxu0 0.0
  %891 = vmatpush1.xpose.msra.mxu0 0.0
  %892 = vmatprep.subr.mxu0 0.0
  %893 = vmatpush1.xpose.msra.mxu0 0.0
  %894 = vmatprep.subr.mxu0 0.0
  %895 = vmatpush1.xpose.msra.mxu0 0.0
  %896 = vmatprep.subr.mxu0 0.0
  %897 = vmatpush1.xpose.msra.mxu0 0.0
  %898 = vmatprep.subr.mxu0 0.0
  %899 = vmatpush1.xpose.msra.mxu0 0.0
  %900 = vmatprep.subr.mxu0 0.0
  %901 = vmatpush1.xpose.msra.mxu0 0.0
  %902 = vmatprep.subr.mxu0 0.0
  %903 = vmatpush1.xpose.msra.mxu0 0.0
  %904 = vmatprep.subr.mxu0 0.0
  %905 = vmatpush1.xpose.msra.mxu0 0.0
  %906 = vmatprep.subr.mxu0 0.0
  %907 = vmatpush1.xpose.msra.mxu0 0.0
  %908 = vmatprep.subr.mxu0 0.0
  %909 = vmatpush1.xpose.msra.mxu0 0.0
  %910 = vmatprep.subr.mxu0 0.0
  %911 = vmatpush1.xpose.msra.mxu0 0.0
  %912 = vmatprep.subr.mxu0 0.0
  %913 = vmatpush1.xpose.msra.mxu0 0.0
  %914 = vmatprep.subr.mxu0 0.0
  %915 = vmatpush1.xpose.msra.mxu0 0.0
  %916 = vmatprep.subr.mxu0 0.0
  %917 = vmatpush1.xpose.msra.mxu0 0.0
  %918 = vmatprep.subr.mxu0 0.0
  %919 = vmatpush1.xpose.msra.mxu0 0.0
  %920 = vmatprep.subr.mxu0 0.0
  %921 = vmatpush1.xpose.msra.mxu0 0.0
  %922 = vmatprep.subr.mxu0 0.0
  %923 = vmatpush1.xpose.msra.mxu0 0.0
  %924 = vmatprep.subr.mxu0 0.0
  %925 = vmatpush1.xpose.msra.mxu0 0.0
  %926 = vmatprep.subr.mxu0 0.0
  %927 = vmatpush1.xpose.msra.mxu0 0.0
  %928 = vmatprep.subr.mxu0 0.0
  %929 = vmatpush1.xpose.msra.mxu0 0.0
  %930 = vmatprep.subr.mxu0 0.0
  %931 = vmatpush1.xpose.msra.mxu0 0.0
  %932 = vmatprep.mubr.f32.mxu0 0.0
  %933 = vmatmul.mubr.f32.gmra.mrb[0].mxu0 %v866
  %v934 = vpop.f32.mrb[0].mxu0
  %v935 = vadd.f32 0.0, %v934
  %v936 = vpop.f32.mrb[0].mxu0
  %937 = vdwg.mxu0
  %vm938 = vcmp.eq.s32.totalorder %v139, 4294967289
  %940 = vset.pattern.permute.xlu0 0
  %941 = vperm.xlu0 %940, %v476
  %v942 = vpop.permute.xlu0 %941
  %945 = vset.pattern.permute.xlu0 0
  %946 = vperm.xlu0 %945, %v632
  %v947 = vpop.permute.xlu0 %946
  %950 = vset.pattern.permute.xlu0 0
  %951 = vperm.xlu0 %950, %v783
  %v952 = vpop.permute.xlu0 %951
  %955 = vset.pattern.permute.xlu0 0
  %956 = vperm.xlu0 %955, %v935
  %v957 = vpop.permute.xlu0 %956
  %v959 = vsel %vm938, %v942, 0.0
  %v960 = vsel %vm938, %v947, 0.0
  %v961 = vsel %vm938, %v952, 0.0
  %v962 = vsel %vm938, %v957, 0.0
  %vm963 = vcmp.eq.s32.totalorder %v139, 4294967290
  %964 = vset.pattern.permute.xlu0 1
  %965 = vperm.xlu0 %964, %v476
  %v966 = vpop.permute.xlu0 %965
  %968 = vset.pattern.permute.xlu0 1
  %969 = vperm.xlu0 %968, %v632
  %v970 = vpop.permute.xlu0 %969
  %972 = vset.pattern.permute.xlu0 1
  %973 = vperm.xlu0 %972, %v783
  %v974 = vpop.permute.xlu0 %973
  %976 = vset.pattern.permute.xlu0 1
  %977 = vperm.xlu0 %976, %v935
  %v978 = vpop.permute.xlu0 %977
  %v980 = vsel %vm963, %v966, %v959
  %v981 = vsel %vm963, %v970, %v960
  %v982 = vsel %vm963, %v974, %v961
  %v983 = vsel %vm963, %v978, %v962
  %vm984 = vcmp.eq.s32.totalorder %v139, 4294967291
  %985 = vset.pattern.permute.xlu0 2
  %986 = vperm.xlu0 %985, %v476
  %v987 = vpop.permute.xlu0 %986
  %989 = vset.pattern.permute.xlu0 2
  %990 = vperm.xlu0 %989, %v632
  %v991 = vpop.permute.xlu0 %990
  %993 = vset.pattern.permute.xlu0 2
  %994 = vperm.xlu0 %993, %v783
  %v995 = vpop.permute.xlu0 %994
  %997 = vset.pattern.permute.xlu0 2
  %998 = vperm.xlu0 %997, %v935
  %v999 = vpop.permute.xlu0 %998
  %v1001 = vsel %vm984, %v987, %v980
  %v1002 = vsel %vm984, %v991, %v981
  %v1003 = vsel %vm984, %v995, %v982
  %v1004 = vsel %vm984, %v999, %v983
  %vm1005 = vcmp.eq.s32.totalorder %v139, 4294967292
  %1006 = vset.pattern.permute.xlu0 3
  %1007 = vperm.xlu0 %1006, %v476
  %v1008 = vpop.permute.xlu0 %1007
  %1010 = vset.pattern.permute.xlu0 3
  %1011 = vperm.xlu0 %1010, %v632
  %v1012 = vpop.permute.xlu0 %1011
  %1014 = vset.pattern.permute.xlu0 3
  %1015 = vperm.xlu0 %1014, %v783
  %v1016 = vpop.permute.xlu0 %1015
  %1018 = vset.pattern.permute.xlu0 3
  %1019 = vperm.xlu0 %1018, %v935
  %v1020 = vpop.permute.xlu0 %1019
  %v1022 = vsel %vm1005, %v1008, %v1001
  %v1023 = vsel %vm1005, %v1012, %v1002
  %v1024 = vsel %vm1005, %v1016, %v1003
  %v1025 = vsel %vm1005, %v1020, %v1004
  %vm1026 = vcmp.eq.s32.totalorder %v139, 4294967293
  %1027 = vset.pattern.permute.xlu0 4
  %1028 = vperm.xlu0 %1027, %v476
  %v1029 = vpop.permute.xlu0 %1028
  %1031 = vset.pattern.permute.xlu0 4
  %1032 = vperm.xlu0 %1031, %v632
  %v1033 = vpop.permute.xlu0 %1032
  %1035 = vset.pattern.permute.xlu0 4
  %1036 = vperm.xlu0 %1035, %v783
  %v1037 = vpop.permute.xlu0 %1036
  %1039 = vset.pattern.permute.xlu0 4
  %1040 = vperm.xlu0 %1039, %v935
  %v1041 = vpop.permute.xlu0 %1040
  %v1043 = vsel %vm1026, %v1029, %v1022
  %v1044 = vsel %vm1026, %v1033, %v1023
  %v1045 = vsel %vm1026, %v1037, %v1024
  %v1046 = vsel %vm1026, %v1041, %v1025
  %vm1047 = vcmp.eq.s32.totalorder %v139, 4294967294
  %1048 = vset.pattern.permute.xlu0 5
  %1049 = vperm.xlu0 %1048, %v476
  %v1050 = vpop.permute.xlu0 %1049
  %1052 = vset.pattern.permute.xlu0 5
  %1053 = vperm.xlu0 %1052, %v632
  %v1054 = vpop.permute.xlu0 %1053
  %1056 = vset.pattern.permute.xlu0 5
  %1057 = vperm.xlu0 %1056, %v783
  %v1058 = vpop.permute.xlu0 %1057
  %1060 = vset.pattern.permute.xlu0 5
  %1061 = vperm.xlu0 %1060, %v935
  %v1062 = vpop.permute.xlu0 %1061
  %v1064 = vsel %vm1047, %v1050, %v1043
  %v1065 = vsel %vm1047, %v1054, %v1044
  %v1066 = vsel %vm1047, %v1058, %v1045
  %v1067 = vsel %vm1047, %v1062, %v1046
  %vm1068 = vcmp.eq.s32.totalorder %v139, 4294967295
  %1069 = vset.pattern.permute.xlu0 6
  %1070 = vperm.xlu0 %1069, %v476
  %v1071 = vpop.permute.xlu0 %1070
  %1073 = vset.pattern.permute.xlu0 6
  %1074 = vperm.xlu0 %1073, %v632
  %v1075 = vpop.permute.xlu0 %1074
  %1077 = vset.pattern.permute.xlu0 6
  %1078 = vperm.xlu0 %1077, %v783
  %v1079 = vpop.permute.xlu0 %1078
  %1081 = vset.pattern.permute.xlu0 6
  %1082 = vperm.xlu0 %1081, %v935
  %v1083 = vpop.permute.xlu0 %1082
  %v1085 = vsel %vm1068, %v1071, %v1064
  %v1086 = vsel %vm1068, %v1075, %v1065
  %v1087 = vsel %vm1068, %v1079, %v1066
  %v1088 = vsel %vm1068, %v1083, %v1067
  %vm1089 = vcmp.eq.s32.totalorder %v139, 0
  %1090 = vset.pattern.permute.xlu0 7
  %1091 = vperm.xlu0 %1090, %v476
  %v1092 = vpop.permute.xlu0 %1091
  %1094 = vset.pattern.permute.xlu0 7
  %1095 = vperm.xlu0 %1094, %v632
  %v1096 = vpop.permute.xlu0 %1095
  %1098 = vset.pattern.permute.xlu0 7
  %1099 = vperm.xlu0 %1098, %v783
  %v1100 = vpop.permute.xlu0 %1099
  %1102 = vset.pattern.permute.xlu0 7
  %1103 = vperm.xlu0 %1102, %v935
  %v1104 = vpop.permute.xlu0 %1103
  %v1106 = vsel %vm1089, %v1092, %v1085
  %v1107 = vsel %vm1089, %v1096, %v1086
  %v1108 = vsel %vm1089, %v1100, %v1087
  %v1109 = vsel %vm1089, %v1104, %v1088
  %v1110 = vadd.f32 %v400, %v1106
  %v1111 = vadd.f32 %v554, %v1107
  %v1112 = vadd.f32 %v710, %v1108
  %v1113 = vadd.f32 %v861, %v1109
  %v1114 = vadd.f32 %v1110, %v141
  %v1115 = vadd.f32 %v1111, %v141
  %v1116 = vadd.f32 %v1112, %v141
  %v1117 = vadd.f32 %v1113, %v141
  %vm1118 = vcmask 64512
  %v1119 = vsel %vm1118, %v1114, -inf
  %1120 = vmax.xlane.f32.xlu0 %v1119
  %v1121 = vpop.xlane.xlu0 %1120
  %v1122 = vsel %vm1118, %v1115, -inf
  %1123 = vmax.xlane.f32.xlu0 %v1122
  %v1124 = vpop.xlane.xlu0 %1123
  %v1125 = vsel %vm1118, %v1116, -inf
  %1126 = vmax.xlane.f32.xlu0 %v1125
  %v1127 = vpop.xlane.xlu0 %1126
  %v1128 = vsel %vm1118, %v1117, -inf
  %1129 = vmax.xlane.f32.xlu0 %v1128
  %v1130 = vpop.xlane.xlu0 %1129
  %v1131 = vsub.f32 %v1114, %v1121
  %v1132 = vsub.f32 %v1115, %v1124
  %v1133 = vsub.f32 %v1116, %v1127
  %v1134 = vsub.f32 %v1117, %v1130
  %v1135 = vmul.f32 %v1131, 1.442695
  %v1136 = vpow.pop %v1135
  %v1137 = vmul.f32 %v1132, 1.442695
  %v1138 = vpow.pop %v1137
  %v1139 = vmul.f32 %v1133, 1.442695
  %v1140 = vpow.pop %v1139
  %v1141 = vmul.f32 %v1134, 1.442695
  %v1142 = vpow.pop %v1141
  %v1143 = vsel %vm1118, %v1136, 0.0
  %1144 = vadd.xlane.f32.xlu0 %v1143
  %v1145 = vpop.xlane.xlu0 %1144
  %v1146 = vsel %vm1118, %v1138, 0.0
  %1147 = vadd.xlane.f32.xlu0 %v1146
  %v1148 = vpop.xlane.xlu0 %1147
  %v1149 = vsel %vm1118, %v1140, 0.0
  %1150 = vadd.xlane.f32.xlu0 %v1149
  %v1151 = vpop.xlane.xlu0 %1150
  %v1152 = vsel %vm1118, %v1142, 0.0
  %1153 = vadd.xlane.f32.xlu0 %v1152
  %v1154 = vpop.xlane.xlu0 %1153
  %v1155 = vrcp.pop %v1145
  %v1156 = vmul.f32 %v1136, %v1155
  %v1157 = vrcp.pop %v1148
  %v1158 = vmul.f32 %v1138, %v1157
  %v1159 = vrcp.pop %v1151
  %v1160 = vmul.f32 %v1140, %v1159
  %v1161 = vrcp.pop %v1154
  %v1162 = vmul.f32 %v1142, %v1161
  %1163 = vrot.lane.b32.xlu0 %v223, 64
  %v1164 = vpop.permute.xlu0 %1163
  %v1167 = vsel %vm1118, %v1156, 0
  %1169 = vmatprep.subr.mxu0 0.0
  %1170 = vmatpush1.msra.mxu0 %v1164
  %1171 = vmatprep.subr.mxu0 0.0
  %1172 = vmatpush1.msra.mxu0 0.0
  %1173 = vmatprep.subr.mxu0 0.0
  %1174 = vmatpush1.msra.mxu0 0.0
  %1175 = vmatprep.subr.mxu0 0.0
  %1176 = vmatpush1.msra.mxu0 0.0
  %1177 = vmatprep.subr.mxu0 0.0
  %1178 = vmatpush1.msra.mxu0 0.0
  %1179 = vmatprep.subr.mxu0 0.0
  %1180 = vmatpush1.msra.mxu0 0.0
  %1181 = vmatprep.subr.mxu0 0.0
  %1182 = vmatpush1.msra.mxu0 0.0
  %1183 = vmatprep.subr.mxu0 0.0
  %1184 = vmatpush1.msra.mxu0 0.0
  %1185 = vmatprep.subr.mxu0 0.0
  %1186 = vmatpush1.msra.mxu0 0.0
  %1187 = vmatprep.subr.mxu0 0.0
  %1188 = vmatpush1.msra.mxu0 0.0
  %1189 = vmatprep.subr.mxu0 0.0
  %1190 = vmatpush1.msra.mxu0 0.0
  %1191 = vmatprep.subr.mxu0 0.0
  %1192 = vmatpush1.msra.mxu0 0.0
  %1193 = vmatprep.subr.mxu0 0.0
  %1194 = vmatpush1.msra.mxu0 0.0
  %1195 = vmatprep.subr.mxu0 0.0
  %1196 = vmatpush1.msra.mxu0 0.0
  %1197 = vmatprep.subr.mxu0 0.0
  %1198 = vmatpush1.msra.mxu0 0.0
  %1199 = vmatprep.subr.mxu0 0.0
  %1200 = vmatpush1.msra.mxu0 0.0
  %1201 = vmatprep.subr.mxu0 0.0
  %1202 = vmatpush1.msra.mxu0 0.0
  %1203 = vmatprep.subr.mxu0 0.0
  %1204 = vmatpush1.msra.mxu0 0.0
  %1205 = vmatprep.subr.mxu0 0.0
  %1206 = vmatpush1.msra.mxu0 0.0
  %1207 = vmatprep.subr.mxu0 0.0
  %1208 = vmatpush1.msra.mxu0 0.0
  %1209 = vmatprep.subr.mxu0 0.0
  %1210 = vmatpush1.msra.mxu0 0.0
  %1211 = vmatprep.subr.mxu0 0.0
  %1212 = vmatpush1.msra.mxu0 0.0
  %1213 = vmatprep.subr.mxu0 0.0
  %1214 = vmatpush1.msra.mxu0 0.0
  %1215 = vmatprep.subr.mxu0 0.0
  %1216 = vmatpush1.msra.mxu0 0.0
  %1217 = vmatprep.subr.mxu0 0.0
  %1218 = vmatpush1.msra.mxu0 0.0
  %1219 = vmatprep.subr.mxu0 0.0
  %1220 = vmatpush1.msra.mxu0 0.0
  %1221 = vmatprep.subr.mxu0 0.0
  %1222 = vmatpush1.msra.mxu0 0.0
  %1223 = vmatprep.subr.mxu0 0.0
  %1224 = vmatpush1.msra.mxu0 0.0
  %1225 = vmatprep.subr.mxu0 0.0
  %1226 = vmatpush1.msra.mxu0 0.0
  %1227 = vmatprep.subr.mxu0 0.0
  %1228 = vmatpush1.msra.mxu0 0.0
  %1229 = vmatprep.subr.mxu0 0.0
  %1230 = vmatpush1.msra.mxu0 0.0
  %1231 = vmatprep.subr.mxu0 0.0
  %1232 = vmatpush1.msra.mxu0 0.0
  %1233 = vmatprep.mubr.f32.mxu0 0.0
  %1234 = vmatmul.mubr.f32.gmra.mrb[0].mxu0 %v1167
  %v1235 = vpop.f32.mrb[0].mxu0
  %v1236 = vadd.f32 0.0, %v1235
  %v1237 = vpop.f32.mrb[0].mxu0
  %1238 = vdwg.mxu0
  %1239 = vrot.lane.b32.xlu0 %v223, 48
  %v1240 = vpop.permute.xlu0 %1239
  %v1243 = vsel %vm1118, %v1158, 0
  %1245 = vmatprep.subr.mxu0 0.0
  %1246 = vmatpush1.msra.mxu0 %v1240
  %1247 = vmatprep.subr.mxu0 0.0
  %1248 = vmatpush1.msra.mxu0 0.0
  %1249 = vmatprep.subr.mxu0 0.0
  %1250 = vmatpush1.msra.mxu0 0.0
  %1251 = vmatprep.subr.mxu0 0.0
  %1252 = vmatpush1.msra.mxu0 0.0
  %1253 = vmatprep.subr.mxu0 0.0
  %1254 = vmatpush1.msra.mxu0 0.0
  %1255 = vmatprep.subr.mxu0 0.0
  %1256 = vmatpush1.msra.mxu0 0.0
  %1257 = vmatprep.subr.mxu0 0.0
  %1258 = vmatpush1.msra.mxu0 0.0
  %1259 = vmatprep.subr.mxu0 0.0
  %1260 = vmatpush1.msra.mxu0 0.0
  %1261 = vmatprep.subr.mxu0 0.0
  %1262 = vmatpush1.msra.mxu0 0.0
  %1263 = vmatprep.subr.mxu0 0.0
  %1264 = vmatpush1.msra.mxu0 0.0
  %1265 = vmatprep.subr.mxu0 0.0
  %1266 = vmatpush1.msra.mxu0 0.0
  %1267 = vmatprep.subr.mxu0 0.0
  %1268 = vmatpush1.msra.mxu0 0.0
  %1269 = vmatprep.subr.mxu0 0.0
  %1270 = vmatpush1.msra.mxu0 0.0
  %1271 = vmatprep.subr.mxu0 0.0
  %1272 = vmatpush1.msra.mxu0 0.0
  %1273 = vmatprep.subr.mxu0 0.0
  %1274 = vmatpush1.msra.mxu0 0.0
  %1275 = vmatprep.subr.mxu0 0.0
  %1276 = vmatpush1.msra.mxu0 0.0
  %1277 = vmatprep.subr.mxu0 0.0
  %1278 = vmatpush1.msra.mxu0 0.0
  %1279 = vmatprep.subr.mxu0 0.0
  %1280 = vmatpush1.msra.mxu0 0.0
  %1281 = vmatprep.subr.mxu0 0.0
  %1282 = vmatpush1.msra.mxu0 0.0
  %1283 = vmatprep.subr.mxu0 0.0
  %1284 = vmatpush1.msra.mxu0 0.0
  %1285 = vmatprep.subr.mxu0 0.0
  %1286 = vmatpush1.msra.mxu0 0.0
  %1287 = vmatprep.subr.mxu0 0.0
  %1288 = vmatpush1.msra.mxu0 0.0
  %1289 = vmatprep.subr.mxu0 0.0
  %1290 = vmatpush1.msra.mxu0 0.0
  %1291 = vmatprep.subr.mxu0 0.0
  %1292 = vmatpush1.msra.mxu0 0.0
  %1293 = vmatprep.subr.mxu0 0.0
  %1294 = vmatpush1.msra.mxu0 0.0
  %1295 = vmatprep.subr.mxu0 0.0
  %1296 = vmatpush1.msra.mxu0 0.0
  %1297 = vmatprep.subr.mxu0 0.0
  %1298 = vmatpush1.msra.mxu0 0.0
  %1299 = vmatprep.subr.mxu0 0.0
  %1300 = vmatpush1.msra.mxu0 0.0
  %1301 = vmatprep.subr.mxu0 0.0
  %1302 = vmatpush1.msra.mxu0 0.0
  %1303 = vmatprep.subr.mxu0 0.0
  %1304 = vmatpush1.msra.mxu0 0.0
  %1305 = vmatprep.subr.mxu0 0.0
  %1306 = vmatpush1.msra.mxu0 0.0
  %1307 = vmatprep.subr.mxu0 0.0
  %1308 = vmatpush1.msra.mxu0 0.0
  %1309 = vmatprep.mubr.f32.mxu0 0.0
  %1310 = vmatmul.mubr.f32.gmra.mrb[0].mxu0 %v1243
  %v1311 = vpop.f32.mrb[0].mxu0
  %v1312 = vadd.f32 0.0, %v1311
  %v1313 = vpop.f32.mrb[0].mxu0
  %1314 = vdwg.mxu0
  %1316 = vrot.lane.b32.xlu0 %v1312, 16
  %v1317 = vpop.permute.xlu0 %1316
  %v1319 = vsel %vm327, %v1236, %v1317
  %1320 = vrot.lane.b32.xlu0 %v228, 64
  %v1321 = vpop.permute.xlu0 %1320
  %v1324 = vsel %vm1118, %v1160, 0
  %1326 = vmatprep.subr.mxu0 0.0
  %1327 = vmatpush1.msra.mxu0 %v1321
  %1328 = vmatprep.subr.mxu0 0.0
  %1329 = vmatpush1.msra.mxu0 0.0
  %1330 = vmatprep.subr.mxu0 0.0
  %1331 = vmatpush1.msra.mxu0 0.0
  %1332 = vmatprep.subr.mxu0 0.0
  %1333 = vmatpush1.msra.mxu0 0.0
  %1334 = vmatprep.subr.mxu0 0.0
  %1335 = vmatpush1.msra.mxu0 0.0
  %1336 = vmatprep.subr.mxu0 0.0
  %1337 = vmatpush1.msra.mxu0 0.0
  %1338 = vmatprep.subr.mxu0 0.0
  %1339 = vmatpush1.msra.mxu0 0.0
  %1340 = vmatprep.subr.mxu0 0.0
  %1341 = vmatpush1.msra.mxu0 0.0
  %1342 = vmatprep.subr.mxu0 0.0
  %1343 = vmatpush1.msra.mxu0 0.0
  %1344 = vmatprep.subr.mxu0 0.0
  %1345 = vmatpush1.msra.mxu0 0.0
  %1346 = vmatprep.subr.mxu0 0.0
  %1347 = vmatpush1.msra.mxu0 0.0
  %1348 = vmatprep.subr.mxu0 0.0
  %1349 = vmatpush1.msra.mxu0 0.0
  %1350 = vmatprep.subr.mxu0 0.0
  %1351 = vmatpush1.msra.mxu0 0.0
  %1352 = vmatprep.subr.mxu0 0.0
  %1353 = vmatpush1.msra.mxu0 0.0
  %1354 = vmatprep.subr.mxu0 0.0
  %1355 = vmatpush1.msra.mxu0 0.0
  %1356 = vmatprep.subr.mxu0 0.0
  %1357 = vmatpush1.msra.mxu0 0.0
  %1358 = vmatprep.subr.mxu0 0.0
  %1359 = vmatpush1.msra.mxu0 0.0
  %1360 = vmatprep.subr.mxu0 0.0
  %1361 = vmatpush1.msra.mxu0 0.0
  %1362 = vmatprep.subr.mxu0 0.0
  %1363 = vmatpush1.msra.mxu0 0.0
  %1364 = vmatprep.subr.mxu0 0.0
  %1365 = vmatpush1.msra.mxu0 0.0
  %1366 = vmatprep.subr.mxu0 0.0
  %1367 = vmatpush1.msra.mxu0 0.0
  %1368 = vmatprep.subr.mxu0 0.0
  %1369 = vmatpush1.msra.mxu0 0.0
  %1370 = vmatprep.subr.mxu0 0.0
  %1371 = vmatpush1.msra.mxu0 0.0
  %1372 = vmatprep.subr.mxu0 0.0
  %1373 = vmatpush1.msra.mxu0 0.0
  %1374 = vmatprep.subr.mxu0 0.0
  %1375 = vmatpush1.msra.mxu0 0.0
  %1376 = vmatprep.subr.mxu0 0.0
  %1377 = vmatpush1.msra.mxu0 0.0
  %1378 = vmatprep.subr.mxu0 0.0
  %1379 = vmatpush1.msra.mxu0 0.0
  %1380 = vmatprep.subr.mxu0 0.0
  %1381 = vmatpush1.msra.mxu0 0.0
  %1382 = vmatprep.subr.mxu0 0.0
  %1383 = vmatpush1.msra.mxu0 0.0
  %1384 = vmatprep.subr.mxu0 0.0
  %1385 = vmatpush1.msra.mxu0 0.0
  %1386 = vmatprep.subr.mxu0 0.0
  %1387 = vmatpush1.msra.mxu0 0.0
  %1388 = vmatprep.subr.mxu0 0.0
  %1389 = vmatpush1.msra.mxu0 0.0
  %1390 = vmatprep.mubr.f32.mxu0 0.0
  %1391 = vmatmul.mubr.f32.gmra.mrb[0].mxu0 %v1324
  %v1392 = vpop.f32.mrb[0].mxu0
  %v1393 = vadd.f32 0.0, %v1392
  %v1394 = vpop.f32.mrb[0].mxu0
  %1395 = vdwg.mxu0
  %1396 = vrot.lane.b32.xlu0 %v228, 48
  %v1397 = vpop.permute.xlu0 %1396
  %v1400 = vsel %vm1118, %v1162, 0
  %1402 = vmatprep.subr.mxu0 0.0
  %1403 = vmatpush1.msra.mxu0 %v1397
  %1404 = vmatprep.subr.mxu0 0.0
  %1405 = vmatpush1.msra.mxu0 0.0
  %1406 = vmatprep.subr.mxu0 0.0
  %1407 = vmatpush1.msra.mxu0 0.0
  %1408 = vmatprep.subr.mxu0 0.0
  %1409 = vmatpush1.msra.mxu0 0.0
  %1410 = vmatprep.subr.mxu0 0.0
  %1411 = vmatpush1.msra.mxu0 0.0
  %1412 = vmatprep.subr.mxu0 0.0
  %1413 = vmatpush1.msra.mxu0 0.0
  %1414 = vmatprep.subr.mxu0 0.0
  %1415 = vmatpush1.msra.mxu0 0.0
  %1416 = vmatprep.subr.mxu0 0.0
  %1417 = vmatpush1.msra.mxu0 0.0
  %1418 = vmatprep.subr.mxu0 0.0
  %1419 = vmatpush1.msra.mxu0 0.0
  %1420 = vmatprep.subr.mxu0 0.0
  %1421 = vmatpush1.msra.mxu0 0.0
  %1422 = vmatprep.subr.mxu0 0.0
  %1423 = vmatpush1.msra.mxu0 0.0
  %1424 = vmatprep.subr.mxu0 0.0
  %1425 = vmatpush1.msra.mxu0 0.0
  %1426 = vmatprep.subr.mxu0 0.0
  %1427 = vmatpush1.msra.mxu0 0.0
  %1428 = vmatprep.subr.mxu0 0.0
  %1429 = vmatpush1.msra.mxu0 0.0
  %1430 = vmatprep.subr.mxu0 0.0
  %1431 = vmatpush1.msra.mxu0 0.0
  %1432 = vmatprep.subr.mxu0 0.0
  %1433 = vmatpush1.msra.mxu0 0.0
  %1434 = vmatprep.subr.mxu0 0.0
  %1435 = vmatpush1.msra.mxu0 0.0
  %1436 = vmatprep.subr.mxu0 0.0
  %1437 = vmatpush1.msra.mxu0 0.0
  %1438 = vmatprep.subr.mxu0 0.0
  %1439 = vmatpush1.msra.mxu0 0.0
  %1440 = vmatprep.subr.mxu0 0.0
  %1441 = vmatpush1.msra.mxu0 0.0
  %1442 = vmatprep.subr.mxu0 0.0
  %1443 = vmatpush1.msra.mxu0 0.0
  %1444 = vmatprep.subr.mxu0 0.0
  %1445 = vmatpush1.msra.mxu0 0.0
  %1446 = vmatprep.subr.mxu0 0.0
  %1447 = vmatpush1.msra.mxu0 0.0
  %1448 = vmatprep.subr.mxu0 0.0
  %1449 = vmatpush1.msra.mxu0 0.0
  %1450 = vmatprep.subr.mxu0 0.0
  %1451 = vmatpush1.msra.mxu0 0.0
  %1452 = vmatprep.subr.mxu0 0.0
  %1453 = vmatpush1.msra.mxu0 0.0
  %1454 = vmatprep.subr.mxu0 0.0
  %1455 = vmatpush1.msra.mxu0 0.0
  %1456 = vmatprep.subr.mxu0 0.0
  %1457 = vmatpush1.msra.mxu0 0.0
  %1458 = vmatprep.subr.mxu0 0.0
  %1459 = vmatpush1.msra.mxu0 0.0
  %1460 = vmatprep.subr.mxu0 0.0
  %1461 = vmatpush1.msra.mxu0 0.0
  %1462 = vmatprep.subr.mxu0 0.0
  %1463 = vmatpush1.msra.mxu0 0.0
  %1464 = vmatprep.subr.mxu0 0.0
  %1465 = vmatpush1.msra.mxu0 0.0
  %1466 = vmatprep.mubr.f32.mxu0 0.0
  %1467 = vmatmul.mubr.f32.gmra.mrb[0].mxu0 %v1400
  %v1468 = vpop.f32.mrb[0].mxu0
  %v1469 = vadd.f32 0.0, %v1468
  %v1470 = vpop.f32.mrb[0].mxu0
  %1471 = vdwg.mxu0
  %1473 = vrot.lane.b32.xlu0 %v1469, 16
  %v1474 = vpop.permute.xlu0 %1473
  %v1476 = vsel %vm327, %v1393, %v1474
  %v1477 = vld [vmem:[%s5] sm:$0xff]
  %v1478 = vld [vmem:[%s5 + $0x8] sm:$0xff]
  %v1479 = vld [vmem:[%s5 + $0x10] sm:$0xff]
  %v1480 = vld [vmem:[%s5 + $0x18] sm:$0xff]
  %v1482 = vsel %vm149, %v1319, 0
  %v1485 = vsel %vm149, %v1476, 0
  %1487 = vmatprep.subr.mxu0 0.0
  %1488 = vmatpush1.msra.mxu0 %v1477
  %1489 = vmatprep.subr.mxu0 0.0
  %1490 = vmatpush1.msra.mxu0 %v1478
  %1491 = vmatprep.subr.mxu0 0.0
  %1492 = vmatpush1.msra.mxu0 %v1479
  %1493 = vmatprep.subr.mxu0 0.0
  %1494 = vmatpush1.msra.mxu0 %v1480
  %1495 = vmatprep.subr.mxu0 0.0
  %1496 = vmatpush1.msra.mxu0 0.0
  %1497 = vmatprep.subr.mxu0 0.0
  %1498 = vmatpush1.msra.mxu0 0.0
  %1499 = vmatprep.subr.mxu0 0.0
  %1500 = vmatpush1.msra.mxu0 0.0
  %1501 = vmatprep.subr.mxu0 0.0
  %1502 = vmatpush1.msra.mxu0 0.0
  %1503 = vmatprep.subr.mxu0 0.0
  %1504 = vmatpush1.msra.mxu0 0.0
  %1505 = vmatprep.subr.mxu0 0.0
  %1506 = vmatpush1.msra.mxu0 0.0
  %1507 = vmatprep.subr.mxu0 0.0
  %1508 = vmatpush1.msra.mxu0 0.0
  %1509 = vmatprep.subr.mxu0 0.0
  %1510 = vmatpush1.msra.mxu0 0.0
  %1511 = vmatprep.subr.mxu0 0.0
  %1512 = vmatpush1.msra.mxu0 0.0
  %1513 = vmatprep.subr.mxu0 0.0
  %1514 = vmatpush1.msra.mxu0 0.0
  %1515 = vmatprep.subr.mxu0 0.0
  %1516 = vmatpush1.msra.mxu0 0.0
  %1517 = vmatprep.subr.mxu0 0.0
  %1518 = vmatpush1.msra.mxu0 0.0
  %1519 = vmatprep.subr.mxu0 0.0
  %1520 = vmatpush1.msra.mxu0 0.0
  %1521 = vmatprep.subr.mxu0 0.0
  %1522 = vmatpush1.msra.mxu0 0.0
  %1523 = vmatprep.subr.mxu0 0.0
  %1524 = vmatpush1.msra.mxu0 0.0
  %1525 = vmatprep.subr.mxu0 0.0
  %1526 = vmatpush1.msra.mxu0 0.0
  %1527 = vmatprep.subr.mxu0 0.0
  %1528 = vmatpush1.msra.mxu0 0.0
  %1529 = vmatprep.subr.mxu0 0.0
  %1530 = vmatpush1.msra.mxu0 0.0
  %1531 = vmatprep.subr.mxu0 0.0
  %1532 = vmatpush1.msra.mxu0 0.0
  %1533 = vmatprep.subr.mxu0 0.0
  %1534 = vmatpush1.msra.mxu0 0.0
  %1535 = vmatprep.subr.mxu0 0.0
  %1536 = vmatpush1.msra.mxu0 0.0
  %1537 = vmatprep.subr.mxu0 0.0
  %1538 = vmatpush1.msra.mxu0 0.0
  %1539 = vmatprep.subr.mxu0 0.0
  %1540 = vmatpush1.msra.mxu0 0.0
  %1541 = vmatprep.subr.mxu0 0.0
  %1542 = vmatpush1.msra.mxu0 0.0
  %1543 = vmatprep.subr.mxu0 0.0
  %1544 = vmatpush1.msra.mxu0 0.0
  %1545 = vmatprep.subr.mxu0 0.0
  %1546 = vmatpush1.msra.mxu0 0.0
  %1547 = vmatprep.subr.mxu0 0.0
  %1548 = vmatpush1.msra.mxu0 0.0
  %1549 = vmatprep.subr.mxu0 0.0
  %1550 = vmatpush1.msra.mxu0 0.0
  %1551 = vmatprep.mubr.f32.mxu0 0.0
  %1552 = vmatmul.mubr.f32.gmra.mrb[0].mxu0 %v1482
  %v1553 = vpop.f32.mrb[0].mxu0
  %v1554 = vadd.f32 %v135, %v1553
  %v1555 = vpop.f32.mrb[0].mxu0
  %1556 = vmatprep.mubr.f32.mxu0 0.0
  %1557 = vmatmul.mubr.f32.gmra.mrb[0].mxu0 %v1485
  %v1558 = vpop.f32.mrb[0].mxu0
  %v1559 = vadd.f32 %v136, %v1558
  %v1560 = vpop.f32.mrb[0].mxu0
  %1561 = vdwg.mxu0
  %v1562 = vld [vmem:[%s2 + $0xd] sm:$0x1]
  %v1563 = vld [vmem:[%s2 + $0xf] sm:$0x1]
  %v1564 = vsel %vm149, %v1554, 0.0
  %1565 = vadd.xlane.f32.xlu0 %v1564
  %v1566 = vpop.xlane.xlu0 %1565
  %v1567 = vsel %vm149, %v1559, 0.0
  %1568 = vadd.xlane.f32.xlu0 %v1567
  %v1569 = vpop.xlane.xlu0 %1568
  %v1570 = vrcp.pop 32.0
  %v1571 = vmul.f32 %v1566, %v1570
  %v1572 = vmul.f32 %v1569, %v1570
  %v1573 = vsub.f32 %v1554, %v1571
  %v1574 = vsub.f32 %v1559, %v1572
  %v1575 = vmul.f32 %v1573, %v1573
  %v1576 = vmul.f32 %v1574, %v1574
  %v1577 = vsel %vm149, %v1575, 0.0
  %1578 = vadd.xlane.f32.xlu0 %v1577
  %v1579 = vpop.xlane.xlu0 %1578
  %v1580 = vsel %vm149, %v1576, 0.0
  %1581 = vadd.xlane.f32.xlu0 %v1580
  %v1582 = vpop.xlane.xlu0 %1581
  %v1583 = vmul.f32 %v1579, %v1570
  %v1584 = vmul.f32 %v1582, %v1570
  %v1585 = vadd.f32 %v1583, 1e-05
  %v1586 = vadd.f32 %v1584, 1e-05
  %v1587 = vrsqrt.pop %v1585
  %v1588 = vrsqrt.pop %v1586
  %v1589 = vmul.f32 %v1573, %v1587
  %v1590 = vmul.f32 %v1574, %v1588
  %v1591 = vlaneseq
  %v1592 = vshrl.u32 %v1591, 7
  %v1593 = vsub.s32 0, %v1592
  %v1594 = vrot.slane %v1562, %v1593
  %v1595 = vmul.f32 %v1589, %v1594
  %v1596 = vmul.f32 %v1590, %v1594
  %v1597 = vlaneseq
  %v1598 = vshrl.u32 %v1597, 7
  %v1599 = vsub.s32 0, %v1598
  %v1600 = vrot.slane %v1563, %v1599
  %v1601 = vadd.f32 %v1595, %v1600
  %v1602 = vadd.f32 %v1596, %v1600
  %v1603 = vld [vmem:[%s6] sm:$0xff]
  %v1604 = vld [vmem:[%s6 + $0x8] sm:$0xff]
  %v1605 = vld [vmem:[%s6 + $0x10] sm:$0xff]
  %v1606 = vld [vmem:[%s6 + $0x18] sm:$0xff]
  %v1607 = vld [vmem:[%s2 + $0x15] sm:$0x1]
  %v1608 = vlaneseq
  %v1609 = vshrl.u32 %v1608, 7
  %v1610 = vsub.s32 0, %v1609
  %v1611 = vrot.slane %v1607, %v1610
  %v1613 = vsel %vm149, %v1601, 0
  %v1616 = vsel %vm149, %v1602, 0
  %1618 = vmatprep.subr.mxu0 0.0
  %1619 = vmatpush1.msra.mxu0 %v1603
  %1620 = vmatprep.subr.mxu0 0.0
  %1621 = vmatpush1.msra.mxu0 %v1604
  %1622 = vmatprep.subr.mxu0 0.0
  %1623 = vmatpush1.msra.mxu0 %v1605
  %1624 = vmatprep.subr.mxu0 0.0
  %1625 = vmatpush1.msra.mxu0 %v1606
  %1626 = vmatprep.subr.mxu0 0.0
  %1627 = vmatpush1.msra.mxu0 0.0
  %1628 = vmatprep.subr.mxu0 0.0
  %1629 = vmatpush1.msra.mxu0 0.0
  %1630 = vmatprep.subr.mxu0 0.0
  %1631 = vmatpush1.msra.mxu0 0.0
  %1632 = vmatprep.subr.mxu0 0.0
  %1633 = vmatpush1.msra.mxu0 0.0
  %1634 = vmatprep.subr.mxu0 0.0
  %1635 = vmatpush1.msra.mxu0 0.0
  %1636 = vmatprep.subr.mxu0 0.0
  %1637 = vmatpush1.msra.mxu0 0.0
  %1638 = vmatprep.subr.mxu0 0.0
  %1639 = vmatpush1.msra.mxu0 0.0
  %1640 = vmatprep.subr.mxu0 0.0
  %1641 = vmatpush1.msra.mxu0 0.0
  %1642 = vmatprep.subr.mxu0 0.0
  %1643 = vmatpush1.msra.mxu0 0.0
  %1644 = vmatprep.subr.mxu0 0.0
  %1645 = vmatpush1.msra.mxu0 0.0
  %1646 = vmatprep.subr.mxu0 0.0
  %1647 = vmatpush1.msra.mxu0 0.0
  %1648 = vmatprep.subr.mxu0 0.0
  %1649 = vmatpush1.msra.mxu0 0.0
  %1650 = vmatprep.subr.mxu0 0.0
  %1651 = vmatpush1.msra.mxu0 0.0
  %1652 = vmatprep.subr.mxu0 0.0
  %1653 = vmatpush1.msra.mxu0 0.0
  %1654 = vmatprep.subr.mxu0 0.0
  %1655 = vmatpush1.msra.mxu0 0.0
  %1656 = vmatprep.subr.mxu0 0.0
  %1657 = vmatpush1.msra.mxu0 0.0
  %1658 = vmatprep.subr.mxu0 0.0
  %1659 = vmatpush1.msra.mxu0 0.0
  %1660 = vmatprep.subr.mxu0 0.0
  %1661 = vmatpush1.msra.mxu0 0.0
  %1662 = vmatprep.subr.mxu0 0.0
  %1663 = vmatpush1.msra.mxu0 0.0
  %1664 = vmatprep.subr.mxu0 0.0
  %1665 = vmatpush1.msra.mxu0 0.0
  %1666 = vmatprep.subr.mxu0 0.0
  %1667 = vmatpush1.msra.mxu0 0.0
  %1668 = vmatprep.subr.mxu0 0.0
  %1669 = vmatpush1.msra.mxu0 0.0
  %1670 = vmatprep.subr.mxu0 0.0
  %1671 = vmatpush1.msra.mxu0 0.0
  %1672 = vmatprep.subr.mxu0 0.0
  %1673 = vmatpush1.msra.mxu0 0.0
  %1674 = vmatprep.subr.mxu0 0.0
  %1675 = vmatpush1.msra.mxu0 0.0
  %1676 = vmatprep.subr.mxu0 0.0
  %1677 = vmatpush1.msra.mxu0 0.0
  %1678 = vmatprep.subr.mxu0 0.0
  %1679 = vmatpush1.msra.mxu0 0.0
  %1680 = vmatprep.subr.mxu0 0.0
  %1681 = vmatpush1.msra.mxu0 0.0
  %1682 = vmatprep.mubr.f32.mxu0 0.0
  %1683 = vmatmul.mubr.f32.gmra.mrb[0].mxu0 %v1613
  %v1684 = vpop.f32.mrb[0].mxu0
  %v1685 = vadd.f32 %v1611, %v1684
  %v1686 = vpop.f32.mrb[0].mxu0
  %1687 = vmatprep.mubr.f32.mxu0 0.0
  %1688 = vmatmul.mubr.f32.gmra.mrb[0].mxu0 %v1616
  %v1689 = vpop.f32.mrb[0].mxu0
  %v1690 = vadd.f32 %v1611, %v1689
  %v1691 = vpop.f32.mrb[0].mxu0
  %1692 = vdwg.mxu0
  %v1693 = vmax.f32 %v1685, 0.0
  %v1694 = vmax.f32 %v1690, 0.0
  %v1695 = vld [vmem:[%s7] sm:$0xff]
  %v1696 = vld [vmem:[%s7 + $0x8] sm:$0xff]
  %v1697 = vld [vmem:[%s7 + $0x10] sm:$0xff]
  %v1698 = vld [vmem:[%s7 + $0x18] sm:$0xff]
  %v1699 = vld [vmem:[%s7 + $0x20] sm:$0xff]
  %v1700 = vld [vmem:[%s7 + $0x28] sm:$0xff]
  %v1701 = vld [vmem:[%s7 + $0x30] sm:$0xff]
  %v1702 = vld [vmem:[%s7 + $0x38] sm:$0xff]
  %v1703 = vld [vmem:[%s2 + $0x17] sm:$0x1]
  %v1704 = vlaneseq
  %v1705 = vshrl.u32 %v1704, 7
  %v1706 = vsub.s32 0, %v1705
  %v1707 = vrot.slane %v1703, %v1706
  %v1709 = vsel %vm53, %v1693, 0
  %v1712 = vsel %vm53, %v1694, 0
  %1714 = vmatprep.subr.mxu0 0.0
  %1715 = vmatpush1.msra.mxu0 %v1695
  %1716 = vmatprep.subr.mxu0 0.0
  %1717 = vmatpush1.msra.mxu0 %v1696
  %1718 = vmatprep.subr.mxu0 0.0
  %1719 = vmatpush1.msra.mxu0 %v1697
  %1720 = vmatprep.subr.mxu0 0.0
  %1721 = vmatpush1.msra.mxu0 %v1698
  %1722 = vmatprep.subr.mxu0 0.0
  %1723 = vmatpush1.msra.mxu0 %v1699
  %1724 = vmatprep.subr.mxu0 0.0
  %1725 = vmatpush1.msra.mxu0 %v1700
  %1726 = vmatprep.subr.mxu0 0.0
  %1727 = vmatpush1.msra.mxu0 %v1701
  %1728 = vmatprep.subr.mxu0 0.0
  %1729 = vmatpush1.msra.mxu0 %v1702
  %1730 = vmatprep.subr.mxu0 0.0
  %1731 = vmatpush1.msra.mxu0 0.0
  %1732 = vmatprep.subr.mxu0 0.0
  %1733 = vmatpush1.msra.mxu0 0.0
  %1734 = vmatprep.subr.mxu0 0.0
  %1735 = vmatpush1.msra.mxu0 0.0
  %1736 = vmatprep.subr.mxu0 0.0
  %1737 = vmatpush1.msra.mxu0 0.0
  %1738 = vmatprep.subr.mxu0 0.0
  %1739 = vmatpush1.msra.mxu0 0.0
  %1740 = vmatprep.subr.mxu0 0.0
  %1741 = vmatpush1.msra.mxu0 0.0
  %1742 = vmatprep.subr.mxu0 0.0
  %1743 = vmatpush1.msra.mxu0 0.0
  %1744 = vmatprep.subr.mxu0 0.0
  %1745 = vmatpush1.msra.mxu0 0.0
  %1746 = vmatprep.subr.mxu0 0.0
  %1747 = vmatpush1.msra.mxu0 0.0
  %1748 = vmatprep.subr.mxu0 0.0
  %1749 = vmatpush1.msra.mxu0 0.0
  %1750 = vmatprep.subr.mxu0 0.0
  %1751 = vmatpush1.msra.mxu0 0.0
  %1752 = vmatprep.subr.mxu0 0.0
  %1753 = vmatpush1.msra.mxu0 0.0
  %1754 = vmatprep.subr.mxu0 0.0
  %1755 = vmatpush1.msra.mxu0 0.0
  %1756 = vmatprep.subr.mxu0 0.0
  %1757 = vmatpush1.msra.mxu0 0.0
  %1758 = vmatprep.subr.mxu0 0.0
  %1759 = vmatpush1.msra.mxu0 0.0
  %1760 = vmatprep.subr.mxu0 0.0
  %1761 = vmatpush1.msra.mxu0 0.0
  %1762 = vmatprep.subr.mxu0 0.0
  %1763 = vmatpush1.msra.mxu0 0.0
  %1764 = vmatprep.subr.mxu0 0.0
  %1765 = vmatpush1.msra.mxu0 0.0
  %1766 = vmatprep.subr.mxu0 0.0
  %1767 = vmatpush1.msra.mxu0 0.0
  %1768 = vmatprep.subr.mxu0 0.0
  %1769 = vmatpush1.msra.mxu0 0.0
  %1770 = vmatprep.subr.mxu0 0.0
  %1771 = vmatpush1.msra.mxu0 0.0
  %1772 = vmatprep.subr.mxu0 0.0
  %1773 = vmatpush1.msra.mxu0 0.0
  %1774 = vmatprep.subr.mxu0 0.0
  %1775 = vmatpush1.msra.mxu0 0.0
  %1776 = vmatprep.subr.mxu0 0.0
  %1777 = vmatpush1.msra.mxu0 0.0
  %1778 = vmatprep.mubr.f32.mxu0 0.0
  %1779 = vmatmul.mubr.f32.gmra.mrb[0].mxu0 %v1709
  %v1780 = vpop.f32.mrb[0].mxu0
  %v1781 = vadd.f32 %v1707, %v1780
  %v1782 = vpop.f32.mrb[0].mxu0
  %1783 = vmatprep.mubr.f32.mxu0 0.0
  %1784 = vmatmul.mubr.f32.gmra.mrb[0].mxu0 %v1712
  %v1785 = vpop.f32.mrb[0].mxu0
  %v1786 = vadd.f32 %v1707, %v1785
  %v1787 = vpop.f32.mrb[0].mxu0
  %1788 = vdwg.mxu0
  %v1789 = vadd.f32 %v1781, %v1601
  %v1790 = vadd.f32 %v1786, %v1602
  %v1791 = vld [vmem:[%s2 + $0x11] sm:$0x1]
  %v1792 = vld [vmem:[%s2 + $0x13] sm:$0x1]
  %v1793 = vsel %vm149, %v1789, 0.0
  %1794 = vadd.xlane.f32.xlu0 %v1793
  %v1795 = vpop.xlane.xlu0 %1794
  %v1796 = vsel %vm149, %v1790, 0.0
  %1797 = vadd.xlane.f32.xlu0 %v1796
  %v1798 = vpop.xlane.xlu0 %1797
  %v1799 = vmul.f32 %v1795, %v1570
  %v1800 = vmul.f32 %v1798, %v1570
  %v1801 = vsub.f32 %v1789, %v1799
  %v1802 = vsub.f32 %v1790, %v1800
  %v1803 = vmul.f32 %v1801, %v1801
  %v1804 = vmul.f32 %v1802, %v1802
  %v1805 = vsel %vm149, %v1803, 0.0
  %1806 = vadd.xlane.f32.xlu0 %v1805
  %v1807 = vpop.xlane.xlu0 %1806
  %v1808 = vsel %vm149, %v1804, 0.0
  %1809 = vadd.xlane.f32.xlu0 %v1808
  %v1810 = vpop.xlane.xlu0 %1809
  %v1811 = vmul.f32 %v1807, %v1570
  %v1812 = vmul.f32 %v1810, %v1570
  %v1813 = vadd.f32 %v1811, 1e-05
  %v1814 = vadd.f32 %v1812, 1e-05
  %v1815 = vrsqrt.pop %v1813
  %v1816 = vrsqrt.pop %v1814
  %v1817 = vmul.f32 %v1801, %v1815
  %v1818 = vmul.f32 %v1802, %v1816
  %v1819 = vlaneseq
  %v1820 = vshrl.u32 %v1819, 7
  %v1821 = vsub.s32 0, %v1820
  %v1822 = vrot.slane %v1791, %v1821
  %v1823 = vmul.f32 %v1817, %v1822
  %v1824 = vmul.f32 %v1818, %v1822
  %v1825 = vlaneseq
  %v1826 = vshrl.u32 %v1825, 7
  %v1827 = vsub.s32 0, %v1826
  %v1828 = vrot.slane %v1792, %v1827
  %v1829 = vadd.f32 %v1823, %v1828
  %v1830 = vadd.f32 %v1824, %v1828
  %s1831 = scalar_lea.vmem %s3, 32
  %v1832 = vld [vmem:[%s1831] sm:$0xff]
  %v1833 = vld [vmem:[%s1831 + $0x8] sm:$0xff]
  %v1834 = vld [vmem:[%s1831 + $0x10] sm:$0xff]
  %v1835 = vld [vmem:[%s1831 + $0x18] sm:$0xff]
  %v1837 = vsel %vm149, %v1829, 0
  %v1840 = vsel %vm149, %v1830, 0
  %1842 = vmatprep.subr.mxu0 0.0
  %1843 = vmatpush1.msra.mxu0 %v1832
  %1844 = vmatprep.subr.mxu0 0.0
  %1845 = vmatpush1.msra.mxu0 %v1833
  %1846 = vmatprep.subr.mxu0 0.0
  %1847 = vmatpush1.msra.mxu0 %v1834
  %1848 = vmatprep.subr.mxu0 0.0
  %1849 = vmatpush1.msra.mxu0 %v1835
  %1850 = vmatprep.subr.mxu0 0.0
  %1851 = vmatpush1.msra.mxu0 0.0
  %1852 = vmatprep.subr.mxu0 0.0
  %1853 = vmatpush1.msra.mxu0 0.0
  %1854 = vmatprep.subr.mxu0 0.0
  %1855 = vmatpush1.msra.mxu0 0.0
  %1856 = vmatprep.subr.mxu0 0.0
  %1857 = vmatpush1.msra.mxu0 0.0
  %1858 = vmatprep.subr.mxu0 0.0
  %1859 = vmatpush1.msra.mxu0 0.0
  %1860 = vmatprep.subr.mxu0 0.0
  %1861 = vmatpush1.msra.mxu0 0.0
  %1862 = vmatprep.subr.mxu0 0.0
  %1863 = vmatpush1.msra.mxu0 0.0
  %1864 = vmatprep.subr.mxu0 0.0
  %1865 = vmatpush1.msra.mxu0 0.0
  %1866 = vmatprep.subr.mxu0 0.0
  %1867 = vmatpush1.msra.mxu0 0.0
  %1868 = vmatprep.subr.mxu0 0.0
  %1869 = vmatpush1.msra.mxu0 0.0
  %1870 = vmatprep.subr.mxu0 0.0
  %1871 = vmatpush1.msra.mxu0 0.0
  %1872 = vmatprep.subr.mxu0 0.0
  %1873 = vmatpush1.msra.mxu0 0.0
  %1874 = vmatprep.subr.mxu0 0.0
  %1875 = vmatpush1.msra.mxu0 0.0
  %1876 = vmatprep.subr.mxu0 0.0
  %1877 = vmatpush1.msra.mxu0 0.0
  %1878 = vmatprep.subr.mxu0 0.0
  %1879 = vmatpush1.msra.mxu0 0.0
  %1880 = vmatprep.subr.mxu0 0.0
  %1881 = vmatpush1.msra.mxu0 0.0
  %1882 = vmatprep.subr.mxu0 0.0
  %1883 = vmatpush1.msra.mxu0 0.0
  %1884 = vmatprep.subr.mxu0 0.0
  %1885 = vmatpush1.msra.mxu0 0.0
  %1886 = vmatprep.subr.mxu0 0.0
  %1887 = vmatpush1.msra.mxu0 0.0
  %1888 = vmatprep.subr.mxu0 0.0
  %1889 = vmatpush1.msra.mxu0 0.0
  %1890 = vmatprep.subr.mxu0 0.0
  %1891 = vmatpush1.msra.mxu0 0.0
  %1892 = vmatprep.subr.mxu0 0.0
  %1893 = vmatpush1.msra.mxu0 0.0
  %1894 = vmatprep.subr.mxu0 0.0
  %1895 = vmatpush1.msra.mxu0 0.0
  %1896 = vmatprep.subr.mxu0 0.0
  %1897 = vmatpush1.msra.mxu0 0.0
  %1898 = vmatprep.subr.mxu0 0.0
  %1899 = vmatpush1.msra.mxu0 0.0
  %1900 = vmatprep.subr.mxu0 0.0
  %1901 = vmatpush1.msra.mxu0 0.0
  %1902 = vmatprep.subr.mxu0 0.0
  %1903 = vmatpush1.msra.mxu0 0.0
  %1904 = vmatprep.subr.mxu0 0.0
  %1905 = vmatpush1.msra.mxu0 0.0
  %1906 = vmatprep.mubr.f32.mxu0 0.0
  %1907 = vmatmul.mubr.f32.gmra.mrb[0].mxu0 %v1837
  %v1908 = vpop.f32.mrb[0].mxu0
  %v1909 = vadd.f32 0.0, %v1908
  %v1910 = vpop.f32.mrb[0].mxu0
  %1911 = vmatprep.mubr.f32.mxu0 0.0
  %1912 = vmatmul.mubr.f32.gmra.mrb[0].mxu0 %v1840
  %v1913 = vpop.f32.mrb[0].mxu0
  %v1914 = vadd.f32 0.0, %v1913
  %v1915 = vpop.f32.mrb[0].mxu0
  %1916 = vdwg.mxu0
  %s1917 = scalar_lea.vmem %s4, 32
  %v1918 = vld [vmem:[%s1917] sm:$0xff]
  %v1919 = vld [vmem:[%s1917 + $0x8] sm:$0xff]
  %v1920 = vld [vmem:[%s1917 + $0x10] sm:$0xff]
  %v1921 = vld [vmem:[%s1917 + $0x18] sm:$0xff]
  %1922 = vmatprep.subr.mxu0 0.0
  %1923 = vmatpush1.msra.mxu0 %v1918
  %1924 = vmatprep.subr.mxu0 0.0
  %1925 = vmatpush1.msra.mxu0 %v1919
  %1926 = vmatprep.subr.mxu0 0.0
  %1927 = vmatpush1.msra.mxu0 %v1920
  %1928 = vmatprep.subr.mxu0 0.0
  %1929 = vmatpush1.msra.mxu0 %v1921
  %1930 = vmatprep.subr.mxu0 0.0
  %1931 = vmatpush1.msra.mxu0 0.0
  %1932 = vmatprep.subr.mxu0 0.0
  %1933 = vmatpush1.msra.mxu0 0.0
  %1934 = vmatprep.subr.mxu0 0.0
  %1935 = vmatpush1.msra.mxu0 0.0
  %1936 = vmatprep.subr.mxu0 0.0
  %1937 = vmatpush1.msra.mxu0 0.0
  %1938 = vmatprep.subr.mxu0 0.0
  %1939 = vmatpush1.msra.mxu0 0.0
  %1940 = vmatprep.subr.mxu0 0.0
  %1941 = vmatpush1.msra.mxu0 0.0
  %1942 = vmatprep.subr.mxu0 0.0
  %1943 = vmatpush1.msra.mxu0 0.0
  %1944 = vmatprep.subr.mxu0 0.0
  %1945 = vmatpush1.msra.mxu0 0.0
  %1946 = vmatprep.subr.mxu0 0.0
  %1947 = vmatpush1.msra.mxu0 0.0
  %1948 = vmatprep.subr.mxu0 0.0
  %1949 = vmatpush1.msra.mxu0 0.0
  %1950 = vmatprep.subr.mxu0 0.0
  %1951 = vmatpush1.msra.mxu0 0.0
  %1952 = vmatprep.subr.mxu0 0.0
  %1953 = vmatpush1.msra.mxu0 0.0
  %1954 = vmatprep.subr.mxu0 0.0
  %1955 = vmatpush1.msra.mxu0 0.0
  %1956 = vmatprep.subr.mxu0 0.0
  %1957 = vmatpush1.msra.mxu0 0.0
  %1958 = vmatprep.subr.mxu0 0.0
  %1959 = vmatpush1.msra.mxu0 0.0
  %1960 = vmatprep.subr.mxu0 0.0
  %1961 = vmatpush1.msra.mxu0 0.0
  %1962 = vmatprep.subr.mxu0 0.0
  %1963 = vmatpush1.msra.mxu0 0.0
  %1964 = vmatprep.subr.mxu0 0.0
  %1965 = vmatpush1.msra.mxu0 0.0
  %1966 = vmatprep.subr.mxu0 0.0
  %1967 = vmatpush1.msra.mxu0 0.0
  %1968 = vmatprep.subr.mxu0 0.0
  %1969 = vmatpush1.msra.mxu0 0.0
  %1970 = vmatprep.subr.mxu0 0.0
  %1971 = vmatpush1.msra.mxu0 0.0
  %1972 = vmatprep.subr.mxu0 0.0
  %1973 = vmatpush1.msra.mxu0 0.0
  %1974 = vmatprep.subr.mxu0 0.0
  %1975 = vmatpush1.msra.mxu0 0.0
  %1976 = vmatprep.subr.mxu0 0.0
  %1977 = vmatpush1.msra.mxu0 0.0
  %1978 = vmatprep.subr.mxu0 0.0
  %1979 = vmatpush1.msra.mxu0 0.0
  %1980 = vmatprep.subr.mxu0 0.0
  %1981 = vmatpush1.msra.mxu0 0.0
  %1982 = vmatprep.subr.mxu0 0.0
  %1983 = vmatpush1.msra.mxu0 0.0
  %1984 = vmatprep.subr.mxu0 0.0
  %1985 = vmatpush1.msra.mxu0 0.0
  %1986 = vmatprep.mubr.f32.mxu0 0.0
  %1987 = vmatmul.mubr.f32.gmra.mrb[0].mxu0 %v236
  %v1988 = vpop.f32.mrb[0].mxu0
  %v1989 = vadd.f32 0.0, %v1988
  %v1990 = vpop.f32.mrb[0].mxu0
  %1991 = vdwg.mxu0
  %v1992 = vadd.f32 %v1909, %v311
  %v1993 = vadd.f32 %v1914, %v311
  %v1994 = vmul.f32 %v1992, 0.25
  %v1995 = vmul.f32 %v1993, 0.25
  %v1996 = vadd.f32 %v1909, %v319
  %v1997 = vadd.f32 %v1914, %v319
  %v1998 = vmul.f32 %v1996, 0.25
  %v1999 = vmul.f32 %v1997, 0.25
  %2001 = vrot.lane.b32.xlu0 %v1909, 96
  %v2002 = vpop.permute.xlu0 %2001
  %v2004 = vsel %vm327, %v1994, 0
  %v2006 = vsel %vm327, %v2002, 0
  %2008 = vmatprep.subr.mxu0 0.0
  %2009 = vmatpush1.xpose.msra.mxu0 %v2006
  %2010 = vmatprep.subr.mxu0 0.0
  %2011 = vmatpush1.xpose.msra.mxu0 0.0
  %2012 = vmatprep.subr.mxu0 0.0
  %2013 = vmatpush1.xpose.msra.mxu0 0.0
  %2014 = vmatprep.subr.mxu0 0.0
  %2015 = vmatpush1.xpose.msra.mxu0 0.0
  %2016 = vmatprep.subr.mxu0 0.0
  %2017 = vmatpush1.xpose.msra.mxu0 0.0
  %2018 = vmatprep.subr.mxu0 0.0
  %2019 = vmatpush1.xpose.msra.mxu0 0.0
  %2020 = vmatprep.subr.mxu0 0.0
  %2021 = vmatpush1.xpose.msra.mxu0 0.0
  %2022 = vmatprep.subr.mxu0 0.0
  %2023 = vmatpush1.xpose.msra.mxu0 0.0
  %2024 = vmatprep.subr.mxu0 0.0
  %2025 = vmatpush1.xpose.msra.mxu0 0.0
  %2026 = vmatprep.subr.mxu0 0.0
  %2027 = vmatpush1.xpose.msra.mxu0 0.0
  %2028 = vmatprep.subr.mxu0 0.0
  %2029 = vmatpush1.xpose.msra.mxu0 0.0
  %2030 = vmatprep.subr.mxu0 0.0
  %2031 = vmatpush1.xpose.msra.mxu0 0.0
  %2032 = vmatprep.subr.mxu0 0.0
  %2033 = vmatpush1.xpose.msra.mxu0 0.0
  %2034 = vmatprep.subr.mxu0 0.0
  %2035 = vmatpush1.xpose.msra.mxu0 0.0
  %2036 = vmatprep.subr.mxu0 0.0
  %2037 = vmatpush1.xpose.msra.mxu0 0.0
  %2038 = vmatprep.subr.mxu0 0.0
  %2039 = vmatpush1.xpose.msra.mxu0 0.0
  %2040 = vmatprep.subr.mxu0 0.0
  %2041 = vmatpush1.xpose.msra.mxu0 0.0
  %2042 = vmatprep.subr.mxu0 0.0
  %2043 = vmatpush1.xpose.msra.mxu0 0.0
  %2044 = vmatprep.subr.mxu0 0.0
  %2045 = vmatpush1.xpose.msra.mxu0 0.0
  %2046 = vmatprep.subr.mxu0 0.0
  %2047 = vmatpush1.xpose.msra.mxu0 0.0
  %2048 = vmatprep.subr.mxu0 0.0
  %2049 = vmatpush1.xpose.msra.mxu0 0.0
  %2050 = vmatprep.subr.mxu0 0.0
  %2051 = vmatpush1.xpose.msra.mxu0 0.0
  %2052 = vmatprep.subr.mxu0 0.0
  %2053 = vmatpush1.xpose.msra.mxu0 0.0
  %2054 = vmatprep.subr.mxu0 0.0
  %2055 = vmatpush1.xpose.msra.mxu0 0.0
  %2056 = vmatprep.subr.mxu0 0.0
  %2057 = vmatpush1.xpose.msra.mxu0 0.0
  %2058 = vmatprep.subr.mxu0 0.0
  %2059 = vmatpush1.xpose.msra.mxu0 0.0
  %2060 = vmatprep.subr.mxu0 0.0
  %2061 = vmatpush1.xpose.msra.mxu0 0.0
  %2062 = vmatprep.subr.mxu0 0.0
  %2063 = vmatpush1.xpose.msra.mxu0 0.0
  %2064 = vmatprep.subr.mxu0 0.0
  %2065 = vmatpush1.xpose.msra.mxu0 0.0
  %2066 = vmatprep.subr.mxu0 0.0
  %2067 = vmatpush1.xpose.msra.mxu0 0.0
  %2068 = vmatprep.subr.mxu0 0.0
  %2069 = vmatpush1.xpose.msra.mxu0 0.0
  %2070 = vmatprep.subr.mxu0 0.0
  %2071 = vmatpush1.xpose.msra.mxu0 0.0
  %2072 = vmatprep.mubr.f32.mxu0 0.0
  %2073 = vmatmul.mubr.f32.gmra.mrb[0].mxu0 %v2004
  %v2074 = vpop.f32.mrb[0].mxu0
  %v2075 = vadd.f32 0.0, %v2074
  %v2076 = vpop.f32.mrb[0].mxu0
  %2077 = vdwg.mxu0
  %v2079 = vsel %vm327, %v1998, 0
  %v2082 = vsel %vm327, %v1989, 0
  %2084 = vmatprep.subr.mxu0 0.0
  %2085 = vmatpush1.xpose.msra.mxu0 %v2082
  %2086 = vmatprep.subr.mxu0 0.0
  %2087 = vmatpush1.xpose.msra.mxu0 0.0
  %2088 = vmatprep.subr.mxu0 0.0
  %2089 = vmatpush1.xpose.msra.mxu0 0.0
  %2090 = vmatprep.subr.mxu0 0.0
  %2091 = vmatpush1.xpose.msra.mxu0 0.0
  %2092 = vmatprep.subr.mxu0 0.0
  %2093 = vmatpush1.xpose.msra.mxu0 0.0
  %2094 = vmatprep.subr.mxu0 0.0
  %2095 = vmatpush1.xpose.msra.mxu0 0.0
  %2096 = vmatprep.subr.mxu0 0.0
  %2097 = vmatpush1.xpose.msra.mxu0 0.0
  %2098 = vmatprep.subr.mxu0 0.0
  %2099 = vmatpush1.xpose.msra.mxu0 0.0
  %2100 = vmatprep.subr.mxu0 0.0
  %2101 = vmatpush1.xpose.msra.mxu0 0.0
  %2102 = vmatprep.subr.mxu0 0.0
  %2103 = vmatpush1.xpose.msra.mxu0 0.0
  %2104 = vmatprep.subr.mxu0 0.0
  %2105 = vmatpush1.xpose.msra.mxu0 0.0
  %2106 = vmatprep.subr.mxu0 0.0
  %2107 = vmatpush1.xpose.msra.mxu0 0.0
  %2108 = vmatprep.subr.mxu0 0.0
  %2109 = vmatpush1.xpose.msra.mxu0 0.0
  %2110 = vmatprep.subr.mxu0 0.0
  %2111 = vmatpush1.xpose.msra.mxu0 0.0
  %2112 = vmatprep.subr.mxu0 0.0
  %2113 = vmatpush1.xpose.msra.mxu0 0.0
  %2114 = vmatprep.subr.mxu0 0.0
  %2115 = vmatpush1.xpose.msra.mxu0 0.0
  %2116 = vmatprep.subr.mxu0 0.0
  %2117 = vmatpush1.xpose.msra.mxu0 0.0
  %2118 = vmatprep.subr.mxu0 0.0
  %2119 = vmatpush1.xpose.msra.mxu0 0.0
  %2120 = vmatprep.subr.mxu0 0.0
  %2121 = vmatpush1.xpose.msra.mxu0 0.0
  %2122 = vmatprep.subr.mxu0 0.0
  %2123 = vmatpush1.xpose.msra.mxu0 0.0
  %2124 = vmatprep.subr.mxu0 0.0
  %2125 = vmatpush1.xpose.msra.mxu0 0.0
  %2126 = vmatprep.subr.mxu0 0.0
  %2127 = vmatpush1.xpose.msra.mxu0 0.0
  %2128 = vmatprep.subr.mxu0 0.0
  %2129 = vmatpush1.xpose.msra.mxu0 0.0
  %2130 = vmatprep.subr.mxu0 0.0
  %2131 = vmatpush1.xpose.msra.mxu0 0.0
  %2132 = vmatprep.subr.mxu0 0.0
  %2133 = vmatpush1.xpose.msra.mxu0 0.0
  %2134 = vmatprep.subr.mxu0 0.0
  %2135 = vmatpush1.xpose.msra.mxu0 0.0
  %2136 = vmatprep.subr.mxu0 0.0
  %2137 = vmatpush1.xpose.msra.mxu0 0.0
  %2138 = vmatprep.subr.mxu0 0.0
  %2139 = vmatpush1.xpose.msra.mxu0 0.0
  %2140 = vmatprep.subr.mxu0 0.0
  %2141 = vmatpush1.xpose.msra.mxu0 0.0
  %2142 = vmatprep.subr.mxu0 0.0
  %2143 = vmatpush1.xpose.msra.mxu0 0.0
  %2144 = vmatprep.subr.mxu0 0.0
  %2145 = vmatpush1.xpose.msra.mxu0 0.0
  %2146 = vmatprep.subr.mxu0 0.0
  %2147 = vmatpush1.xpose.msra.mxu0 0.0
  %2148 = vmatprep.mubr.f32.mxu0 0.0
  %2149 = vmatmul.mubr.f32.gmra.mrb[0].mxu0 %v2079
  %v2150 = vpop.f32.mrb[0].mxu0
  %v2151 = vadd.f32 0.0, %v2150
  %v2152 = vpop.f32.mrb[0].mxu0
  %2153 = vdwg.mxu0
  %2154 = vrot.lane.b32.xlu0 %v1994, 112
  %v2155 = vpop.permute.xlu0 %2154
  %2156 = vrot.lane.b32.xlu0 %v1909, 80
  %v2157 = vpop.permute.xlu0 %2156
  %v2158 = vsel %vm327, %v2155, 0
  %v2160 = vsel %vm327, %v2157, 0
  %2162 = vmatprep.subr.mxu0 0.0
  %2163 = vmatpush1.xpose.msra.mxu0 %v2160
  %2164 = vmatprep.subr.mxu0 0.0
  %2165 = vmatpush1.xpose.msra.mxu0 0.0
  %2166 = vmatprep.subr.mxu0 0.0
  %2167 = vmatpush1.xpose.msra.mxu0 0.0
  %2168 = vmatprep.subr.mxu0 0.0
  %2169 = vmatpush1.xpose.msra.mxu0 0.0
  %2170 = vmatprep.subr.mxu0 0.0
  %2171 = vmatpush1.xpose.msra.mxu0 0.0
  %2172 = vmatprep.subr.mxu0 0.0
  %2173 = vmatpush1.xpose.msra.mxu0 0.0
  %2174 = vmatprep.subr.mxu0 0.0
  %2175 = vmatpush1.xpose.msra.mxu0 0.0
  %2176 = vmatprep.subr.mxu0 0.0
  %2177 = vmatpush1.xpose.msra.mxu0 0.0
  %2178 = vmatprep.subr.mxu0 0.0
  %2179 = vmatpush1.xpose.msra.mxu0 0.0
  %2180 = vmatprep.subr.mxu0 0.0
  %2181 = vmatpush1.xpose.msra.mxu0 0.0
  %2182 = vmatprep.subr.mxu0 0.0
  %2183 = vmatpush1.xpose.msra.mxu0 0.0
  %2184 = vmatprep.subr.mxu0 0.0
  %2185 = vmatpush1.xpose.msra.mxu0 0.0
  %2186 = vmatprep.subr.mxu0 0.0
  %2187 = vmatpush1.xpose.msra.mxu0 0.0
  %2188 = vmatprep.subr.mxu0 0.0
  %2189 = vmatpush1.xpose.msra.mxu0 0.0
  %2190 = vmatprep.subr.mxu0 0.0
  %2191 = vmatpush1.xpose.msra.mxu0 0.0
  %2192 = vmatprep.subr.mxu0 0.0
  %2193 = vmatpush1.xpose.msra.mxu0 0.0
  %2194 = vmatprep.subr.mxu0 0.0
  %2195 = vmatpush1.xpose.msra.mxu0 0.0
  %2196 = vmatprep.subr.mxu0 0.0
  %2197 = vmatpush1.xpose.msra.mxu0 0.0
  %2198 = vmatprep.subr.mxu0 0.0
  %2199 = vmatpush1.xpose.msra.mxu0 0.0
  %2200 = vmatprep.subr.mxu0 0.0
  %2201 = vmatpush1.xpose.msra.mxu0 0.0
  %2202 = vmatprep.subr.mxu0 0.0
  %2203 = vmatpush1.xpose.msra.mxu0 0.0
  %2204 = vmatprep.subr.mxu0 0.0
  %2205 = vmatpush1.xpose.msra.mxu0 0.0
  %2206 = vmatprep.subr.mxu0 0.0
  %2207 = vmatpush1.xpose.msra.mxu0 0.0
  %2208 = vmatprep.subr.mxu0 0.0
  %2209 = vmatpush1.xpose.msra.mxu0 0.0
  %2210 = vmatprep.subr.mxu0 0.0
  %2211 = vmatpush1.xpose.msra.mxu0 0.0
  %2212 = vmatprep.subr.mxu0 0.0
  %2213 = vmatpush1.xpose.msra.mxu0 0.0
  %2214 = vmatprep.subr.mxu0 0.0
  %2215 = vmatpush1.xpose.msra.mxu0 0.0
  %2216 = vmatprep.subr.mxu0 0.0
  %2217 = vmatpush1.xpose.msra.mxu0 0.0
  %2218 = vmatprep.subr.mxu0 0.0
  %2219 = vmatpush1.xpose.msra.mxu0 0.0
  %2220 = vmatprep.subr.mxu0 0.0
  %2221 = vmatpush1.xpose.msra.mxu0 0.0
  %2222 = vmatprep.subr.mxu0 0.0
  %2223 = vmatpush1.xpose.msra.mxu0 0.0
  %2224 = vmatprep.subr.mxu0 0.0
  %2225 = vmatpush1.xpose.msra.mxu0 0.0
  %2226 = vmatprep.mubr.f32.mxu0 0.0
  %2227 = vmatmul.mubr.f32.gmra.mrb[0].mxu0 %v2158
  %v2228 = vpop.f32.mrb[0].mxu0
  %v2229 = vadd.f32 0.0, %v2228
  %v2230 = vpop.f32.mrb[0].mxu0
  %2231 = vdwg.mxu0
  %2232 = vrot.lane.b32.xlu0 %v1998, 112
  %v2233 = vpop.permute.xlu0 %2232
  %2234 = vrot.lane.b32.xlu0 %v1989, 112
  %v2235 = vpop.permute.xlu0 %2234
  %v2236 = vsel %vm327, %v2233, 0
  %v2238 = vsel %vm327, %v2235, 0
  %2240 = vmatprep.subr.mxu0 0.0
  %2241 = vmatpush1.xpose.msra.mxu0 %v2238
  %2242 = vmatprep.subr.mxu0 0.0
  %2243 = vmatpush1.xpose.msra.mxu0 0.0
  %2244 = vmatprep.subr.mxu0 0.0
  %2245 = vmatpush1.xpose.msra.mxu0 0.0
  %2246 = vmatprep.subr.mxu0 0.0
  %2247 = vmatpush1.xpose.msra.mxu0 0.0
  %2248 = vmatprep.subr.mxu0 0.0
  %2249 = vmatpush1.xpose.msra.mxu0 0.0
  %2250 = vmatprep.subr.mxu0 0.0
  %2251 = vmatpush1.xpose.msra.mxu0 0.0
  %2252 = vmatprep.subr.mxu0 0.0
  %2253 = vmatpush1.xpose.msra.mxu0 0.0
  %2254 = vmatprep.subr.mxu0 0.0
  %2255 = vmatpush1.xpose.msra.mxu0 0.0
  %2256 = vmatprep.subr.mxu0 0.0
  %2257 = vmatpush1.xpose.msra.mxu0 0.0
  %2258 = vmatprep.subr.mxu0 0.0
  %2259 = vmatpush1.xpose.msra.mxu0 0.0
  %2260 = vmatprep.subr.mxu0 0.0
  %2261 = vmatpush1.xpose.msra.mxu0 0.0
  %2262 = vmatprep.subr.mxu0 0.0
  %2263 = vmatpush1.xpose.msra.mxu0 0.0
  %2264 = vmatprep.subr.mxu0 0.0
  %2265 = vmatpush1.xpose.msra.mxu0 0.0
  %2266 = vmatprep.subr.mxu0 0.0
  %2267 = vmatpush1.xpose.msra.mxu0 0.0
  %2268 = vmatprep.subr.mxu0 0.0
  %2269 = vmatpush1.xpose.msra.mxu0 0.0
  %2270 = vmatprep.subr.mxu0 0.0
  %2271 = vmatpush1.xpose.msra.mxu0 0.0
  %2272 = vmatprep.subr.mxu0 0.0
  %2273 = vmatpush1.xpose.msra.mxu0 0.0
  %2274 = vmatprep.subr.mxu0 0.0
  %2275 = vmatpush1.xpose.msra.mxu0 0.0
  %2276 = vmatprep.subr.mxu0 0.0
  %2277 = vmatpush1.xpose.msra.mxu0 0.0
  %2278 = vmatprep.subr.mxu0 0.0
  %2279 = vmatpush1.xpose.msra.mxu0 0.0
  %2280 = vmatprep.subr.mxu0 0.0
  %2281 = vmatpush1.xpose.msra.mxu0 0.0
  %2282 = vmatprep.subr.mxu0 0.0
  %2283 = vmatpush1.xpose.msra.mxu0 0.0
  %2284 = vmatprep.subr.mxu0 0.0
  %2285 = vmatpush1.xpose.msra.mxu0 0.0
  %2286 = vmatprep.subr.mxu0 0.0
  %2287 = vmatpush1.xpose.msra.mxu0 0.0
  %2288 = vmatprep.subr.mxu0 0.0
  %2289 = vmatpush1.xpose.msra.mxu0 0.0
  %2290 = vmatprep.subr.mxu0 0.0
  %2291 = vmatpush1.xpose.msra.mxu0 0.0
  %2292 = vmatprep.subr.mxu0 0.0
  %2293 = vmatpush1.xpose.msra.mxu0 0.0
  %2294 = vmatprep.subr.mxu0 0.0
  %2295 = vmatpush1.xpose.msra.mxu0 0.0
  %2296 = vmatprep.subr.mxu0 0.0
  %2297 = vmatpush1.xpose.msra.mxu0 0.0
  %2298 = vmatprep.subr.mxu0 0.0
  %2299 = vmatpush1.xpose.msra.mxu0 0.0
  %2300 = vmatprep.subr.mxu0 0.0
  %2301 = vmatpush1.xpose.msra.mxu0 0.0
  %2302 = vmatprep.subr.mxu0 0.0
  %2303 = vmatpush1.xpose.msra.mxu0 0.0
  %2304 = vmatprep.mubr.f32.mxu0 0.0
  %2305 = vmatmul.mubr.f32.gmra.mrb[0].mxu0 %v2236
  %v2306 = vpop.f32.mrb[0].mxu0
  %v2307 = vadd.f32 0.0, %v2306
  %v2308 = vpop.f32.mrb[0].mxu0
  %2309 = vdwg.mxu0
  %2311 = vrot.lane.b32.xlu0 %v1914, 96
  %v2312 = vpop.permute.xlu0 %2311
  %v2314 = vsel %vm327, %v1995, 0
  %v2316 = vsel %vm327, %v2312, 0
  %2318 = vmatprep.subr.mxu0 0.0
  %2319 = vmatpush1.xpose.msra.mxu0 %v2316
  %2320 = vmatprep.subr.mxu0 0.0
  %2321 = vmatpush1.xpose.msra.mxu0 0.0
  %2322 = vmatprep.subr.mxu0 0.0
  %2323 = vmatpush1.xpose.msra.mxu0 0.0
  %2324 = vmatprep.subr.mxu0 0.0
  %2325 = vmatpush1.xpose.msra.mxu0 0.0
  %2326 = vmatprep.subr.mxu0 0.0
  %2327 = vmatpush1.xpose.msra.mxu0 0.0
  %2328 = vmatprep.subr.mxu0 0.0
  %2329 = vmatpush1.xpose.msra.mxu0 0.0
  %2330 = vmatprep.subr.mxu0 0.0
  %2331 = vmatpush1.xpose.msra.mxu0 0.0
  %2332 = vmatprep.subr.mxu0 0.0
  %2333 = vmatpush1.xpose.msra.mxu0 0.0
  %2334 = vmatprep.subr.mxu0 0.0
  %2335 = vmatpush1.xpose.msra.mxu0 0.0
  %2336 = vmatprep.subr.mxu0 0.0
  %2337 = vmatpush1.xpose.msra.mxu0 0.0
  %2338 = vmatprep.subr.mxu0 0.0
  %2339 = vmatpush1.xpose.msra.mxu0 0.0
  %2340 = vmatprep.subr.mxu0 0.0
  %2341 = vmatpush1.xpose.msra.mxu0 0.0
  %2342 = vmatprep.subr.mxu0 0.0
  %2343 = vmatpush1.xpose.msra.mxu0 0.0
  %2344 = vmatprep.subr.mxu0 0.0
  %2345 = vmatpush1.xpose.msra.mxu0 0.0
  %2346 = vmatprep.subr.mxu0 0.0
  %2347 = vmatpush1.xpose.msra.mxu0 0.0
  %2348 = vmatprep.subr.mxu0 0.0
  %2349 = vmatpush1.xpose.msra.mxu0 0.0
  %2350 = vmatprep.subr.mxu0 0.0
  %2351 = vmatpush1.xpose.msra.mxu0 0.0
  %2352 = vmatprep.subr.mxu0 0.0
  %2353 = vmatpush1.xpose.msra.mxu0 0.0
  %2354 = vmatprep.subr.mxu0 0.0
  %2355 = vmatpush1.xpose.msra.mxu0 0.0
  %2356 = vmatprep.subr.mxu0 0.0
  %2357 = vmatpush1.xpose.msra.mxu0 0.0
  %2358 = vmatprep.subr.mxu0 0.0
  %2359 = vmatpush1.xpose.msra.mxu0 0.0
  %2360 = vmatprep.subr.mxu0 0.0
  %2361 = vmatpush1.xpose.msra.mxu0 0.0
  %2362 = vmatprep.subr.mxu0 0.0
  %2363 = vmatpush1.xpose.msra.mxu0 0.0
  %2364 = vmatprep.subr.mxu0 0.0
  %2365 = vmatpush1.xpose.msra.mxu0 0.0
  %2366 = vmatprep.subr.mxu0 0.0
  %2367 = vmatpush1.xpose.msra.mxu0 0.0
  %2368 = vmatprep.subr.mxu0 0.0
  %2369 = vmatpush1.xpose.msra.mxu0 0.0
  %2370 = vmatprep.subr.mxu0 0.0
  %2371 = vmatpush1.xpose.msra.mxu0 0.0
  %2372 = vmatprep.subr.mxu0 0.0
  %2373 = vmatpush1.xpose.msra.mxu0 0.0
  %2374 = vmatprep.subr.mxu0 0.0
  %2375 = vmatpush1.xpose.msra.mxu0 0.0
  %2376 = vmatprep.subr.mxu0 0.0
  %2377 = vmatpush1.xpose.msra.mxu0 0.0
  %2378 = vmatprep.subr.mxu0 0.0
  %2379 = vmatpush1.xpose.msra.mxu0 0.0
  %2380 = vmatprep.subr.mxu0 0.0
  %2381 = vmatpush1.xpose.msra.mxu0 0.0
  %2382 = vmatprep.mubr.f32.mxu0 0.0
  %2383 = vmatmul.mubr.f32.gmra.mrb[0].mxu0 %v2314
  %v2384 = vpop.f32.mrb[0].mxu0
  %v2385 = vadd.f32 0.0, %v2384
  %v2386 = vpop.f32.mrb[0].mxu0
  %2387 = vdwg.mxu0
  %v2389 = vsel %vm327, %v1999, 0
  %2391 = vmatprep.subr.mxu0 0.0
  %2392 = vmatpush1.xpose.msra.mxu0 %v2082
  %2393 = vmatprep.subr.mxu0 0.0
  %2394 = vmatpush1.xpose.msra.mxu0 0.0
  %2395 = vmatprep.subr.mxu0 0.0
  %2396 = vmatpush1.xpose.msra.mxu0 0.0
  %2397 = vmatprep.subr.mxu0 0.0
  %2398 = vmatpush1.xpose.msra.mxu0 0.0
  %2399 = vmatprep.subr.mxu0 0.0
  %2400 = vmatpush1.xpose.msra.mxu0 0.0
  %2401 = vmatprep.subr.mxu0 0.0
  %2402 = vmatpush1.xpose.msra.mxu0 0.0
  %2403 = vmatprep.subr.mxu0 0.0
  %2404 = vmatpush1.xpose.msra.mxu0 0.0
  %2405 = vmatprep.subr.mxu0 0.0
  %2406 = vmatpush1.xpose.msra.mxu0 0.0
  %2407 = vmatprep.subr.mxu0 0.0
  %2408 = vmatpush1.xpose.msra.mxu0 0.0
  %2409 = vmatprep.subr.mxu0 0.0
  %2410 = vmatpush1.xpose.msra.mxu0 0.0
  %2411 = vmatprep.subr.mxu0 0.0
  %2412 = vmatpush1.xpose.msra.mxu0 0.0
  %2413 = vmatprep.subr.mxu0 0.0
  %2414 = vmatpush1.xpose.msra.mxu0 0.0
  %2415 = vmatprep.subr.mxu0 0.0
  %2416 = vmatpush1.xpose.msra.mxu0 0.0
  %2417 = vmatprep.subr.mxu0 0.0
  %2418 = vmatpush1.xpose.msra.mxu0 0.0
  %2419 = vmatprep.subr.mxu0 0.0
  %2420 = vmatpush1.xpose.msra.mxu0 0.0
  %2421 = vmatprep.subr.mxu0 0.0
  %2422 = vmatpush1.xpose.msra.mxu0 0.0
  %2423 = vmatprep.subr.mxu0 0.0
  %2424 = vmatpush1.xpose.msra.mxu0 0.0
  %2425 = vmatprep.subr.mxu0 0.0
  %2426 = vmatpush1.xpose.msra.mxu0 0.0
  %2427 = vmatprep.subr.mxu0 0.0
  %2428 = vmatpush1.xpose.msra.mxu0 0.0
  %2429 = vmatprep.subr.mxu0 0.0
  %2430 = vmatpush1.xpose.msra.mxu0 0.0
  %2431 = vmatprep.subr.mxu0 0.0
  %2432 = vmatpush1.xpose.msra.mxu0 0.0
  %2433 = vmatprep.subr.mxu0 0.0
  %2434 = vmatpush1.xpose.msra.mxu0 0.0
  %2435 = vmatprep.subr.mxu0 0.0
  %2436 = vmatpush1.xpose.msra.mxu0 0.0
  %2437 = vmatprep.subr.mxu0 0.0
  %2438 = vmatpush1.xpose.msra.mxu0 0.0
  %2439 = vmatprep.subr.mxu0 0.0
  %2440 = vmatpush1.xpose.msra.mxu0 0.0
  %2441 = vmatprep.subr.mxu0 0.0
  %2442 = vmatpush1.xpose.msra.mxu0 0.0
  %2443 = vmatprep.subr.mxu0 0.0
  %2444 = vmatpush1.xpose.msra.mxu0 0.0
  %2445 = vmatprep.subr.mxu0 0.0
  %2446 = vmatpush1.xpose.msra.mxu0 0.0
  %2447 = vmatprep.subr.mxu0 0.0
  %2448 = vmatpush1.xpose.msra.mxu0 0.0
  %2449 = vmatprep.subr.mxu0 0.0
  %2450 = vmatpush1.xpose.msra.mxu0 0.0
  %2451 = vmatprep.subr.mxu0 0.0
  %2452 = vmatpush1.xpose.msra.mxu0 0.0
  %2453 = vmatprep.subr.mxu0 0.0
  %2454 = vmatpush1.xpose.msra.mxu0 0.0
  %2455 = vmatprep.mubr.f32.mxu0 0.0
  %2456 = vmatmul.mubr.f32.gmra.mrb[0].mxu0 %v2389
  %v2457 = vpop.f32.mrb[0].mxu0
  %v2458 = vadd.f32 0.0, %v2457
  %v2459 = vpop.f32.mrb[0].mxu0
  %2460 = vdwg.mxu0
  %2461 = vrot.lane.b32.xlu0 %v1995, 112
  %v2462 = vpop.permute.xlu0 %2461
  %2463 = vrot.lane.b32.xlu0 %v1914, 80
  %v2464 = vpop.permute.xlu0 %2463
  %v2465 = vsel %vm327, %v2462, 0
  %v2467 = vsel %vm327, %v2464, 0
  %2469 = vmatprep.subr.mxu0 0.0
  %2470 = vmatpush1.xpose.msra.mxu0 %v2467
  %2471 = vmatprep.subr.mxu0 0.0
  %2472 = vmatpush1.xpose.msra.mxu0 0.0
  %2473 = vmatprep.subr.mxu0 0.0
  %2474 = vmatpush1.xpose.msra.mxu0 0.0
  %2475 = vmatprep.subr.mxu0 0.0
  %2476 = vmatpush1.xpose.msra.mxu0 0.0
  %2477 = vmatprep.subr.mxu0 0.0
  %2478 = vmatpush1.xpose.msra.mxu0 0.0
  %2479 = vmatprep.subr.mxu0 0.0
  %2480 = vmatpush1.xpose.msra.mxu0 0.0
  %2481 = vmatprep.subr.mxu0 0.0
  %2482 = vmatpush1.xpose.msra.mxu0 0.0
  %2483 = vmatprep.subr.mxu0 0.0
  %2484 = vmatpush1.xpose.msra.mxu0 0.0
  %2485 = vmatprep.subr.mxu0 0.0
  %2486 = vmatpush1.xpose.msra.mxu0 0.0
  %2487 = vmatprep.subr.mxu0 0.0
  %2488 = vmatpush1.xpose.msra.mxu0 0.0
  %2489 = vmatprep.subr.mxu0 0.0
  %2490 = vmatpush1.xpose.msra.mxu0 0.0
  %2491 = vmatprep.subr.mxu0 0.0
  %2492 = vmatpush1.xpose.msra.mxu0 0.0
  %2493 = vmatprep.subr.mxu0 0.0
  %2494 = vmatpush1.xpose.msra.mxu0 0.0
  %2495 = vmatprep.subr.mxu0 0.0
  %2496 = vmatpush1.xpose.msra.mxu0 0.0
  %2497 = vmatprep.subr.mxu0 0.0
  %2498 = vmatpush1.xpose.msra.mxu0 0.0
  %2499 = vmatprep.subr.mxu0 0.0
  %2500 = vmatpush1.xpose.msra.mxu0 0.0
  %2501 = vmatprep.subr.mxu0 0.0
  %2502 = vmatpush1.xpose.msra.mxu0 0.0
  %2503 = vmatprep.subr.mxu0 0.0
  %2504 = vmatpush1.xpose.msra.mxu0 0.0
  %2505 = vmatprep.subr.mxu0 0.0
  %2506 = vmatpush1.xpose.msra.mxu0 0.0
  %2507 = vmatprep.subr.mxu0 0.0
  %2508 = vmatpush1.xpose.msra.mxu0 0.0
  %2509 = vmatprep.subr.mxu0 0.0
  %2510 = vmatpush1.xpose.msra.mxu0 0.0
  %2511 = vmatprep.subr.mxu0 0.0
  %2512 = vmatpush1.xpose.msra.mxu0 0.0
  %2513 = vmatprep.subr.mxu0 0.0
  %2514 = vmatpush1.xpose.msra.mxu0 0.0
  %2515 = vmatprep.subr.mxu0 0.0
  %2516 = vmatpush1.xpose.msra.mxu0 0.0
  %2517 = vmatprep.subr.mxu0 0.0
  %2518 = vmatpush1.xpose.msra.mxu0 0.0
  %2519 = vmatprep.subr.mxu0 0.0
  %2520 = vmatpush1.xpose.msra.mxu0 0.0
  %2521 = vmatprep.subr.mxu0 0.0
  %2522 = vmatpush1.xpose.msra.mxu0 0.0
  %2523 = vmatprep.subr.mxu0 0.0
  %2524 = vmatpush1.xpose.msra.mxu0 0.0
  %2525 = vmatprep.subr.mxu0 0.0
  %2526 = vmatpush1.xpose.msra.mxu0 0.0
  %2527 = vmatprep.subr.mxu0 0.0
  %2528 = vmatpush1.xpose.msra.mxu0 0.0
  %2529 = vmatprep.subr.mxu0 0.0
  %2530 = vmatpush1.xpose.msra.mxu0 0.0
  %2531 = vmatprep.subr.mxu0 0.0
  %2532 = vmatpush1.xpose.msra.mxu0 0.0
  %2533 = vmatprep.mubr.f32.mxu0 0.0
  %2534 = vmatmul.mubr.f32.gmra.mrb[0].mxu0 %v2465
  %v2535 = vpop.f32.mrb[0].mxu0
  %v2536 = vadd.f32 0.0, %v2535
  %v2537 = vpop.f32.mrb[0].mxu0
  %2538 = vdwg.mxu0
  %2539 = vrot.lane.b32.xlu0 %v1999, 112
  %v2540 = vpop.permute.xlu0 %2539
  %v2541 = vsel %vm327, %v2540, 0
  %2543 = vmatprep.subr.mxu0 0.0
  %2544 = vmatpush1.xpose.msra.mxu0 %v2238
  %2545 = vmatprep.subr.mxu0 0.0
  %2546 = vmatpush1.xpose.msra.mxu0 0.0
  %2547 = vmatprep.subr.mxu0 0.0
  %2548 = vmatpush1.xpose.msra.mxu0 0.0
  %2549 = vmatprep.subr.mxu0 0.0
  %2550 = vmatpush1.xpose.msra.mxu0 0.0
  %2551 = vmatprep.subr.mxu0 0.0
  %2552 = vmatpush1.xpose.msra.mxu0 0.0
  %2553 = vmatprep.subr.mxu0 0.0
  %2554 = vmatpush1.xpose.msra.mxu0 0.0
  %2555 = vmatprep.subr.mxu0 0.0
  %2556 = vmatpush1.xpose.msra.mxu0 0.0
  %2557 = vmatprep.subr.mxu0 0.0
  %2558 = vmatpush1.xpose.msra.mxu0 0.0
  %2559 = vmatprep.subr.mxu0 0.0
  %2560 = vmatpush1.xpose.msra.mxu0 0.0
  %2561 = vmatprep.subr.mxu0 0.0
  %2562 = vmatpush1.xpose.msra.mxu0 0.0
  %2563 = vmatprep.subr.mxu0 0.0
  %2564 = vmatpush1.xpose.msra.mxu0 0.0
  %2565 = vmatprep.subr.mxu0 0.0
  %2566 = vmatpush1.xpose.msra.mxu0 0.0
  %2567 = vmatprep.subr.mxu0 0.0
  %2568 = vmatpush1.xpose.msra.mxu0 0.0
  %2569 = vmatprep.subr.mxu0 0.0
  %2570 = vmatpush1.xpose.msra.mxu0 0.0
  %2571 = vmatprep.subr.mxu0 0.0
  %2572 = vmatpush1.xpose.msra.mxu0 0.0
  %2573 = vmatprep.subr.mxu0 0.0
  %2574 = vmatpush1.xpose.msra.mxu0 0.0
  %2575 = vmatprep.subr.mxu0 0.0
  %2576 = vmatpush1.xpose.msra.mxu0 0.0
  %2577 = vmatprep.subr.mxu0 0.0
  %2578 = vmatpush1.xpose.msra.mxu0 0.0
  %2579 = vmatprep.subr.mxu0 0.0
  %2580 = vmatpush1.xpose.msra.mxu0 0.0
  %2581 = vmatprep.subr.mxu0 0.0
  %2582 = vmatpush1.xpose.msra.mxu0 0.0
  %2583 = vmatprep.subr.mxu0 0.0
  %2584 = vmatpush1.xpose.msra.mxu0 0.0
  %2585 = vmatprep.subr.mxu0 0.0
  %2586 = vmatpush1.xpose.msra.mxu0 0.0
  %2587 = vmatprep.subr.mxu0 0.0
  %2588 = vmatpush1.xpose.msra.mxu0 0.0
  %2589 = vmatprep.subr.mxu0 0.0
  %2590 = vmatpush1.xpose.msra.mxu0 0.0
  %2591 = vmatprep.subr.mxu0 0.0
  %2592 = vmatpush1.xpose.msra.mxu0 0.0
  %2593 = vmatprep.subr.mxu0 0.0
  %2594 = vmatpush1.xpose.msra.mxu0 0.0
  %2595 = vmatprep.subr.mxu0 0.0
  %2596 = vmatpush1.xpose.msra.mxu0 0.0
  %2597 = vmatprep.subr.mxu0 0.0
  %2598 = vmatpush1.xpose.msra.mxu0 0.0
  %2599 = vmatprep.subr.mxu0 0.0
  %2600 = vmatpush1.xpose.msra.mxu0 0.0
  %2601 = vmatprep.subr.mxu0 0.0
  %2602 = vmatpush1.xpose.msra.mxu0 0.0
  %2603 = vmatprep.subr.mxu0 0.0
  %2604 = vmatpush1.xpose.msra.mxu0 0.0
  %2605 = vmatprep.subr.mxu0 0.0
  %2606 = vmatpush1.xpose.msra.mxu0 0.0
  %2607 = vmatprep.mubr.f32.mxu0 0.0
  %2608 = vmatmul.mubr.f32.gmra.mrb[0].mxu0 %v2541
  %v2609 = vpop.f32.mrb[0].mxu0
  %v2610 = vadd.f32 0.0, %v2609
  %v2611 = vpop.f32.mrb[0].mxu0
  %2612 = vdwg.mxu0
  %2614 = vset.pattern.permute.xlu0 0
  %2615 = vperm.xlu0 %2614, %v2151
  %v2616 = vpop.permute.xlu0 %2615
  %2619 = vset.pattern.permute.xlu0 0
  %2620 = vperm.xlu0 %2619, %v2307
  %v2621 = vpop.permute.xlu0 %2620
  %2624 = vset.pattern.permute.xlu0 0
  %2625 = vperm.xlu0 %2624, %v2458
  %v2626 = vpop.permute.xlu0 %2625
  %2629 = vset.pattern.permute.xlu0 0
  %2630 = vperm.xlu0 %2629, %v2610
  %v2631 = vpop.permute.xlu0 %2630
  %v2633 = vsel %vm938, %v2616, 0.0
  %v2634 = vsel %vm938, %v2621, 0.0
  %v2635 = vsel %vm938, %v2626, 0.0
  %v2636 = vsel %vm938, %v2631, 0.0
  %2637 = vset.pattern.permute.xlu0 1
  %2638 = vperm.xlu0 %2637, %v2151
  %v2639 = vpop.permute.xlu0 %2638
  %2641 = vset.pattern.permute.xlu0 1
  %2642 = vperm.xlu0 %2641, %v2307
  %v2643 = vpop.permute.xlu0 %2642
  %2645 = vset.pattern.permute.xlu0 1
  %2646 = vperm.xlu0 %2645, %v2458
  %v2647 = vpop.permute.xlu0 %2646
  %2649 = vset.pattern.permute.xlu0 1
  %2650 = vperm.xlu0 %2649, %v2610
  %v2651 = vpop.permute.xlu0 %2650
  %v2653 = vsel %vm963, %v2639, %v2633
  %v2654 = vsel %vm963, %v2643, %v2634
  %v2655 = vsel %vm963, %v2647, %v2635
  %v2656 = vsel %vm963, %v2651, %v2636
  %2657 = vset.pattern.permute.xlu0 2
  %2658 = vperm.xlu0 %2657, %v2151
  %v2659 = vpop.permute.xlu0 %2658
  %2661 = vset.pattern.permute.xlu0 2
  %2662 = vperm.xlu0 %2661, %v2307
  %v2663 = vpop.permute.xlu0 %2662
  %2665 = vset.pattern.permute.xlu0 2
  %2666 = vperm.xlu0 %2665, %v2458
  %v2667 = vpop.permute.xlu0 %2666
  %2669 = vset.pattern.permute.xlu0 2
  %2670 = vperm.xlu0 %2669, %v2610
  %v2671 = vpop.permute.xlu0 %2670
  %v2673 = vsel %vm984, %v2659, %v2653
  %v2674 = vsel %vm984, %v2663, %v2654
  %v2675 = vsel %vm984, %v2667, %v2655
  %v2676 = vsel %vm984, %v2671, %v2656
  %2677 = vset.pattern.permute.xlu0 3
  %2678 = vperm.xlu0 %2677, %v2151
  %v2679 = vpop.permute.xlu0 %2678
  %2681 = vset.pattern.permute.xlu0 3
  %2682 = vperm.xlu0 %2681, %v2307
  %v2683 = vpop.permute.xlu0 %2682
  %2685 = vset.pattern.permute.xlu0 3
  %2686 = vperm.xlu0 %2685, %v2458
  %v2687 = vpop.permute.xlu0 %2686
  %2689 = vset.pattern.permute.xlu0 3
  %2690 = vperm.xlu0 %2689, %v2610
  %v2691 = vpop.permute.xlu0 %2690
  %v2693 = vsel %vm1005, %v2679, %v2673
  %v2694 = vsel %vm1005, %v2683, %v2674
  %v2695 = vsel %vm1005, %v2687, %v2675
  %v2696 = vsel %vm1005, %v2691, %v2676
  %2697 = vset.pattern.permute.xlu0 4
  %2698 = vperm.xlu0 %2697, %v2151
  %v2699 = vpop.permute.xlu0 %2698
  %2701 = vset.pattern.permute.xlu0 4
  %2702 = vperm.xlu0 %2701, %v2307
  %v2703 = vpop.permute.xlu0 %2702
  %2705 = vset.pattern.permute.xlu0 4
  %2706 = vperm.xlu0 %2705, %v2458
  %v2707 = vpop.permute.xlu0 %2706
  %2709 = vset.pattern.permute.xlu0 4
  %2710 = vperm.xlu0 %2709, %v2610
  %v2711 = vpop.permute.xlu0 %2710
  %v2713 = vsel %vm1026, %v2699, %v2693
  %v2714 = vsel %vm1026, %v2703, %v2694
  %v2715 = vsel %vm1026, %v2707, %v2695
  %v2716 = vsel %vm1026, %v2711, %v2696
  %2717 = vset.pattern.permute.xlu0 5
  %2718 = vperm.xlu0 %2717, %v2151
  %v2719 = vpop.permute.xlu0 %2718
  %2721 = vset.pattern.permute.xlu0 5
  %2722 = vperm.xlu0 %2721, %v2307
  %v2723 = vpop.permute.xlu0 %2722
  %2725 = vset.pattern.permute.xlu0 5
  %2726 = vperm.xlu0 %2725, %v2458
  %v2727 = vpop.permute.xlu0 %2726
  %2729 = vset.pattern.permute.xlu0 5
  %2730 = vperm.xlu0 %2729, %v2610
  %v2731 = vpop.permute.xlu0 %2730
  %v2733 = vsel %vm1047, %v2719, %v2713
  %v2734 = vsel %vm1047, %v2723, %v2714
  %v2735 = vsel %vm1047, %v2727, %v2715
  %v2736 = vsel %vm1047, %v2731, %v2716
  %2737 = vset.pattern.permute.xlu0 6
  %2738 = vperm.xlu0 %2737, %v2151
  %v2739 = vpop.permute.xlu0 %2738
  %2741 = vset.pattern.permute.xlu0 6
  %2742 = vperm.xlu0 %2741, %v2307
  %v2743 = vpop.permute.xlu0 %2742
  %2745 = vset.pattern.permute.xlu0 6
  %2746 = vperm.xlu0 %2745, %v2458
  %v2747 = vpop.permute.xlu0 %2746
  %2749 = vset.pattern.permute.xlu0 6
  %2750 = vperm.xlu0 %2749, %v2610
  %v2751 = vpop.permute.xlu0 %2750
  %v2753 = vsel %vm1068, %v2739, %v2733
  %v2754 = vsel %vm1068, %v2743, %v2734
  %v2755 = vsel %vm1068, %v2747, %v2735
  %v2756 = vsel %vm1068, %v2751, %v2736
  %2757 = vset.pattern.permute.xlu0 7
  %2758 = vperm.xlu0 %2757, %v2151
  %v2759 = vpop.permute.xlu0 %2758
  %2761 = vset.pattern.permute.xlu0 7
  %2762 = vperm.xlu0 %2761, %v2307
  %v2763 = vpop.permute.xlu0 %2762
  %2765 = vset.pattern.permute.xlu0 7
  %2766 = vperm.xlu0 %2765, %v2458
  %v2767 = vpop.permute.xlu0 %2766
  %2769 = vset.pattern.permute.xlu0 7
  %2770 = vperm.xlu0 %2769, %v2610
  %v2771 = vpop.permute.xlu0 %2770
  %v2773 = vsel %vm1089, %v2759, %v2753
  %v2774 = vsel %vm1089, %v2763, %v2754
  %v2775 = vsel %vm1089, %v2767, %v2755
  %v2776 = vsel %vm1089, %v2771, %v2756
  %v2777 = vadd.f32 %v2075, %v2773
  %v2778 = vadd.f32 %v2229, %v2774
  %v2779 = vadd.f32 %v2385, %v2775
  %v2780 = vadd.f32 %v2536, %v2776
  %v2781 = vadd.f32 %v2777, %v141
  %v2782 = vadd.f32 %v2778, %v141
  %v2783 = vadd.f32 %v2779, %v141
  %v2784 = vadd.f32 %v2780, %v141
  %v2785 = vsel %vm1118, %v2781, -inf
  %2786 = vmax.xlane.f32.xlu0 %v2785
  %v2787 = vpop.xlane.xlu0 %2786
  %v2788 = vsel %vm1118, %v2782, -inf
  %2789 = vmax.xlane.f32.xlu0 %v2788
  %v2790 = vpop.xlane.xlu0 %2789
  %v2791 = vsel %vm1118, %v2783, -inf
  %2792 = vmax.xlane.f32.xlu0 %v2791
  %v2793 = vpop.xlane.xlu0 %2792
  %v2794 = vsel %vm1118, %v2784, -inf
  %2795 = vmax.xlane.f32.xlu0 %v2794
  %v2796 = vpop.xlane.xlu0 %2795
  %v2797 = vsub.f32 %v2781, %v2787
  %v2798 = vsub.f32 %v2782, %v2790
  %v2799 = vsub.f32 %v2783, %v2793
  %v2800 = vsub.f32 %v2784, %v2796
  %v2801 = vmul.f32 %v2797, 1.442695
  %v2802 = vpow.pop %v2801
  %v2803 = vmul.f32 %v2798, 1.442695
  %v2804 = vpow.pop %v2803
  %v2805 = vmul.f32 %v2799, 1.442695
  %v2806 = vpow.pop %v2805
  %v2807 = vmul.f32 %v2800, 1.442695
  %v2808 = vpow.pop %v2807
  %v2809 = vsel %vm1118, %v2802, 0.0
  %2810 = vadd.xlane.f32.xlu0 %v2809
  %v2811 = vpop.xlane.xlu0 %2810
  %v2812 = vsel %vm1118, %v2804, 0.0
  %2813 = vadd.xlane.f32.xlu0 %v2812
  %v2814 = vpop.xlane.xlu0 %2813
  %v2815 = vsel %vm1118, %v2806, 0.0
  %2816 = vadd.xlane.f32.xlu0 %v2815
  %v2817 = vpop.xlane.xlu0 %2816
  %v2818 = vsel %vm1118, %v2808, 0.0
  %2819 = vadd.xlane.f32.xlu0 %v2818
  %v2820 = vpop.xlane.xlu0 %2819
  %v2821 = vrcp.pop %v2811
  %v2822 = vmul.f32 %v2802, %v2821
  %v2823 = vrcp.pop %v2814
  %v2824 = vmul.f32 %v2804, %v2823
  %v2825 = vrcp.pop %v2817
  %v2826 = vmul.f32 %v2806, %v2825
  %v2827 = vrcp.pop %v2820
  %v2828 = vmul.f32 %v2808, %v2827
  %2829 = vrot.lane.b32.xlu0 %v1909, 64
  %v2830 = vpop.permute.xlu0 %2829
  %v2833 = vsel %vm1118, %v2822, 0
  %2835 = vmatprep.subr.mxu0 0.0
  %2836 = vmatpush1.msra.mxu0 %v2830
  %2837 = vmatprep.subr.mxu0 0.0
  %2838 = vmatpush1.msra.mxu0 0.0
  %2839 = vmatprep.subr.mxu0 0.0
  %2840 = vmatpush1.msra.mxu0 0.0
  %2841 = vmatprep.subr.mxu0 0.0
  %2842 = vmatpush1.msra.mxu0 0.0
  %2843 = vmatprep.subr.mxu0 0.0
  %2844 = vmatpush1.msra.mxu0 0.0
  %2845 = vmatprep.subr.mxu0 0.0
  %2846 = vmatpush1.msra.mxu0 0.0
  %2847 = vmatprep.subr.mxu0 0.0
  %2848 = vmatpush1.msra.mxu0 0.0
  %2849 = vmatprep.subr.mxu0 0.0
  %2850 = vmatpush1.msra.mxu0 0.0
  %2851 = vmatprep.subr.mxu0 0.0
  %2852 = vmatpush1.msra.mxu0 0.0
  %2853 = vmatprep.subr.mxu0 0.0
  %2854 = vmatpush1.msra.mxu0 0.0
  %2855 = vmatprep.subr.mxu0 0.0
  %2856 = vmatpush1.msra.mxu0 0.0
  %2857 = vmatprep.subr.mxu0 0.0
  %2858 = vmatpush1.msra.mxu0 0.0
  %2859 = vmatprep.subr.mxu0 0.0
  %2860 = vmatpush1.msra.mxu0 0.0
  %2861 = vmatprep.subr.mxu0 0.0
  %2862 = vmatpush1.msra.mxu0 0.0
  %2863 = vmatprep.subr.mxu0 0.0
  %2864 = vmatpush1.msra.mxu0 0.0
  %2865 = vmatprep.subr.mxu0 0.0
  %2866 = vmatpush1.msra.mxu0 0.0
  %2867 = vmatprep.subr.mxu0 0.0
  %2868 = vmatpush1.msra.mxu0 0.0
  %2869 = vmatprep.subr.mxu0 0.0
  %2870 = vmatpush1.msra.mxu0 0.0
  %2871 = vmatprep.subr.mxu0 0.0
  %2872 = vmatpush1.msra.mxu0 0.0
  %2873 = vmatprep.subr.mxu0 0.0
  %2874 = vmatpush1.msra.mxu0 0.0
  %2875 = vmatprep.subr.mxu0 0.0
  %2876 = vmatpush1.msra.mxu0 0.0
  %2877 = vmatprep.subr.mxu0 0.0
  %2878 = vmatpush1.msra.mxu0 0.0
  %2879 = vmatprep.subr.mxu0 0.0
  %2880 = vmatpush1.msra.mxu0 0.0
  %2881 = vmatprep.subr.mxu0 0.0
  %2882 = vmatpush1.msra.mxu0 0.0
  %2883 = vmatprep.subr.mxu0 0.0
  %2884 = vmatpush1.msra.mxu0 0.0
  %2885 = vmatprep.subr.mxu0 0.0
  %2886 = vmatpush1.msra.mxu0 0.0
  %2887 = vmatprep.subr.mxu0 0.0
  %2888 = vmatpush1.msra.mxu0 0.0
  %2889 = vmatprep.subr.mxu0 0.0
  %2890 = vmatpush1.msra.mxu0 0.0
  %2891 = vmatprep.subr.mxu0 0.0
  %2892 = vmatpush1.msra.mxu0 0.0
  %2893 = vmatprep.subr.mxu0 0.0
  %2894 = vmatpush1.msra.mxu0 0.0
  %2895 = vmatprep.subr.mxu0 0.0
  %2896 = vmatpush1.msra.mxu0 0.0
  %2897 = vmatprep.subr.mxu0 0.0
  %2898 = vmatpush1.msra.mxu0 0.0
  %2899 = vmatprep.mubr.f32.mxu0 0.0
  %2900 = vmatmul.mubr.f32.gmra.mrb[0].mxu0 %v2833
  %v2901 = vpop.f32.mrb[0].mxu0
  %v2902 = vadd.f32 0.0, %v2901
  %v2903 = vpop.f32.mrb[0].mxu0
  %2904 = vdwg.mxu0
  %2905 = vrot.lane.b32.xlu0 %v1909, 48
  %v2906 = vpop.permute.xlu0 %2905
  %v2909 = vsel %vm1118, %v2824, 0
  %2911 = vmatprep.subr.mxu0 0.0
  %2912 = vmatpush1.msra.mxu0 %v2906
  %2913 = vmatprep.subr.mxu0 0.0
  %2914 = vmatpush1.msra.mxu0 0.0
  %2915 = vmatprep.subr.mxu0 0.0
  %2916 = vmatpush1.msra.mxu0 0.0
  %2917 = vmatprep.subr.mxu0 0.0
  %2918 = vmatpush1.msra.mxu0 0.0
  %2919 = vmatprep.subr.mxu0 0.0
  %2920 = vmatpush1.msra.mxu0 0.0
  %2921 = vmatprep.subr.mxu0 0.0
  %2922 = vmatpush1.msra.mxu0 0.0
  %2923 = vmatprep.subr.mxu0 0.0
  %2924 = vmatpush1.msra.mxu0 0.0
  %2925 = vmatprep.subr.mxu0 0.0
  %2926 = vmatpush1.msra.mxu0 0.0
  %2927 = vmatprep.subr.mxu0 0.0
  %2928 = vmatpush1.msra.mxu0 0.0
  %2929 = vmatprep.subr.mxu0 0.0
  %2930 = vmatpush1.msra.mxu0 0.0
  %2931 = vmatprep.subr.mxu0 0.0
  %2932 = vmatpush1.msra.mxu0 0.0
  %2933 = vmatprep.subr.mxu0 0.0
  %2934 = vmatpush1.msra.mxu0 0.0
  %2935 = vmatprep.subr.mxu0 0.0
  %2936 = vmatpush1.msra.mxu0 0.0
  %2937 = vmatprep.subr.mxu0 0.0
  %2938 = vmatpush1.msra.mxu0 0.0
  %2939 = vmatprep.subr.mxu0 0.0
  %2940 = vmatpush1.msra.mxu0 0.0
  %2941 = vmatprep.subr.mxu0 0.0
  %2942 = vmatpush1.msra.mxu0 0.0
  %2943 = vmatprep.subr.mxu0 0.0
  %2944 = vmatpush1.msra.mxu0 0.0
  %2945 = vmatprep.subr.mxu0 0.0
  %2946 = vmatpush1.msra.mxu0 0.0
  %2947 = vmatprep.subr.mxu0 0.0
  %2948 = vmatpush1.msra.mxu0 0.0
  %2949 = vmatprep.subr.mxu0 0.0
  %2950 = vmatpush1.msra.mxu0 0.0
  %2951 = vmatprep.subr.mxu0 0.0
  %2952 = vmatpush1.msra.mxu0 0.0
  %2953 = vmatprep.subr.mxu0 0.0
  %2954 = vmatpush1.msra.mxu0 0.0
  %2955 = vmatprep.subr.mxu0 0.0
  %2956 = vmatpush1.msra.mxu0 0.0
  %2957 = vmatprep.subr.mxu0 0.0
  %2958 = vmatpush1.msra.mxu0 0.0
  %2959 = vmatprep.subr.mxu0 0.0
  %2960 = vmatpush1.msra.mxu0 0.0
  %2961 = vmatprep.subr.mxu0 0.0
  %2962 = vmatpush1.msra.mxu0 0.0
  %2963 = vmatprep.subr.mxu0 0.0
  %2964 = vmatpush1.msra.mxu0 0.0
  %2965 = vmatprep.subr.mxu0 0.0
  %2966 = vmatpush1.msra.mxu0 0.0
  %2967 = vmatprep.subr.mxu0 0.0
  %2968 = vmatpush1.msra.mxu0 0.0
  %2969 = vmatprep.subr.mxu0 0.0
  %2970 = vmatpush1.msra.mxu0 0.0
  %2971 = vmatprep.subr.mxu0 0.0
  %2972 = vmatpush1.msra.mxu0 0.0
  %2973 = vmatprep.subr.mxu0 0.0
  %2974 = vmatpush1.msra.mxu0 0.0
  %2975 = vmatprep.mubr.f32.mxu0 0.0
  %2976 = vmatmul.mubr.f32.gmra.mrb[0].mxu0 %v2909
  %v2977 = vpop.f32.mrb[0].mxu0
  %v2978 = vadd.f32 0.0, %v2977
  %v2979 = vpop.f32.mrb[0].mxu0
  %2980 = vdwg.mxu0
  %2982 = vrot.lane.b32.xlu0 %v2978, 16
  %v2983 = vpop.permute.xlu0 %2982
  %v2985 = vsel %vm327, %v2902, %v2983
  %2986 = vrot.lane.b32.xlu0 %v1914, 64
  %v2987 = vpop.permute.xlu0 %2986
  %v2990 = vsel %vm1118, %v2826, 0
  %2992 = vmatprep.subr.mxu0 0.0
  %2993 = vmatpush1.msra.mxu0 %v2987
  %2994 = vmatprep.subr.mxu0 0.0
  %2995 = vmatpush1.msra.mxu0 0.0
  %2996 = vmatprep.subr.mxu0 0.0
  %2997 = vmatpush1.msra.mxu0 0.0
  %2998 = vmatprep.subr.mxu0 0.0
  %2999 = vmatpush1.msra.mxu0 0.0
  %3000 = vmatprep.subr.mxu0 0.0
  %3001 = vmatpush1.msra.mxu0 0.0
  %3002 = vmatprep.subr.mxu0 0.0
  %3003 = vmatpush1.msra.mxu0 0.0
  %3004 = vmatprep.subr.mxu0 0.0
  %3005 = vmatpush1.msra.mxu0 0.0
  %3006 = vmatprep.subr.mxu0 0.0
  %3007 = vmatpush1.msra.mxu0 0.0
  %3008 = vmatprep.subr.mxu0 0.0
  %3009 = vmatpush1.msra.mxu0 0.0
  %3010 = vmatprep.subr.mxu0 0.0
  %3011 = vmatpush1.msra.mxu0 0.0
  %3012 = vmatprep.subr.mxu0 0.0
  %3013 = vmatpush1.msra.mxu0 0.0
  %3014 = vmatprep.subr.mxu0 0.0
  %3015 = vmatpush1.msra.mxu0 0.0
  %3016 = vmatprep.subr.mxu0 0.0
  %3017 = vmatpush1.msra.mxu0 0.0
  %3018 = vmatprep.subr.mxu0 0.0
  %3019 = vmatpush1.msra.mxu0 0.0
  %3020 = vmatprep.subr.mxu0 0.0
  %3021 = vmatpush1.msra.mxu0 0.0
  %3022 = vmatprep.subr.mxu0 0.0
  %3023 = vmatpush1.msra.mxu0 0.0
  %3024 = vmatprep.subr.mxu0 0.0
  %3025 = vmatpush1.msra.mxu0 0.0
  %3026 = vmatprep.subr.mxu0 0.0
  %3027 = vmatpush1.msra.mxu0 0.0
  %3028 = vmatprep.subr.mxu0 0.0
  %3029 = vmatpush1.msra.mxu0 0.0
  %3030 = vmatprep.subr.mxu0 0.0
  %3031 = vmatpush1.msra.mxu0 0.0
  %3032 = vmatprep.subr.mxu0 0.0
  %3033 = vmatpush1.msra.mxu0 0.0
  %3034 = vmatprep.subr.mxu0 0.0
  %3035 = vmatpush1.msra.mxu0 0.0
  %3036 = vmatprep.subr.mxu0 0.0
  %3037 = vmatpush1.msra.mxu0 0.0
  %3038 = vmatprep.subr.mxu0 0.0
  %3039 = vmatpush1.msra.mxu0 0.0
  %3040 = vmatprep.subr.mxu0 0.0
  %3041 = vmatpush1.msra.mxu0 0.0
  %3042 = vmatprep.subr.mxu0 0.0
  %3043 = vmatpush1.msra.mxu0 0.0
  %3044 = vmatprep.subr.mxu0 0.0
  %3045 = vmatpush1.msra.mxu0 0.0
  %3046 = vmatprep.subr.mxu0 0.0
  %3047 = vmatpush1.msra.mxu0 0.0
  %3048 = vmatprep.subr.mxu0 0.0
  %3049 = vmatpush1.msra.mxu0 0.0
  %3050 = vmatprep.subr.mxu0 0.0
  %3051 = vmatpush1.msra.mxu0 0.0
  %3052 = vmatprep.subr.mxu0 0.0
  %3053 = vmatpush1.msra.mxu0 0.0
  %3054 = vmatprep.subr.mxu0 0.0
  %3055 = vmatpush1.msra.mxu0 0.0
  %3056 = vmatprep.mubr.f32.mxu0 0.0
  %3057 = vmatmul.mubr.f32.gmra.mrb[0].mxu0 %v2990
  %v3058 = vpop.f32.mrb[0].mxu0
  %v3059 = vadd.f32 0.0, %v3058
  %v3060 = vpop.f32.mrb[0].mxu0
  %3061 = vdwg.mxu0
  %3062 = vrot.lane.b32.xlu0 %v1914, 48
  %v3063 = vpop.permute.xlu0 %3062
  %v3066 = vsel %vm1118, %v2828, 0
  %3068 = vmatprep.subr.mxu0 0.0
  %3069 = vmatpush1.msra.mxu0 %v3063
  %3070 = vmatprep.subr.mxu0 0.0
  %3071 = vmatpush1.msra.mxu0 0.0
  %3072 = vmatprep.subr.mxu0 0.0
  %3073 = vmatpush1.msra.mxu0 0.0
  %3074 = vmatprep.subr.mxu0 0.0
  %3075 = vmatpush1.msra.mxu0 0.0
  %3076 = vmatprep.subr.mxu0 0.0
  %3077 = vmatpush1.msra.mxu0 0.0
  %3078 = vmatprep.subr.mxu0 0.0
  %3079 = vmatpush1.msra.mxu0 0.0
  %3080 = vmatprep.subr.mxu0 0.0
  %3081 = vmatpush1.msra.mxu0 0.0
  %3082 = vmatprep.subr.mxu0 0.0
  %3083 = vmatpush1.msra.mxu0 0.0
  %3084 = vmatprep.subr.mxu0 0.0
  %3085 = vmatpush1.msra.mxu0 0.0
  %3086 = vmatprep.subr.mxu0 0.0
  %3087 = vmatpush1.msra.mxu0 0.0
  %3088 = vmatprep.subr.mxu0 0.0
  %3089 = vmatpush1.msra.mxu0 0.0
  %3090 = vmatprep.subr.mxu0 0.0
  %3091 = vmatpush1.msra.mxu0 0.0
  %3092 = vmatprep.subr.mxu0 0.0
  %3093 = vmatpush1.msra.mxu0 0.0
  %3094 = vmatprep.subr.mxu0 0.0
  %3095 = vmatpush1.msra.mxu0 0.0
  %3096 = vmatprep.subr.mxu0 0.0
  %3097 = vmatpush1.msra.mxu0 0.0
  %3098 = vmatprep.subr.mxu0 0.0
  %3099 = vmatpush1.msra.mxu0 0.0
  %3100 = vmatprep.subr.mxu0 0.0
  %3101 = vmatpush1.msra.mxu0 0.0
  %3102 = vmatprep.subr.mxu0 0.0
  %3103 = vmatpush1.msra.mxu0 0.0
  %3104 = vmatprep.subr.mxu0 0.0
  %3105 = vmatpush1.msra.mxu0 0.0
  %3106 = vmatprep.subr.mxu0 0.0
  %3107 = vmatpush1.msra.mxu0 0.0
  %3108 = vmatprep.subr.mxu0 0.0
  %3109 = vmatpush1.msra.mxu0 0.0
  %3110 = vmatprep.subr.mxu0 0.0
  %3111 = vmatpush1.msra.mxu0 0.0
  %3112 = vmatprep.subr.mxu0 0.0
  %3113 = vmatpush1.msra.mxu0 0.0
  %3114 = vmatprep.subr.mxu0 0.0
  %3115 = vmatpush1.msra.mxu0 0.0
  %3116 = vmatprep.subr.mxu0 0.0
  %3117 = vmatpush1.msra.mxu0 0.0
  %3118 = vmatprep.subr.mxu0 0.0
  %3119 = vmatpush1.msra.mxu0 0.0
  %3120 = vmatprep.subr.mxu0 0.0
  %3121 = vmatpush1.msra.mxu0 0.0
  %3122 = vmatprep.subr.mxu0 0.0
  %3123 = vmatpush1.msra.mxu0 0.0
  %3124 = vmatprep.subr.mxu0 0.0
  %3125 = vmatpush1.msra.mxu0 0.0
  %3126 = vmatprep.subr.mxu0 0.0
  %3127 = vmatpush1.msra.mxu0 0.0
  %3128 = vmatprep.subr.mxu0 0.0
  %3129 = vmatpush1.msra.mxu0 0.0
  %3130 = vmatprep.subr.mxu0 0.0
  %3131 = vmatpush1.msra.mxu0 0.0
  %3132 = vmatprep.mubr.f32.mxu0 0.0
  %3133 = vmatmul.mubr.f32.gmra.mrb[0].mxu0 %v3066
  %v3134 = vpop.f32.mrb[0].mxu0
  %v3135 = vadd.f32 0.0, %v3134
  %v3136 = vpop.f32.mrb[0].mxu0
  %3137 = vdwg.mxu0
  %3139 = vrot.lane.b32.xlu0 %v3135, 16
  %v3140 = vpop.permute.xlu0 %3139
  %v3142 = vsel %vm327, %v3059, %v3140
  %s3143 = scalar_lea.vmem %s5, 32
  %v3144 = vld [vmem:[%s3143] sm:$0xff]
  %v3145 = vld [vmem:[%s3143 + $0x8] sm:$0xff]
  %v3146 = vld [vmem:[%s3143 + $0x10] sm:$0xff]
  %v3147 = vld [vmem:[%s3143 + $0x18] sm:$0xff]
  %v3149 = vsel %vm149, %v2985, 0
  %v3152 = vsel %vm149, %v3142, 0
  %3154 = vmatprep.subr.mxu0 0.0
  %3155 = vmatpush1.msra.mxu0 %v3144
  %3156 = vmatprep.subr.mxu0 0.0
  %3157 = vmatpush1.msra.mxu0 %v3145
  %3158 = vmatprep.subr.mxu0 0.0
  %3159 = vmatpush1.msra.mxu0 %v3146
  %3160 = vmatprep.subr.mxu0 0.0
  %3161 = vmatpush1.msra.mxu0 %v3147
  %3162 = vmatprep.subr.mxu0 0.0
  %3163 = vmatpush1.msra.mxu0 0.0
  %3164 = vmatprep.subr.mxu0 0.0
  %3165 = vmatpush1.msra.mxu0 0.0
  %3166 = vmatprep.subr.mxu0 0.0
  %3167 = vmatpush1.msra.mxu0 0.0
  %3168 = vmatprep.subr.mxu0 0.0
  %3169 = vmatpush1.msra.mxu0 0.0
  %3170 = vmatprep.subr.mxu0 0.0
  %3171 = vmatpush1.msra.mxu0 0.0
  %3172 = vmatprep.subr.mxu0 0.0
  %3173 = vmatpush1.msra.mxu0 0.0
  %3174 = vmatprep.subr.mxu0 0.0
  %3175 = vmatpush1.msra.mxu0 0.0
  %3176 = vmatprep.subr.mxu0 0.0
  %3177 = vmatpush1.msra.mxu0 0.0
  %3178 = vmatprep.subr.mxu0 0.0
  %3179 = vmatpush1.msra.mxu0 0.0
  %3180 = vmatprep.subr.mxu0 0.0
  %3181 = vmatpush1.msra.mxu0 0.0
  %3182 = vmatprep.subr.mxu0 0.0
  %3183 = vmatpush1.msra.mxu0 0.0
  %3184 = vmatprep.subr.mxu0 0.0
  %3185 = vmatpush1.msra.mxu0 0.0
  %3186 = vmatprep.subr.mxu0 0.0
  %3187 = vmatpush1.msra.mxu0 0.0
  %3188 = vmatprep.subr.mxu0 0.0
  %3189 = vmatpush1.msra.mxu0 0.0
  %3190 = vmatprep.subr.mxu0 0.0
  %3191 = vmatpush1.msra.mxu0 0.0
  %3192 = vmatprep.subr.mxu0 0.0
  %3193 = vmatpush1.msra.mxu0 0.0
  %3194 = vmatprep.subr.mxu0 0.0
  %3195 = vmatpush1.msra.mxu0 0.0
  %3196 = vmatprep.subr.mxu0 0.0
  %3197 = vmatpush1.msra.mxu0 0.0
  %3198 = vmatprep.subr.mxu0 0.0
  %3199 = vmatpush1.msra.mxu0 0.0
  %3200 = vmatprep.subr.mxu0 0.0
  %3201 = vmatpush1.msra.mxu0 0.0
  %3202 = vmatprep.subr.mxu0 0.0
  %3203 = vmatpush1.msra.mxu0 0.0
  %3204 = vmatprep.subr.mxu0 0.0
  %3205 = vmatpush1.msra.mxu0 0.0
  %3206 = vmatprep.subr.mxu0 0.0
  %3207 = vmatpush1.msra.mxu0 0.0
  %3208 = vmatprep.subr.mxu0 0.0
  %3209 = vmatpush1.msra.mxu0 0.0
  %3210 = vmatprep.subr.mxu0 0.0
  %3211 = vmatpush1.msra.mxu0 0.0
  %3212 = vmatprep.subr.mxu0 0.0
  %3213 = vmatpush1.msra.mxu0 0.0
  %3214 = vmatprep.subr.mxu0 0.0
  %3215 = vmatpush1.msra.mxu0 0.0
  %3216 = vmatprep.subr.mxu0 0.0
  %3217 = vmatpush1.msra.mxu0 0.0
  %3218 = vmatprep.mubr.f32.mxu0 0.0
  %3219 = vmatmul.mubr.f32.gmra.mrb[0].mxu0 %v3149
  %v3220 = vpop.f32.mrb[0].mxu0
  %v3221 = vadd.f32 %v1829, %v3220
  %v3222 = vpop.f32.mrb[0].mxu0
  %3223 = vmatprep.mubr.f32.mxu0 0.0
  %3224 = vmatmul.mubr.f32.gmra.mrb[0].mxu0 %v3152
  %v3225 = vpop.f32.mrb[0].mxu0
  %v3226 = vadd.f32 %v1830, %v3225
  %v3227 = vpop.f32.mrb[0].mxu0
  %3228 = vdwg.mxu0
  %v3229 = vld [vmem:[%s2 + $0xe] sm:$0x1]
  %v3230 = vld [vmem:[%s2 + $0x10] sm:$0x1]
  %v3231 = vsel %vm149, %v3221, 0.0
  %3232 = vadd.xlane.f32.xlu0 %v3231
  %v3233 = vpop.xlane.xlu0 %3232
  %v3234 = vsel %vm149, %v3226, 0.0
  %3235 = vadd.xlane.f32.xlu0 %v3234
  %v3236 = vpop.xlane.xlu0 %3235
  %v3237 = vmul.f32 %v3233, %v1570
  %v3238 = vmul.f32 %v3236, %v1570
  %v3239 = vsub.f32 %v3221, %v3237
  %v3240 = vsub.f32 %v3226, %v3238
  %v3241 = vmul.f32 %v3239, %v3239
  %v3242 = vmul.f32 %v3240, %v3240
  %v3243 = vsel %vm149, %v3241, 0.0
  %3244 = vadd.xlane.f32.xlu0 %v3243
  %v3245 = vpop.xlane.xlu0 %3244
  %v3246 = vsel %vm149, %v3242, 0.0
  %3247 = vadd.xlane.f32.xlu0 %v3246
  %v3248 = vpop.xlane.xlu0 %3247
  %v3249 = vmul.f32 %v3245, %v1570
  %v3250 = vmul.f32 %v3248, %v1570
  %v3251 = vadd.f32 %v3249, 1e-05
  %v3252 = vadd.f32 %v3250, 1e-05
  %v3253 = vrsqrt.pop %v3251
  %v3254 = vrsqrt.pop %v3252
  %v3255 = vmul.f32 %v3239, %v3253
  %v3256 = vmul.f32 %v3240, %v3254
  %v3257 = vlaneseq
  %v3258 = vshrl.u32 %v3257, 7
  %v3259 = vsub.s32 0, %v3258
  %v3260 = vrot.slane %v3229, %v3259
  %v3261 = vmul.f32 %v3255, %v3260
  %v3262 = vmul.f32 %v3256, %v3260
  %v3263 = vlaneseq
  %v3264 = vshrl.u32 %v3263, 7
  %v3265 = vsub.s32 0, %v3264
  %v3266 = vrot.slane %v3230, %v3265
  %v3267 = vadd.f32 %v3261, %v3266
  %v3268 = vadd.f32 %v3262, %v3266
  %s3269 = scalar_lea.vmem %s6, 32
  %v3270 = vld [vmem:[%s3269] sm:$0xff]
  %v3271 = vld [vmem:[%s3269 + $0x8] sm:$0xff]
  %v3272 = vld [vmem:[%s3269 + $0x10] sm:$0xff]
  %v3273 = vld [vmem:[%s3269 + $0x18] sm:$0xff]
  %v3274 = vld [vmem:[%s2 + $0x16] sm:$0x1]
  %v3275 = vlaneseq
  %v3276 = vshrl.u32 %v3275, 7
  %v3277 = vsub.s32 0, %v3276
  %v3278 = vrot.slane %v3274, %v3277
  %v3280 = vsel %vm149, %v3267, 0
  %v3283 = vsel %vm149, %v3268, 0
  %3285 = vmatprep.subr.mxu0 0.0
  %3286 = vmatpush1.msra.mxu0 %v3270
  %3287 = vmatprep.subr.mxu0 0.0
  %3288 = vmatpush1.msra.mxu0 %v3271
  %3289 = vmatprep.subr.mxu0 0.0
  %3290 = vmatpush1.msra.mxu0 %v3272
  %3291 = vmatprep.subr.mxu0 0.0
  %3292 = vmatpush1.msra.mxu0 %v3273
  %3293 = vmatprep.subr.mxu0 0.0
  %3294 = vmatpush1.msra.mxu0 0.0
  %3295 = vmatprep.subr.mxu0 0.0
  %3296 = vmatpush1.msra.mxu0 0.0
  %3297 = vmatprep.subr.mxu0 0.0
  %3298 = vmatpush1.msra.mxu0 0.0
  %3299 = vmatprep.subr.mxu0 0.0
  %3300 = vmatpush1.msra.mxu0 0.0
  %3301 = vmatprep.subr.mxu0 0.0
  %3302 = vmatpush1.msra.mxu0 0.0
  %3303 = vmatprep.subr.mxu0 0.0
  %3304 = vmatpush1.msra.mxu0 0.0
  %3305 = vmatprep.subr.mxu0 0.0
  %3306 = vmatpush1.msra.mxu0 0.0
  %3307 = vmatprep.subr.mxu0 0.0
  %3308 = vmatpush1.msra.mxu0 0.0
  %3309 = vmatprep.subr.mxu0 0.0
  %3310 = vmatpush1.msra.mxu0 0.0
  %3311 = vmatprep.subr.mxu0 0.0
  %3312 = vmatpush1.msra.mxu0 0.0
  %3313 = vmatprep.subr.mxu0 0.0
  %3314 = vmatpush1.msra.mxu0 0.0
  %3315 = vmatprep.subr.mxu0 0.0
  %3316 = vmatpush1.msra.mxu0 0.0
  %3317 = vmatprep.subr.mxu0 0.0
  %3318 = vmatpush1.msra.mxu0 0.0
  %3319 = vmatprep.subr.mxu0 0.0
  %3320 = vmatpush1.msra.mxu0 0.0
  %3321 = vmatprep.subr.mxu0 0.0
  %3322 = vmatpush1.msra.mxu0 0.0
  %3323 = vmatprep.subr.mxu0 0.0
  %3324 = vmatpush1.msra.mxu0 0.0
  %3325 = vmatprep.subr.mxu0 0.0
  %3326 = vmatpush1.msra.mxu0 0.0
  %3327 = vmatprep.subr.mxu0 0.0
  %3328 = vmatpush1.msra.mxu0 0.0
  %3329 = vmatprep.subr.mxu0 0.0
  %3330 = vmatpush1.msra.mxu0 0.0
  %3331 = vmatprep.subr.mxu0 0.0
  %3332 = vmatpush1.msra.mxu0 0.0
  %3333 = vmatprep.subr.mxu0 0.0
  %3334 = vmatpush1.msra.mxu0 0.0
  %3335 = vmatprep.subr.mxu0 0.0
  %3336 = vmatpush1.msra.mxu0 0.0
  %3337 = vmatprep.subr.mxu0 0.0
  %3338 = vmatpush1.msra.mxu0 0.0
  %3339 = vmatprep.subr.mxu0 0.0
  %3340 = vmatpush1.msra.mxu0 0.0
  %3341 = vmatprep.subr.mxu0 0.0
  %3342 = vmatpush1.msra.mxu0 0.0
  %3343 = vmatprep.subr.mxu0 0.0
  %3344 = vmatpush1.msra.mxu0 0.0
  %3345 = vmatprep.subr.mxu0 0.0
  %3346 = vmatpush1.msra.mxu0 0.0
  %3347 = vmatprep.subr.mxu0 0.0
  %3348 = vmatpush1.msra.mxu0 0.0
  %3349 = vmatprep.mubr.f32.mxu0 0.0
  %3350 = vmatmul.mubr.f32.gmra.mrb[0].mxu0 %v3280
  %v3351 = vpop.f32.mrb[0].mxu0
  %v3352 = vadd.f32 %v3278, %v3351
  %v3353 = vpop.f32.mrb[0].mxu0
  %3354 = vmatprep.mubr.f32.mxu0 0.0
  %3355 = vmatmul.mubr.f32.gmra.mrb[0].mxu0 %v3283
  %v3356 = vpop.f32.mrb[0].mxu0
  %v3357 = vadd.f32 %v3278, %v3356
  %v3358 = vpop.f32.mrb[0].mxu0
  %3359 = vdwg.mxu0
  %v3360 = vmax.f32 %v3352, 0.0
  %v3361 = vmax.f32 %v3357, 0.0
  %s3362 = scalar_lea.vmem %s7, 64
  %v3363 = vld [vmem:[%s3362] sm:$0xff]
  %v3364 = vld [vmem:[%s3362 + $0x8] sm:$0xff]
  %v3365 = vld [vmem:[%s3362 + $0x10] sm:$0xff]
  %v3366 = vld [vmem:[%s3362 + $0x18] sm:$0xff]
  %v3367 = vld [vmem:[%s3362 + $0x20] sm:$0xff]
  %v3368 = vld [vmem:[%s3362 + $0x28] sm:$0xff]
  %v3369 = vld [vmem:[%s3362 + $0x30] sm:$0xff]
  %v3370 = vld [vmem:[%s3362 + $0x38] sm:$0xff]
  %v3371 = vld [vmem:[%s2 + $0x18] sm:$0x1]
  %v3372 = vlaneseq
  %v3373 = vshrl.u32 %v3372, 7
  %v3374 = vsub.s32 0, %v3373
  %v3375 = vrot.slane %v3371, %v3374
  %v3377 = vsel %vm53, %v3360, 0
  %v3380 = vsel %vm53, %v3361, 0
  %3382 = vmatprep.subr.mxu0 0.0
  %3383 = vmatpush1.msra.mxu0 %v3363
  %3384 = vmatprep.subr.mxu0 0.0
  %3385 = vmatpush1.msra.mxu0 %v3364
  %3386 = vmatprep.subr.mxu0 0.0
  %3387 = vmatpush1.msra.mxu0 %v3365
  %3388 = vmatprep.subr.mxu0 0.0
  %3389 = vmatpush1.msra.mxu0 %v3366
  %3390 = vmatprep.subr.mxu0 0.0
  %3391 = vmatpush1.msra.mxu0 %v3367
  %3392 = vmatprep.subr.mxu0 0.0
  %3393 = vmatpush1.msra.mxu0 %v3368
  %3394 = vmatprep.subr.mxu0 0.0
  %3395 = vmatpush1.msra.mxu0 %v3369
  %3396 = vmatprep.subr.mxu0 0.0
  %3397 = vmatpush1.msra.mxu0 %v3370
  %3398 = vmatprep.subr.mxu0 0.0
  %3399 = vmatpush1.msra.mxu0 0.0
  %3400 = vmatprep.subr.mxu0 0.0
  %3401 = vmatpush1.msra.mxu0 0.0
  %3402 = vmatprep.subr.mxu0 0.0
  %3403 = vmatpush1.msra.mxu0 0.0
  %3404 = vmatprep.subr.mxu0 0.0
  %3405 = vmatpush1.msra.mxu0 0.0
  %3406 = vmatprep.subr.mxu0 0.0
  %3407 = vmatpush1.msra.mxu0 0.0
  %3408 = vmatprep.subr.mxu0 0.0
  %3409 = vmatpush1.msra.mxu0 0.0
  %3410 = vmatprep.subr.mxu0 0.0
  %3411 = vmatpush1.msra.mxu0 0.0
  %3412 = vmatprep.subr.mxu0 0.0
  %3413 = vmatpush1.msra.mxu0 0.0
  %3414 = vmatprep.subr.mxu0 0.0
  %3415 = vmatpush1.msra.mxu0 0.0
  %3416 = vmatprep.subr.mxu0 0.0
  %3417 = vmatpush1.msra.mxu0 0.0
  %3418 = vmatprep.subr.mxu0 0.0
  %3419 = vmatpush1.msra.mxu0 0.0
  %3420 = vmatprep.subr.mxu0 0.0
  %3421 = vmatpush1.msra.mxu0 0.0
  %3422 = vmatprep.subr.mxu0 0.0
  %3423 = vmatpush1.msra.mxu0 0.0
  %3424 = vmatprep.subr.mxu0 0.0
  %3425 = vmatpush1.msra.mxu0 0.0
  %3426 = vmatprep.subr.mxu0 0.0
  %3427 = vmatpush1.msra.mxu0 0.0
  %3428 = vmatprep.subr.mxu0 0.0
  %3429 = vmatpush1.msra.mxu0 0.0
  %3430 = vmatprep.subr.mxu0 0.0
  %3431 = vmatpush1.msra.mxu0 0.0
  %3432 = vmatprep.subr.mxu0 0.0
  %3433 = vmatpush1.msra.mxu0 0.0
  %3434 = vmatprep.subr.mxu0 0.0
  %3435 = vmatpush1.msra.mxu0 0.0
  %3436 = vmatprep.subr.mxu0 0.0
  %3437 = vmatpush1.msra.mxu0 0.0
  %3438 = vmatprep.subr.mxu0 0.0
  %3439 = vmatpush1.msra.mxu0 0.0
  %3440 = vmatprep.subr.mxu0 0.0
  %3441 = vmatpush1.msra.mxu0 0.0
  %3442 = vmatprep.subr.mxu0 0.0
  %3443 = vmatpush1.msra.mxu0 0.0
  %3444 = vmatprep.subr.mxu0 0.0
  %3445 = vmatpush1.msra.mxu0 0.0
  %3446 = vmatprep.mubr.f32.mxu0 0.0
  %3447 = vmatmul.mubr.f32.gmra.mrb[0].mxu0 %v3377
  %v3448 = vpop.f32.mrb[0].mxu0
  %v3449 = vadd.f32 %v3375, %v3448
  %v3450 = vpop.f32.mrb[0].mxu0
  %3451 = vmatprep.mubr.f32.mxu0 0.0
  %3452 = vmatmul.mubr.f32.gmra.mrb[0].mxu0 %v3380
  %v3453 = vpop.f32.mrb[0].mxu0
  %v3454 = vadd.f32 %v3375, %v3453
  %v3455 = vpop.f32.mrb[0].mxu0
  %3456 = vdwg.mxu0
  %v3457 = vadd.f32 %v3449, %v3267
  %v3458 = vadd.f32 %v3454, %v3268
  %v3459 = vld [vmem:[%s2 + $0x12] sm:$0x1]
  %v3460 = vld [vmem:[%s2 + $0x14] sm:$0x1]
  %v3461 = vsel %vm149, %v3457, 0.0
  %3462 = vadd.xlane.f32.xlu0 %v3461
  %v3463 = vpop.xlane.xlu0 %3462
  %v3464 = vsel %vm149, %v3458, 0.0
  %3465 = vadd.xlane.f32.xlu0 %v3464
  %v3466 = vpop.xlane.xlu0 %3465
  %v3467 = vmul.f32 %v3463, %v1570
  %v3468 = vmul.f32 %v3466, %v1570
  %v3469 = vsub.f32 %v3457, %v3467
  %v3470 = vsub.f32 %v3458, %v3468
  %v3471 = vmul.f32 %v3469, %v3469
  %v3472 = vmul.f32 %v3470, %v3470
  %v3473 = vsel %vm149, %v3471, 0.0
  %3474 = vadd.xlane.f32.xlu0 %v3473
  %v3475 = vpop.xlane.xlu0 %3474
  %v3476 = vsel %vm149, %v3472, 0.0
  %3477 = vadd.xlane.f32.xlu0 %v3476
  %v3478 = vpop.xlane.xlu0 %3477
  %v3479 = vmul.f32 %v3475, %v1570
  %v3480 = vmul.f32 %v3478, %v1570
  %v3481 = vadd.f32 %v3479, 1e-05
  %v3482 = vadd.f32 %v3480, 1e-05
  %v3483 = vrsqrt.pop %v3481
  %v3484 = vrsqrt.pop %v3482
  %v3485 = vmul.f32 %v3469, %v3483
  %v3486 = vmul.f32 %v3470, %v3484
  %v3487 = vlaneseq
  %v3488 = vshrl.u32 %v3487, 7
  %v3489 = vsub.s32 0, %v3488
  %v3490 = vrot.slane %v3459, %v3489
  %v3491 = vmul.f32 %v3485, %v3490
  %v3492 = vmul.f32 %v3486, %v3490
  %v3493 = vlaneseq
  %v3494 = vshrl.u32 %v3493, 7
  %v3495 = vsub.s32 0, %v3494
  %v3496 = vrot.slane %v3460, %v3495
  %v3497 = vadd.f32 %v3491, %v3496
  %v3498 = vadd.f32 %v3492, %v3496
  %v3499 = vld [vmem:[%s2 + $0x2] sm:$0x1]
  %v3500 = vld [vmem:[%s2 + $0x3] sm:$0x1]
  %v3501 = vsel %vm149, %v3497, 0.0
  %3502 = vadd.xlane.f32.xlu0 %v3501
  %v3503 = vpop.xlane.xlu0 %3502
  %v3504 = vsel %vm149, %v3498, 0.0
  %3505 = vadd.xlane.f32.xlu0 %v3504
  %v3506 = vpop.xlane.xlu0 %3505
  %v3507 = vmul.f32 %v3503, %v1570
  %v3508 = vmul.f32 %v3506, %v1570
  %v3509 = vsub.f32 %v3497, %v3507
  %v3510 = vsub.f32 %v3498, %v3508
  %v3511 = vmul.f32 %v3509, %v3509
  %v3512 = vmul.f32 %v3510, %v3510
  %v3513 = vsel %vm149, %v3511, 0.0
  %3514 = vadd.xlane.f32.xlu0 %v3513
  %v3515 = vpop.xlane.xlu0 %3514
  %v3516 = vsel %vm149, %v3512, 0.0
  %3517 = vadd.xlane.f32.xlu0 %v3516
  %v3518 = vpop.xlane.xlu0 %3517
  %v3519 = vmul.f32 %v3515, %v1570
  %v3520 = vmul.f32 %v3518, %v1570
  %v3521 = vadd.f32 %v3519, 1e-05
  %v3522 = vadd.f32 %v3520, 1e-05
  %v3523 = vrsqrt.pop %v3521
  %v3524 = vrsqrt.pop %v3522
  %v3525 = vmul.f32 %v3509, %v3523
  %v3526 = vmul.f32 %v3510, %v3524
  %v3527 = vlaneseq
  %v3528 = vshrl.u32 %v3527, 7
  %v3529 = vsub.s32 0, %v3528
  %v3530 = vrot.slane %v3499, %v3529
  %v3531 = vmul.f32 %v3525, %v3530
  %v3532 = vmul.f32 %v3526, %v3530
  %v3533 = vlaneseq
  %v3534 = vshrl.u32 %v3533, 7
  %v3535 = vsub.s32 0, %v3534
  %v3536 = vrot.slane %v3500, %v3535
  %v3537 = vadd.f32 %v3531, %v3536
  %v3538 = vadd.f32 %v3532, %v3536
  %v3539 = vld [vmem:[%s2 + $0x4] sm:$0x1]
  %v3540 = vlaneseq
  %v3541 = vshrl.u32 %v3540, 7
  %v3542 = vsub.s32 0, %v3541
  %v3543 = vrot.slane %v3539, %v3542
  %v3545 = vsel %vm149, %v3537, 0
  %v3548 = vsel %vm149, %v3538, 0
  %v3551 = vsel %vm149, %v33, 0
  %v3554 = vsel %vm149, %v34, 0
  %v3557 = vsel %vm149, %v35, 0
  %v3560 = vsel %vm149, %v36, 0
  %v3563 = vsel %vm149, %v37, 0
  %v3566 = vsel %vm149, %v38, 0
  %v3569 = vsel %vm149, %v39, 0
  %v3572 = vsel %vm149, %v40, 0
  %3574 = vmatprep.subr.mxu0 0.0
  %3575 = vmatpush1.xpose.msra.mxu0 %v3551
  %3576 = vmatprep.subr.mxu0 0.0
  %3577 = vmatpush1.xpose.msra.mxu0 %v3554
  %3578 = vmatprep.subr.mxu0 0.0
  %3579 = vmatpush1.xpose.msra.mxu0 %v3557
  %3580 = vmatprep.subr.mxu0 0.0
  %3581 = vmatpush1.xpose.msra.mxu0 %v3560
  %3582 = vmatprep.subr.mxu0 0.0
  %3583 = vmatpush1.xpose.msra.mxu0 %v3563
  %3584 = vmatprep.subr.mxu0 0.0
  %3585 = vmatpush1.xpose.msra.mxu0 %v3566
  %3586 = vmatprep.subr.mxu0 0.0
  %3587 = vmatpush1.xpose.msra.mxu0 %v3569
  %3588 = vmatprep.subr.mxu0 0.0
  %3589 = vmatpush1.xpose.msra.mxu0 %v3572
  %3590 = vmatprep.subr.mxu0 0.0
  %3591 = vmatpush1.xpose.msra.mxu0 0.0
  %3592 = vmatprep.subr.mxu0 0.0
  %3593 = vmatpush1.xpose.msra.mxu0 0.0
  %3594 = vmatprep.subr.mxu0 0.0
  %3595 = vmatpush1.xpose.msra.mxu0 0.0
  %3596 = vmatprep.subr.mxu0 0.0
  %3597 = vmatpush1.xpose.msra.mxu0 0.0
  %3598 = vmatprep.subr.mxu0 0.0
  %3599 = vmatpush1.xpose.msra.mxu0 0.0
  %3600 = vmatprep.subr.mxu0 0.0
  %3601 = vmatpush1.xpose.msra.mxu0 0.0
  %3602 = vmatprep.subr.mxu0 0.0
  %3603 = vmatpush1.xpose.msra.mxu0 0.0
  %3604 = vmatprep.subr.mxu0 0.0
  %3605 = vmatpush1.xpose.msra.mxu0 0.0
  %3606 = vmatprep.subr.mxu0 0.0
  %3607 = vmatpush1.xpose.msra.mxu0 0.0
  %3608 = vmatprep.subr.mxu0 0.0
  %3609 = vmatpush1.xpose.msra.mxu0 0.0
  %3610 = vmatprep.subr.mxu0 0.0
  %3611 = vmatpush1.xpose.msra.mxu0 0.0
  %3612 = vmatprep.subr.mxu0 0.0
  %3613 = vmatpush1.xpose.msra.mxu0 0.0
  %3614 = vmatprep.subr.mxu0 0.0
  %3615 = vmatpush1.xpose.msra.mxu0 0.0
  %3616 = vmatprep.subr.mxu0 0.0
  %3617 = vmatpush1.xpose.msra.mxu0 0.0
  %3618 = vmatprep.subr.mxu0 0.0
  %3619 = vmatpush1.xpose.msra.mxu0 0.0
  %3620 = vmatprep.subr.mxu0 0.0
  %3621 = vmatpush1.xpose.msra.mxu0 0.0
  %3622 = vmatprep.subr.mxu0 0.0
  %3623 = vmatpush1.xpose.msra.mxu0 0.0
  %3624 = vmatprep.subr.mxu0 0.0
  %3625 = vmatpush1.xpose.msra.mxu0 0.0
  %3626 = vmatprep.subr.mxu0 0.0
  %3627 = vmatpush1.xpose.msra.mxu0 0.0
  %3628 = vmatprep.subr.mxu0 0.0
  %3629 = vmatpush1.xpose.msra.mxu0 0.0
  %3630 = vmatprep.subr.mxu0 0.0
  %3631 = vmatpush1.xpose.msra.mxu0 0.0
  %3632 = vmatprep.subr.mxu0 0.0
  %3633 = vmatpush1.xpose.msra.mxu0 0.0
  %3634 = vmatprep.subr.mxu0 0.0
  %3635 = vmatpush1.xpose.msra.mxu0 0.0
  %3636 = vmatprep.subr.mxu0 0.0
  %3637 = vmatpush1.xpose.msra.mxu0 0.0
  %3638 = vmatprep.mubr.f32.mxu0 0.0
  %3639 = vmatmul.mubr.f32.gmra.mrb[0].mxu0 %v3545
  %v3640 = vpop.f32.mrb[0].mxu0
  %v3641 = vadd.f32 %v3543, %v3640
  %v3642 = vpop.f32.mrb[0].mxu0
  %3643 = vmatprep.mubr.f32.mxu0 0.0
  %3644 = vmatmul.mubr.f32.gmra.mrb[0].mxu0 %v3548
  %v3645 = vpop.f32.mrb[0].mxu0
  %v3646 = vadd.f32 %v3543, %v3645
  %v3647 = vpop.f32.mrb[0].mxu0
  %3648 = vdwg.mxu0
  %v3649 = vsel %vm53, %v3641, -inf
  %3650 = vmax.xlane.f32.xlu0 %v3649
  %v3651 = vpop.xlane.xlu0 %3650
  %v3652 = vsel %vm53, %v3646, -inf
  %3653 = vmax.xlane.f32.xlu0 %v3652
  %v3654 = vpop.xlane.xlu0 %3653
  %v3655 = vsub.f32 %v3641, %v3651
  %v3656 = vsub.f32 %v3646, %v3654
  %v3657 = vmul.f32 %v3655, 1.442695
  %v3658 = vpow.pop %v3657
  %v3659 = vmul.f32 %v3656, 1.442695
  %v3660 = vpow.pop %v3659
  %v3661 = vsel %vm53, %v3658, 0.0
  %3662 = vadd.xlane.f32.xlu0 %v3661
  %v3663 = vpop.xlane.xlu0 %3662
  %v3664 = vsel %vm53, %v3660, 0.0
  %3665 = vadd.xlane.f32.xlu0 %v3664
  %v3666 = vpop.xlane.xlu0 %3665
  %v3667 = vlog2.pop %v3663
  %v3668 = vmul.f32 %v3667, 0.6931472
  %v3669 = vlog2.pop %v3666
  %v3670 = vmul.f32 %v3669, 0.6931472
  %v3671 = vadd.f32 %v3651, %v3668
  %v3672 = vadd.f32 %v3654, %v3670
  %v3673 = vsub.f32 %v3641, %v3671
  %v3674 = vsub.f32 %v3646, %v3672
  %3675 = vset.pattern.permute.xlu0 1
  %3676 = vperm.xlu0 %3675, %v29
  %v3677 = vpop.permute.xlu0 %3676
  %3678 = vset.pattern.permute.xlu0 1
  %3679 = vperm.xlu0 %3678, %v30
  %v3680 = vpop.permute.xlu0 %3679
  %vm3681 = vcmp.eq.s32.totalorder %v32, %v3677
  %vm3682 = vcmp.eq.s32.totalorder %v32, %v3680
  %v3683 = vsel %vm3681, 1, 0
  %v3684 = vsel %vm3682, 1, 0
  %v3685 = vcvt.s32.f32 %v3683
  %v3686 = vcvt.s32.f32 %v3684
  %v3687 = vmul.f32 %v3685, %v3673
  %v3688 = vmul.f32 %v3686, %v3674
  %v3689 = vsel %vm53, %v3687, 0.0
  %3690 = vadd.xlane.f32.xlu0 %v3689
  %v3691 = vpop.xlane.xlu0 %3690
  %v3692 = vsel %vm53, %v3688, 0.0
  %3693 = vadd.xlane.f32.xlu0 %v3692
  %v3694 = vpop.xlane.xlu0 %3693
  %v3695 = vsub.f32 0.0, %v3691
  %v3696 = vsub.f32 0.0, %v3694
  %v3697 = vsel %vm53, %v3673, 0.0
  %3698 = vadd.xlane.f32.xlu0 %v3697
  %v3699 = vpop.xlane.xlu0 %3698
  %v3700 = vsel %vm53, %v3674, 0.0
  %3701 = vadd.xlane.f32.xlu0 %v3700
  %v3702 = vpop.xlane.xlu0 %3701
  %v3703 = vsub.f32 0.0, %v3699
  %v3704 = vsub.f32 0.0, %v3702
  %v3705 = vadd.f32 %v3695, %v3696
  %v3706 = vrot.slane %v3705, 4
  %v3707 = vadd.f32 %v3705, %v3706
  %v3708 = vrot.slane %v3707, 2
  %v3709 = vadd.f32 %v3707, %v3708
  %v3710 = vrot.slane %v3709, 1
  %v3711 = vadd.f32 %v3709, %v3710
  %v3712 = vadd.f32 %v3703, %v3704
  %v3713 = vrot.slane %v3712, 4
  %v3714 = vadd.f32 %v3712, %v3713
  %v3715 = vrot.slane %v3714, 2
  %v3716 = vadd.f32 %v3714, %v3715
  %v3717 = vrot.slane %v3716, 1
  %v3718 = vadd.f32 %v3716, %v3717
  %v3719 = vmul.f32 %v3711, 0.9
  %v3720 = vmul.f32 %v3718, 0.0016129032
  %v3721 = vadd.f32 %v3719, %v3720
  %vm3722 = vcmask 7168
  %v3723 = vsel %vm3722, %v3721, %v3711
  %vm3724 = vcmask 8192
  %3725 = vst.msk [vmem:[%s8] sm:$0x1] %vm3724, %v3723
  // Predicated region
  $region34: #{forward.1} parent=0 // pred_check
    _
  $region35: #{forward.1} parent=0 // pred_check_branch
    %3727 = sbr.rel (0) target = $region37
  $region36: #{forward.1} parent=0 // pred_region
    _
  $region37: #{forward.1} parent=0 // pred_fallthru
    _
  // Predicated region
  $region38: #{forward.1} parent=0 // pred_check
    _
  $region39: #{forward.1} parent=0 // pred_check_branch
    %3729 = sbr.rel (0) target = $region41
  $region40: #{forward.1} parent=0 // pred_region
    _
  $region41: #{forward.1} parent=0 // pred_fallthru
    _

</llo_original>
